<compile_context>
chip_gen: v7x
topology: tpu7x:2x2x1
jax: 0.10.0
libtpu: 0.0.40
codegen_flags: <defaults>
</compile_context>

<pallas_src>
import functools

import jax
import jax.numpy as jnp
from jax.experimental import pallas as pl
from jax.experimental.pallas import tpu as pltpu


def _round_up(x, m):
    return (x + m - 1) // m * m


# ---------------------------------------------------------------------------
# Kernel: one grid step = one time chunk; both direction chains interleaved.
# ---------------------------------------------------------------------------
def _lstm_layer_kernel(*refs, t_chunk, b_pad, hg, ndir):
    Tc, Bp = t_chunk, b_pad
    Gw = 4 * hg

    if ndir == 2:
        (xf_ref, xb_ref, wihf_ref, whhf_ref, bf_ref,
         wihb_ref, whhb_ref, bb_ref,
         outf_ref, outb_ref,
         hf_sc, cf_sc, hb_sc, cb_sc, gxf_sc, gxb_sc) = refs
    else:
        (xf_ref, wihf_ref, whhf_ref, bf_ref,
         outf_ref, hf_sc, cf_sc, gxf_sc) = refs

    @pl.when(pl.program_id(0) == 0)
    def _():
        hf_sc[...] = jnp.zeros_like(hf_sc)
        cf_sc[...] = jnp.zeros_like(cf_sc)
        if ndir == 2:
            hb_sc[...] = jnp.zeros_like(hb_sc)
            cb_sc[...] = jnp.zeros_like(cb_sc)

    # Hoisted time-parallel input projection: one MXU matmul per direction per chunk.
    gxf_sc[...] = jnp.dot(xf_ref[...], wihf_ref[...],
                          preferred_element_type=jnp.float32) + bf_ref[...]
    if ndir == 2:
        gxb_sc[...] = jnp.dot(xb_ref[...], wihb_ref[...],
                              preferred_element_type=jnp.float32) + bb_ref[...]

    # Loop-invariant values hoisted out of the serial recurrence.
    tanh_mask = None
    if Gw <= 128:
        lane = jax.lax.broadcasted_iota(jnp.int32, (Bp, Gw), 1)
        tanh_mask = (lane >= 2 * hg) & (lane < 3 * hg)      # g-gate lanes
    small_whh = hg * Gw * jnp.dtype(whhf_ref.dtype).itemsize <= 16 * 1024
    whf_val = whhf_ref[...] if small_whh else None
    whb_val = (whhb_ref[...] if small_whh else None) if ndir == 2 else None

    def cell(gates, c_prev):
        # PyTorch gate order i, f, g, o packed into 4*hg lanes.
        if Gw <= 128:
            act = jnp.where(tanh_mask, jnp.tanh(gates), jax.nn.sigmoid(gates))
            i_g = act[:, 0 * hg:1 * hg]
            f_g = act[:, 1 * hg:2 * hg]
            g_g = act[:, 2 * hg:3 * hg]
            o_g = act[:, 3 * hg:4 * hg]
        else:
            i_g = jax.nn.sigmoid(gates[:, 0 * hg:1 * hg])
            f_g = jax.nn.sigmoid(gates[:, 1 * hg:2 * hg])
            g_g = jnp.tanh(gates[:, 2 * hg:3 * hg])
            o_g = jax.nn.sigmoid(gates[:, 3 * hg:4 * hg])
        c_new = f_g * c_prev + i_g * g_g
        h_new = o_g * jnp.tanh(c_new)
        return h_new, c_new

    def step(t, carry):
        if ndir == 2:
            hf_p, cf_p, hb_p, cb_p = carry
        else:
            hf_p, cf_p = carry

        # Forward chain: chunk-local time index t.
        row_f = pl.multiple_of(t * Bp, Bp)
        wf = whf_val if small_whh else whhf_ref[...]
        gates_f = gxf_sc[pl.ds(row_f, Bp), :] + jnp.dot(
            hf_p, wf, preferred_element_type=jnp.float32)
        hf32, cf_n = cell(gates_f, cf_p)
        hf_n = hf32.astype(outf_ref.dtype)          # h carried in matmul dtype
        outf_ref[pl.ds(row_f, Bp), :] = hf_n

        if ndir == 2:
            # Backward chain: walks its (already reversed-order) chunk from the end.
            row_b = pl.multiple_of((Tc - 1 - t) * Bp, Bp)
            wb = whb_val if small_whh else whhb_ref[...]
            gates_b = gxb_sc[pl.ds(row_b, Bp), :] + jnp.dot(
                hb_p, wb, preferred_element_type=jnp.float32)
            hb32, cb_n = cell(gates_b, cb_p)
            hb_n = hb32.astype(outb_ref.dtype)
            outb_ref[pl.ds(row_b, Bp), :] = hb_n
            return hf_n, cf_n, hb_n, cb_n
        return hf_n, cf_n

    if Tc <= 32:
        unroll = Tc
    else:
        unroll = max(u for u in (16, 8, 4, 2, 1) if Tc % u == 0)

    if ndir == 2:
        carry0 = (hf_sc[...], cf_sc[...], hb_sc[...], cb_sc[...])
    else:
        carry0 = (hf_sc[...], cf_sc[...])
    carry = jax.lax.fori_loop(0, Tc, step, carry0, unroll=unroll)

    hf_sc[...] = carry[0]
    cf_sc[...] = carry[1]
    if ndir == 2:
        hb_sc[...] = carry[2]
        cb_sc[...] = carry[3]


# ---------------------------------------------------------------------------
# Per-layer pallas_call wrapper
# ---------------------------------------------------------------------------
def _lstm_layer(x_2d, wih, whh, bias, *, t_chunk, b_pad, hg, ndir, out_dtype,
                vmem_limit_bytes):
    rows, din = x_2d.shape
    Tc, Bp = t_chunk, b_pad
    Gw = 4 * hg
    nc = rows // (Tc * Bp)

    kernel = functools.partial(_lstm_layer_kernel,
                               t_chunk=Tc, b_pad=Bp, hg=hg, ndir=ndir)

    x_fwd = pl.BlockSpec((Tc * Bp, din), lambda c: (c, 0))
    x_bwd = pl.BlockSpec((Tc * Bp, din), lambda c: (nc - 1 - c, 0))
    wih_spec = pl.BlockSpec((din, Gw), lambda c: (0, 0))
    whh_spec = pl.BlockSpec((hg, Gw), lambda c: (0, 0))
    b_spec = pl.BlockSpec((1, Gw), lambda c: (0, 0))
    out_fwd = pl.BlockSpec((Tc * Bp, hg), lambda c: (c, 0))
    out_bwd = pl.BlockSpec((Tc * Bp, hg), lambda c: (nc - 1 - c, 0))

    def state(dt):
        return pltpu.VMEM((Bp, hg), dt)

    def gx():
        return pltpu.VMEM((Tc * Bp, Gw), jnp.float32)

    if ndir == 2:
        in_specs = [x_fwd, x_bwd, wih_spec, whh_spec, b_spec,
                    wih_spec, whh_spec, b_spec]
        operands = (x_2d, x_2d, wih[0], whh[0], bias[0], wih[1], whh[1], bias[1])
        out_specs = (out_fwd, out_bwd)
        out_shape = (jax.ShapeDtypeStruct((rows, hg), out_dtype),
                     jax.ShapeDtypeStruct((rows, hg), out_dtype))
        scratch = [state(out_dtype), state(jnp.float32),
                   state(out_dtype), state(jnp.float32), gx(), gx()]
    else:
        in_specs = [x_fwd, wih_spec, whh_spec, b_spec]
        operands = (x_2d, wih[0], whh[0], bias[0])
        out_specs = out_fwd
        out_shape = jax.ShapeDtypeStruct((rows, hg), out_dtype)
        scratch = [state(out_dtype), state(jnp.float32), gx()]

    return pl.pallas_call(
        kernel,
        out_shape=out_shape,
        grid_spec=pltpu.PrefetchScalarGridSpec(
            num_scalar_prefetch=0,
            grid=(nc,),
            in_specs=in_specs,
            out_specs=out_specs,
            scratch_shapes=scratch),
        compiler_params=pltpu.CompilerParams(
            dimension_semantics=("arbitrary",),       # time chunks form a recurrence
            vmem_limit_bytes=vmem_limit_bytes),
    )(*operands)


# ---------------------------------------------------------------------------
# Parameter padding / layout helpers (PyTorch layout -> packed lane layout)
# ---------------------------------------------------------------------------
def _pad_gate_cols(w, H, Hg):
    """PyTorch weight (4H, K) -> (K, 4Hg): transpose + pad each gate's H outputs to Hg."""
    K = w.shape[1]
    w4 = w.reshape(4, H, K)
    w4p = jnp.zeros((4, Hg, K), w.dtype).at[:, :H, :].set(w4)
    return w4p.reshape(4 * Hg, K).T


def _pad_bias(b, H, Hg):
    b4 = b.reshape(4, H)
    b4p = jnp.zeros((4, Hg), b.dtype).at[:, :H].set(b4)
    return b4p.reshape(1, 4 * Hg)


def _prep_layer_params(layer_params, H, Hg, in_map, din_pad, matmul_dtype):
    wih, whh, bias = [], [], []
    for p in layer_params:
        w_ih_t = _pad_gate_cols(jnp.asarray(p["w_ih"], jnp.float32), H, Hg)
        w_ih_pad = jnp.zeros((din_pad, 4 * Hg), jnp.float32).at[in_map, :].set(w_ih_t)
        w_hh_t = _pad_gate_cols(jnp.asarray(p["w_hh"], jnp.float32), H, Hg)
        w_hh_pad = jnp.zeros((Hg, 4 * Hg), jnp.float32).at[:H, :].set(w_hh_t)
        wih.append(w_ih_pad)
        whh.append(w_hh_pad)
        bias.append(_pad_bias(jnp.asarray(p["b_ih"], jnp.float32)
                              + jnp.asarray(p["b_hh"], jnp.float32), H, Hg))
    return (jnp.stack(wih).astype(matmul_dtype),     # (ndir, Din_pad, 4Hg)
            jnp.stack(whh).astype(matmul_dtype),     # (ndir, Hg,      4Hg)
            jnp.stack(bias))                         # (ndir, 1,       4Hg) f32


def _choose_time_chunk(T, per_step_bytes, budget_bytes=40 * 2**20, max_chunk=256):
    cap = int(max(1, min(T, max_chunk, budget_bytes // max(per_step_bytes, 1))))
    for c in range(cap, 0, -1):
        if T % c == 0:
            return c
    return 1


# ---------------------------------------------------------------------------
# Module forward: equivalent of `Lstm.forward` (returns output sequence only)
# ---------------------------------------------------------------------------
def lstm_forward(x_btd, params, hidden_size, num_layers, bidirectional,
                 matmul_dtype=jnp.bfloat16):
    """x_btd: (B, T, input_size), batch_first like the PyTorch module.
    Returns (B, T, num_directions * hidden_size) in f32."""
    B, T, din0 = x_btd.shape
    H = hidden_size
    ndir = 2 if bidirectional else 1
    Hg = _round_up(H, 32)                 # per-gate lane width; 4*Hg is a multiple of 128
    Gw = 4 * Hg
    msz = jnp.dtype(matmul_dtype).itemsize
    Bp = _round_up(B, 16 if msz == 2 else 8)   # full sublane tiles per time-step store

    # Explicit VMEM budgeting (v5e 16 MiB default / v7x 64 MiB physical).
    din_max = max(din0, ndir * Hg)
    per_step_bytes = Bp * ndir * (2 * din_max * msz + 2 * Hg * msz + Gw * 4)
    Tc = _choose_time_chunk(T, per_step_bytes)
    weight_bytes = ndir * 2 * (din_max + Hg + 1) * Gw * msz
    est = Tc * per_step_bytes + weight_bytes + ndir * Bp * Hg * (msz + 4) + (1 << 20)
    vmem_limit = int(min(64 * 2**20, max(32 * 2**20, 2 * est)))

    # batch_first -> time-major slab (row = t*Bp + b), kept in the matmul dtype so the
    # kernels never cast the activations and inter-layer HBM traffic is halved (bf16).
    x = jnp.transpose(x_btd, (1, 0, 2)).astype(matmul_dtype)
    x = jnp.pad(x, ((0, 0), (0, Bp - B), (0, 0))).reshape(T * Bp, din0)

    for layer in range(num_layers):
        if layer == 0:
            din_pad = din0
            in_map = jnp.arange(din0)
        else:
            din_pad = ndir * Hg
            in_map = jnp.concatenate([jnp.arange(H) + d * Hg for d in range(ndir)])
        wih, whh, bias = _prep_layer_params(params[layer], H, Hg, in_map,
                                            din_pad, matmul_dtype)
        out = _lstm_layer(x, wih, whh, bias, t_chunk=Tc, b_pad=Bp, hg=Hg, ndir=ndir,
                          out_dtype=matmul_dtype, vmem_limit_bytes=vmem_limit)
        x = jnp.concatenate(out, axis=-1) if ndir == 2 else out
        # TODO(synk): nn.LSTM inter-layer dropout is train-only; no-op at inference.

    y = x.reshape(T, Bp, ndir * Hg)[:, :B, :]
    y = jnp.concatenate([y[..., d * Hg:d * Hg + H] for d in range(ndir)], axis=-1)
    return jnp.transpose(y, (1, 0, 2)).astype(jnp.float32)    # (B, T, ndir*H)


# ---------------------------------------------------------------------------
# Parameter init (PyTorch nn.LSTM shapes) and pure-JAX reference
# ---------------------------------------------------------------------------
def init_lstm_params(key, input_size, hidden_size, num_layers, bidirectional):
    num_directions = 2 if bidirectional else 1
    stdv = 1.0 / (hidden_size ** 0.5)
    params = []
    for layer in range(num_layers):
        din = input_size if layer == 0 else hidden_size * num_directions
        dirs = []
        for _ in range(num_directions):
            key, k1, k2, k3, k4 = jax.random.split(key, 5)
            dirs.append({
                "w_ih": jax.random.uniform(k1, (4 * hidden_size, din),
                                           jnp.float32, -stdv, stdv),
                "w_hh": jax.random.uniform(k2, (4 * hidden_size, hidden_size),
                                           jnp.float32, -stdv, stdv),
                "b_ih": jax.random.uniform(k3, (4 * hidden_size,),
                                           jnp.float32, -stdv, stdv),
                "b_hh": jax.random.uniform(k4, (4 * hidden_size,),
                                           jnp.float32, -stdv, stdv),
            })
        params.append(dirs)
    return params


def lstm_reference(x_btd, params, hidden_size, num_layers, bidirectional):
    """Pure-JAX reference (lax.scan) for correctness checking."""
    H = hidden_size
    num_directions = 2 if bidirectional else 1

    def run_dir(x_tbd, p, reverse):
        T, B, _ = x_tbd.shape
        xs = x_tbd[::-1] if reverse else x_tbd

        def step(carry, xt):
            h, c = carry
            g = xt @ p["w_ih"].T + p["b_ih"] + h @ p["w_hh"].T + p["b_hh"]
            i = jax.nn.sigmoid(g[:, 0 * H:1 * H])
            f = jax.nn.sigmoid(g[:, 1 * H:2 * H])
            gg = jnp.tanh(g[:, 2 * H:3 * H])
            o = jax.nn.sigmoid(g[:, 3 * H:4 * H])
            c = f * c + i * gg
            h = o * jnp.tanh(c)
            return (h, c), h

        init = (jnp.zeros((B, H), jnp.float32), jnp.zeros((B, H), jnp.float32))
        _, hs = jax.lax.scan(step, init, xs)
        return hs[::-1] if reverse else hs

    x = jnp.transpose(x_btd, (1, 0, 2))
    for layer in range(num_layers):
        outs = [run_dir(x, params[layer][d], d == 1)
                for d in range(num_directions)]
        x = jnp.concatenate(outs, axis=-1) if num_directions == 2 else outs[0]
    return jnp.transpose(x, (1, 0, 2))


if __name__ == "__main__":
    B, T, INPUT, HIDDEN, LAYERS = 4, 8, 16, 32, 2
    BIDIRECTIONAL = True   # dropout=0.3 in the module is a no-op at inference

    key = jax.random.PRNGKey(0)
    kx, kp = jax.random.split(key)
    x = jax.random.normal(kx, (B, T, INPUT), jnp.float32)
    params = init_lstm_params(kp, INPUT, HIDDEN, LAYERS, BIDIRECTIONAL)

    y_ref = lstm_reference(x, params, HIDDEN, LAYERS, BIDIRECTIONAL)

    # f32-matmul path: tight check of recurrence / packing / direction-fusion logic.
    fwd_f32 = jax.jit(functools.partial(lstm_forward, hidden_size=HIDDEN,
                                        num_layers=LAYERS,
                                        bidirectional=BIDIRECTIONAL,
                                        matmul_dtype=jnp.float32))
    y_f32 = jax.block_until_ready(fwd_f32(x, params))
    assert y_f32.shape == (B, T, 2 * HIDDEN)
    assert jnp.allclose(y_f32, y_ref, atol=1e-4, rtol=1e-4), "f32 mismatch vs reference"

    # bf16-matmul path (default: MXU-native operands, bf16 slabs, f32 gate math/accum).
    fwd_bf16 = jax.jit(functools.partial(lstm_forward, hidden_size=HIDDEN,
                                         num_layers=LAYERS,
                                         bidirectional=BIDIRECTIONAL,
                                         matmul_dtype=jnp.bfloat16))
    y_bf16 = jax.block_until_ready(fwd_bf16(x, params))
    assert y_bf16.shape == (B, T, 2 * HIDDEN)
    assert jnp.allclose(y_bf16, y_ref, atol=5e-2, rtol=5e-2), "bf16 mismatch vs reference"

    # Unidirectional smoke test (exercises the ndir == 1 kernel path).
    params_uni = init_lstm_params(kp, INPUT, HIDDEN, 1, False)
    y_uni_ref = lstm_reference(x, params_uni, HIDDEN, 1, False)
    fwd_uni = jax.jit(functools.partial(lstm_forward, hidden_size=HIDDEN, num_layers=1,
                                        bidirectional=False, matmul_dtype=jnp.float32))
    y_uni = jax.block_until_ready(fwd_uni(x, params_uni))
    assert jnp.allclose(y_uni, y_uni_ref, atol=1e-4, rtol=1e-4), "unidir mismatch"

    print("KERNEL_OK")
</pallas_src>

<mosaic_0001>
module attributes {stable_mosaic.version = 11 : i64} {
  func.func @_lstm_layer_kernel(%arg0: i32, %arg1: memref<64x16xf32, #tpu.memory_space<vmem>>, %arg2: memref<64x16xf32, #tpu.memory_space<vmem>>, %arg3: memref<16x128xf32, #tpu.memory_space<vmem>>, %arg4: memref<32x128xf32, #tpu.memory_space<vmem>>, %arg5: memref<1x128xf32, #tpu.memory_space<vmem>>, %arg6: memref<16x128xf32, #tpu.memory_space<vmem>>, %arg7: memref<32x128xf32, #tpu.memory_space<vmem>>, %arg8: memref<1x128xf32, #tpu.memory_space<vmem>>, %arg9: memref<64x32xf32, #tpu.memory_space<vmem>>, %arg10: memref<64x32xf32, #tpu.memory_space<vmem>>, %arg11: memref<8x32xf32, #tpu.memory_space<vmem>>, %arg12: memref<8x32xf32, #tpu.memory_space<vmem>>, %arg13: memref<8x32xf32, #tpu.memory_space<vmem>>, %arg14: memref<8x32xf32, #tpu.memory_space<vmem>>, %arg15: memref<64x128xf32, #tpu.memory_space<vmem>>, %arg16: memref<64x128xf32, #tpu.memory_space<vmem>>) attributes {dimension_semantics = [#tpu.dimension_semantics<arbitrary>], iteration_bounds = array<i64: 1>, scalar_prefetch = 0 : i64, scratch_operands = 6 : i64, tpu.core_type = #tpu.core_type<tc>, window_params = [{transform_indices = @transform_0, window_bounds = array<i64: 64, 16>}, {transform_indices = @transform_1, window_bounds = array<i64: 64, 16>}, {pipeline_mode = #tpu.pipeline_mode<synchronous>, transform_indices = @transform_2, window_bounds = array<i64: 16, 128>}, {pipeline_mode = #tpu.pipeline_mode<synchronous>, transform_indices = @transform_3, window_bounds = array<i64: 32, 128>}, {pipeline_mode = #tpu.pipeline_mode<synchronous>, transform_indices = @transform_4, window_bounds = array<i64: 1, 128>}, {pipeline_mode = #tpu.pipeline_mode<synchronous>, transform_indices = @transform_5, window_bounds = array<i64: 16, 128>}, {pipeline_mode = #tpu.pipeline_mode<synchronous>, transform_indices = @transform_6, window_bounds = array<i64: 32, 128>}, {pipeline_mode = #tpu.pipeline_mode<synchronous>, transform_indices = @transform_7, window_bounds = array<i64: 1, 128>}, {transform_indices = @transform_8, window_bounds = array<i64: 64, 32>}, {transform_indices = @transform_9, window_bounds = array<i64: 64, 32>}]} {
    %c0_i32 = arith.constant 0 : i32
    %0 = arith.cmpi eq, %arg0, %c0_i32 : i32
    %1 = arith.extui %0 : i1 to i32
    %c0_i32_0 = arith.constant 0 : i32
    %2 = arith.cmpi ne, %1, %c0_i32_0 : i32
    scf.if %2 {
      %cst_126 = arith.constant 0.000000e+00 : f32
      %425 = vector.broadcast %cst_126 : f32 to vector<8x32xf32>
      %c0_127 = arith.constant 0 : index
      %c0_128 = arith.constant 0 : index
      %426 = vector.load %arg11[%c0_127, %c0_128] : memref<8x32xf32, #tpu.memory_space<vmem>>, vector<8x32xf32>
      tpu.vector_store %arg11[%c0_127, %c0_128], %425 {strides = array<i32>} : memref<8x32xf32, #tpu.memory_space<vmem>>, vector<8x32xf32>,
      %cst_129 = arith.constant 0.000000e+00 : f32
      %427 = vector.broadcast %cst_129 : f32 to vector<8x32xf32>
      %c0_130 = arith.constant 0 : index
      %c0_131 = arith.constant 0 : index
      %428 = vector.load %arg12[%c0_130, %c0_131] : memref<8x32xf32, #tpu.memory_space<vmem>>, vector<8x32xf32>
      tpu.vector_store %arg12[%c0_130, %c0_131], %427 {strides = array<i32>} : memref<8x32xf32, #tpu.memory_space<vmem>>, vector<8x32xf32>,
      %cst_132 = arith.constant 0.000000e+00 : f32
      %429 = vector.broadcast %cst_132 : f32 to vector<8x32xf32>
      %c0_133 = arith.constant 0 : index
      %c0_134 = arith.constant 0 : index
      %430 = vector.load %arg13[%c0_133, %c0_134] : memref<8x32xf32, #tpu.memory_space<vmem>>, vector<8x32xf32>
      tpu.vector_store %arg13[%c0_133, %c0_134], %429 {strides = array<i32>} : memref<8x32xf32, #tpu.memory_space<vmem>>, vector<8x32xf32>,
      %cst_135 = arith.constant 0.000000e+00 : f32
      %431 = vector.broadcast %cst_135 : f32 to vector<8x32xf32>
      %c0_136 = arith.constant 0 : index
      %c0_137 = arith.constant 0 : index
      %432 = vector.load %arg14[%c0_136, %c0_137] : memref<8x32xf32, #tpu.memory_space<vmem>>, vector<8x32xf32>
      tpu.vector_store %arg14[%c0_136, %c0_137], %431 {strides = array<i32>} : memref<8x32xf32, #tpu.memory_space<vmem>>, vector<8x32xf32>,
    } else {
    }
    %c0 = arith.constant 0 : index
    %c0_1 = arith.constant 0 : index
    %3 = vector.load %arg1[%c0, %c0_1] : memref<64x16xf32, #tpu.memory_space<vmem>>, vector<64x16xf32>
    %c0_2 = arith.constant 0 : index
    %c0_3 = arith.constant 0 : index
    %4 = vector.load %arg3[%c0_2, %c0_3] : memref<16x128xf32, #tpu.memory_space<vmem>>, vector<16x128xf32>
    %cst = arith.constant dense<0.000000e+00> : vector<64x128xf32>
    %5 = tpu.matmul %3, %4, %cst {dimension_numbers = #tpu.dot_dimension_numbers<[1], [0], [0], [1], [0, 0, 1, 1], [], []>} : vector<64x16xf32>, vector<16x128xf32>, vector<64x128xf32> -> vector<64x128xf32>
    %c0_4 = arith.constant 0 : index
    %c0_5 = arith.constant 0 : index
    %6 = vector.load %arg5[%c0_4, %c0_5] : memref<1x128xf32, #tpu.memory_space<vmem>>, vector<1x128xf32>
    %7 = vector.broadcast %6 : vector<1x128xf32> to vector<64x128xf32>
    %8 = arith.addf %5, %7 : vector<64x128xf32>
    %c0_6 = arith.constant 0 : index
    %c0_7 = arith.constant 0 : index
    %9 = vector.load %arg15[%c0_6, %c0_7] : memref<64x128xf32, #tpu.memory_space<vmem>>, vector<64x128xf32>
    tpu.vector_store %arg15[%c0_6, %c0_7], %8 {strides = array<i32>} : memref<64x128xf32, #tpu.memory_space<vmem>>, vector<64x128xf32>,
    %c0_8 = arith.constant 0 : index
    %c0_9 = arith.constant 0 : index
    %10 = vector.load %arg2[%c0_8, %c0_9] : memref<64x16xf32, #tpu.memory_space<vmem>>, vector<64x16xf32>
    %c0_10 = arith.constant 0 : index
    %c0_11 = arith.constant 0 : index
    %11 = vector.load %arg6[%c0_10, %c0_11] : memref<16x128xf32, #tpu.memory_space<vmem>>, vector<16x128xf32>
    %cst_12 = arith.constant dense<0.000000e+00> : vector<64x128xf32>
    %12 = tpu.matmul %10, %11, %cst_12 {dimension_numbers = #tpu.dot_dimension_numbers<[1], [0], [0], [1], [0, 0, 1, 1], [], []>} : vector<64x16xf32>, vector<16x128xf32>, vector<64x128xf32> -> vector<64x128xf32>
    %c0_13 = arith.constant 0 : index
    %c0_14 = arith.constant 0 : index
    %13 = vector.load %arg8[%c0_13, %c0_14] : memref<1x128xf32, #tpu.memory_space<vmem>>, vector<1x128xf32>
    %14 = vector.broadcast %13 : vector<1x128xf32> to vector<64x128xf32>
    %15 = arith.addf %12, %14 : vector<64x128xf32>
    %c0_15 = arith.constant 0 : index
    %c0_16 = arith.constant 0 : index
    %16 = vector.load %arg16[%c0_15, %c0_16] : memref<64x128xf32, #tpu.memory_space<vmem>>, vector<64x128xf32>
    tpu.vector_store %arg16[%c0_15, %c0_16], %15 {strides = array<i32>} : memref<64x128xf32, #tpu.memory_space<vmem>>, vector<64x128xf32>,
    %17 = tpu.iota {dimensions = array<i32: 1>} : vector<8x128xi32>
    %c64_i32 = arith.constant 64 : i32
    %18 = vector.broadcast %c64_i32 : i32 to vector<8x128xi32>
    %19 = arith.cmpi sge, %17, %18 : vector<8x128xi32>
    %c96_i32 = arith.constant 96 : i32
    %20 = vector.broadcast %c96_i32 : i32 to vector<8x128xi32>
    %21 = arith.cmpi slt, %17, %20 : vector<8x128xi32>
    %22 = arith.andi %19, %21 : vector<8x128xi1>
    %c0_17 = arith.constant 0 : index
    %c0_18 = arith.constant 0 : index
    %23 = vector.load %arg4[%c0_17, %c0_18] : memref<32x128xf32, #tpu.memory_space<vmem>>, vector<32x128xf32>
    %c0_19 = arith.constant 0 : index
    %c0_20 = arith.constant 0 : index
    %24 = vector.load %arg7[%c0_19, %c0_20] : memref<32x128xf32, #tpu.memory_space<vmem>>, vector<32x128xf32>
    %c0_21 = arith.constant 0 : index
    %c0_22 = arith.constant 0 : index
    %25 = vector.load %arg11[%c0_21, %c0_22] : memref<8x32xf32, #tpu.memory_space<vmem>>, vector<8x32xf32>
    %c0_23 = arith.constant 0 : index
    %c0_24 = arith.constant 0 : index
    %26 = vector.load %arg12[%c0_23, %c0_24] : memref<8x32xf32, #tpu.memory_space<vmem>>, vector<8x32xf32>
    %c0_25 = arith.constant 0 : index
    %c0_26 = arith.constant 0 : index
    %27 = vector.load %arg13[%c0_25, %c0_26] : memref<8x32xf32, #tpu.memory_space<vmem>>, vector<8x32xf32>
    %c0_27 = arith.constant 0 : index
    %c0_28 = arith.constant 0 : index
    %28 = vector.load %arg14[%c0_27, %c0_28] : memref<8x32xf32, #tpu.memory_space<vmem>>, vector<8x32xf32>
    %c0_i32_29 = arith.constant 0 : i32
    %c8_i32 = arith.constant 8 : i32
    %29 = arith.muli %c0_i32_29, %c8_i32 : i32
    %30 = tpu.assume_multiple %29, 8 : i32
    %31 = arith.index_cast %30 : i32 to index
    %c0_30 = arith.constant 0 : index
    %32 = vector.load %arg15[%31, %c0_30] : memref<64x128xf32, #tpu.memory_space<vmem>>, vector<8x128xf32>
    %cst_31 = arith.constant dense<0.000000e+00> : vector<8x128xf32>
    %33 = tpu.matmul %25, %23, %cst_31 {dimension_numbers = #tpu.dot_dimension_numbers<[1], [0], [0], [1], [0, 0, 1, 1], [], []>} : vector<8x32xf32>, vector<32x128xf32>, vector<8x128xf32> -> vector<8x128xf32>
    %34 = arith.addf %32, %33 : vector<8x128xf32>
    %35 = math.tanh %34 : vector<8x128xf32>
    %36 = arith.negf %34 : vector<8x128xf32>
    %37 = math.exp %36 : vector<8x128xf32>
    %cst_32 = arith.constant 1.000000e+00 : f32
    %38 = vector.broadcast %cst_32 : f32 to vector<8x128xf32>
    %39 = arith.addf %38, %37 : vector<8x128xf32>
    %40 = arith.divf %38, %39 : vector<8x128xf32>
    %41 = arith.select %22, %35, %40 : vector<8x128xi1>, vector<8x128xf32>
    %42 = vector.extract_strided_slice %41 {offsets = [0, 0], sizes = [8, 32], strides = [1, 1]} : vector<8x128xf32> to vector<8x32xf32>
    %43 = vector.extract_strided_slice %41 {offsets = [0, 32], sizes = [8, 32], strides = [1, 1]} : vector<8x128xf32> to vector<8x32xf32>
    %44 = vector.extract_strided_slice %41 {offsets = [0, 64], sizes = [8, 32], strides = [1, 1]} : vector<8x128xf32> to vector<8x32xf32>
    %45 = vector.extract_strided_slice %41 {offsets = [0, 96], sizes = [8, 32], strides = [1, 1]} : vector<8x128xf32> to vector<8x32xf32>
    %46 = arith.mulf %43, %26 : vector<8x32xf32>
    %47 = arith.mulf %42, %44 : vector<8x32xf32>
    %48 = arith.addf %46, %47 : vector<8x32xf32>
    %49 = math.tanh %48 : vector<8x32xf32>
    %50 = arith.mulf %45, %49 : vector<8x32xf32>
    %51 = arith.index_cast %30 : i32 to index
    %c0_33 = arith.constant 0 : index
    %52 = vector.load %arg9[%51, %c0_33] : memref<64x32xf32, #tpu.memory_space<vmem>>, vector<8x32xf32>
    tpu.vector_store %arg9[%51, %c0_33], %50 {strides = array<i32>} : memref<64x32xf32, #tpu.memory_space<vmem>>, vector<8x32xf32>,
    %c7_i32 = arith.constant 7 : i32
    %53 = arith.subi %c7_i32, %c0_i32_29 : i32
    %c8_i32_34 = arith.constant 8 : i32
    %54 = arith.muli %53, %c8_i32_34 : i32
    %55 = tpu.assume_multiple %54, 8 : i32
    %56 = arith.index_cast %55 : i32 to index
    %c0_35 = arith.constant 0 : index
    %57 = vector.load %arg16[%56, %c0_35] : memref<64x128xf32, #tpu.memory_space<vmem>>, vector<8x128xf32>
    %cst_36 = arith.constant dense<0.000000e+00> : vector<8x128xf32>
    %58 = tpu.matmul %27, %24, %cst_36 {dimension_numbers = #tpu.dot_dimension_numbers<[1], [0], [0], [1], [0, 0, 1, 1], [], []>} : vector<8x32xf32>, vector<32x128xf32>, vector<8x128xf32> -> vector<8x128xf32>
    %59 = arith.addf %57, %58 : vector<8x128xf32>
    %60 = math.tanh %59 : vector<8x128xf32>
    %61 = arith.negf %59 : vector<8x128xf32>
    %62 = math.exp %61 : vector<8x128xf32>
    %cst_37 = arith.constant 1.000000e+00 : f32
    %63 = vector.broadcast %cst_37 : f32 to vector<8x128xf32>
    %64 = arith.addf %63, %62 : vector<8x128xf32>
    %65 = arith.divf %63, %64 : vector<8x128xf32>
    %66 = arith.select %22, %60, %65 : vector<8x128xi1>, vector<8x128xf32>
    %67 = vector.extract_strided_slice %66 {offsets = [0, 0], sizes = [8, 32], strides = [1, 1]} : vector<8x128xf32> to vector<8x32xf32>
    %68 = vector.extract_strided_slice %66 {offsets = [0, 32], sizes = [8, 32], strides = [1, 1]} : vector<8x128xf32> to vector<8x32xf32>
    %69 = vector.extract_strided_slice %66 {offsets = [0, 64], sizes = [8, 32], strides = [1, 1]} : vector<8x128xf32> to vector<8x32xf32>
    %70 = vector.extract_strided_slice %66 {offsets = [0, 96], sizes = [8, 32], strides = [1, 1]} : vector<8x128xf32> to vector<8x32xf32>
    %71 = arith.mulf %68, %28 : vector<8x32xf32>
    %72 = arith.mulf %67, %69 : vector<8x32xf32>
    %73 = arith.addf %71, %72 : vector<8x32xf32>
    %74 = math.tanh %73 : vector<8x32xf32>
    %75 = arith.mulf %70, %74 : vector<8x32xf32>
    %76 = arith.index_cast %55 : i32 to index
    %c0_38 = arith.constant 0 : index
    %77 = vector.load %arg10[%76, %c0_38] : memref<64x32xf32, #tpu.memory_space<vmem>>, vector<8x32xf32>
    tpu.vector_store %arg10[%76, %c0_38], %75 {strides = array<i32>} : memref<64x32xf32, #tpu.memory_space<vmem>>, vector<8x32xf32>,
    %c1_i32 = arith.constant 1 : i32
    %c8_i32_39 = arith.constant 8 : i32
    %78 = arith.muli %c1_i32, %c8_i32_39 : i32
    %79 = tpu.assume_multiple %78, 8 : i32
    %80 = arith.index_cast %79 : i32 to index
    %c0_40 = arith.constant 0 : index
    %81 = vector.load %arg15[%80, %c0_40] : memref<64x128xf32, #tpu.memory_space<vmem>>, vector<8x128xf32>
    %cst_41 = arith.constant dense<0.000000e+00> : vector<8x128xf32>
    %82 = tpu.matmul %50, %23, %cst_41 {dimension_numbers = #tpu.dot_dimension_numbers<[1], [0], [0], [1], [0, 0, 1, 1], [], []>} : vector<8x32xf32>, vector<32x128xf32>, vector<8x128xf32> -> vector<8x128xf32>
    %83 = arith.addf %81, %82 : vector<8x128xf32>
    %84 = math.tanh %83 : vector<8x128xf32>
    %85 = arith.negf %83 : vector<8x128xf32>
    %86 = math.exp %85 : vector<8x128xf32>
    %cst_42 = arith.constant 1.000000e+00 : f32
    %87 = vector.broadcast %cst_42 : f32 to vector<8x128xf32>
    %88 = arith.addf %87, %86 : vector<8x128xf32>
    %89 = arith.divf %87, %88 : vector<8x128xf32>
    %90 = arith.select %22, %84, %89 : vector<8x128xi1>, vector<8x128xf32>
    %91 = vector.extract_strided_slice %90 {offsets = [0, 0], sizes = [8, 32], strides = [1, 1]} : vector<8x128xf32> to vector<8x32xf32>
    %92 = vector.extract_strided_slice %90 {offsets = [0, 32], sizes = [8, 32], strides = [1, 1]} : vector<8x128xf32> to vector<8x32xf32>
    %93 = vector.extract_strided_slice %90 {offsets = [0, 64], sizes = [8, 32], strides = [1, 1]} : vector<8x128xf32> to vector<8x32xf32>
    %94 = vector.extract_strided_slice %90 {offsets = [0, 96], sizes = [8, 32], strides = [1, 1]} : vector<8x128xf32> to vector<8x32xf32>
    %95 = arith.mulf %92, %48 : vector<8x32xf32>
    %96 = arith.mulf %91, %93 : vector<8x32xf32>
    %97 = arith.addf %95, %96 : vector<8x32xf32>
    %98 = math.tanh %97 : vector<8x32xf32>
    %99 = arith.mulf %94, %98 : vector<8x32xf32>
    %100 = arith.index_cast %79 : i32 to index
    %c0_43 = arith.constant 0 : index
    %101 = vector.load %arg9[%100, %c0_43] : memref<64x32xf32, #tpu.memory_space<vmem>>, vector<8x32xf32>
    tpu.vector_store %arg9[%100, %c0_43], %99 {strides = array<i32>} : memref<64x32xf32, #tpu.memory_space<vmem>>, vector<8x32xf32>,
    %c7_i32_44 = arith.constant 7 : i32
    %102 = arith.subi %c7_i32_44, %c1_i32 : i32
    %c8_i32_45 = arith.constant 8 : i32
    %103 = arith.muli %102, %c8_i32_45 : i32
    %104 = tpu.assume_multiple %103, 8 : i32
    %105 = arith.index_cast %104 : i32 to index
    %c0_46 = arith.constant 0 : index
    %106 = vector.load %arg16[%105, %c0_46] : memref<64x128xf32, #tpu.memory_space<vmem>>, vector<8x128xf32>
    %cst_47 = arith.constant dense<0.000000e+00> : vector<8x128xf32>
    %107 = tpu.matmul %75, %24, %cst_47 {dimension_numbers = #tpu.dot_dimension_numbers<[1], [0], [0], [1], [0, 0, 1, 1], [], []>} : vector<8x32xf32>, vector<32x128xf32>, vector<8x128xf32> -> vector<8x128xf32>
    %108 = arith.addf %106, %107 : vector<8x128xf32>
    %109 = math.tanh %108 : vector<8x128xf32>
    %110 = arith.negf %108 : vector<8x128xf32>
    %111 = math.exp %110 : vector<8x128xf32>
    %cst_48 = arith.constant 1.000000e+00 : f32
    %112 = vector.broadcast %cst_48 : f32 to vector<8x128xf32>
    %113 = arith.addf %112, %111 : vector<8x128xf32>
    %114 = arith.divf %112, %113 : vector<8x128xf32>
    %115 = arith.select %22, %109, %114 : vector<8x128xi1>, vector<8x128xf32>
    %116 = vector.extract_strided_slice %115 {offsets = [0, 0], sizes = [8, 32], strides = [1, 1]} : vector<8x128xf32> to vector<8x32xf32>
    %117 = vector.extract_strided_slice %115 {offsets = [0, 32], sizes = [8, 32], strides = [1, 1]} : vector<8x128xf32> to vector<8x32xf32>
    %118 = vector.extract_strided_slice %115 {offsets = [0, 64], sizes = [8, 32], strides = [1, 1]} : vector<8x128xf32> to vector<8x32xf32>
    %119 = vector.extract_strided_slice %115 {offsets = [0, 96], sizes = [8, 32], strides = [1, 1]} : vector<8x128xf32> to vector<8x32xf32>
    %120 = arith.mulf %117, %73 : vector<8x32xf32>
    %121 = arith.mulf %116, %118 : vector<8x32xf32>
    %122 = arith.addf %120, %121 : vector<8x32xf32>
    %123 = math.tanh %122 : vector<8x32xf32>
    %124 = arith.mulf %119, %123 : vector<8x32xf32>
    %125 = arith.index_cast %104 : i32 to index
    %c0_49 = arith.constant 0 : index
    %126 = vector.load %arg10[%125, %c0_49] : memref<64x32xf32, #tpu.memory_space<vmem>>, vector<8x32xf32>
    tpu.vector_store %arg10[%125, %c0_49], %124 {strides = array<i32>} : memref<64x32xf32, #tpu.memory_space<vmem>>, vector<8x32xf32>,
    %c2_i32 = arith.constant 2 : i32
    %c8_i32_50 = arith.constant 8 : i32
    %127 = arith.muli %c2_i32, %c8_i32_50 : i32
    %128 = tpu.assume_multiple %127, 8 : i32
    %129 = arith.index_cast %128 : i32 to index
    %c0_51 = arith.constant 0 : index
    %130 = vector.load %arg15[%129, %c0_51] : memref<64x128xf32, #tpu.memory_space<vmem>>, vector<8x128xf32>
    %cst_52 = arith.constant dense<0.000000e+00> : vector<8x128xf32>
    %131 = tpu.matmul %99, %23, %cst_52 {dimension_numbers = #tpu.dot_dimension_numbers<[1], [0], [0], [1], [0, 0, 1, 1], [], []>} : vector<8x32xf32>, vector<32x128xf32>, vector<8x128xf32> -> vector<8x128xf32>
    %132 = arith.addf %130, %131 : vector<8x128xf32>
    %133 = math.tanh %132 : vector<8x128xf32>
    %134 = arith.negf %132 : vector<8x128xf32>
    %135 = math.exp %134 : vector<8x128xf32>
    %cst_53 = arith.constant 1.000000e+00 : f32
    %136 = vector.broadcast %cst_53 : f32 to vector<8x128xf32>
    %137 = arith.addf %136, %135 : vector<8x128xf32>
    %138 = arith.divf %136, %137 : vector<8x128xf32>
    %139 = arith.select %22, %133, %138 : vector<8x128xi1>, vector<8x128xf32>
    %140 = vector.extract_strided_slice %139 {offsets = [0, 0], sizes = [8, 32], strides = [1, 1]} : vector<8x128xf32> to vector<8x32xf32>
    %141 = vector.extract_strided_slice %139 {offsets = [0, 32], sizes = [8, 32], strides = [1, 1]} : vector<8x128xf32> to vector<8x32xf32>
    %142 = vector.extract_strided_slice %139 {offsets = [0, 64], sizes = [8, 32], strides = [1, 1]} : vector<8x128xf32> to vector<8x32xf32>
    %143 = vector.extract_strided_slice %139 {offsets = [0, 96], sizes = [8, 32], strides = [1, 1]} : vector<8x128xf32> to vector<8x32xf32>
    %144 = arith.mulf %141, %97 : vector<8x32xf32>
    %145 = arith.mulf %140, %142 : vector<8x32xf32>
    %146 = arith.addf %144, %145 : vector<8x32xf32>
    %147 = math.tanh %146 : vector<8x32xf32>
    %148 = arith.mulf %143, %147 : vector<8x32xf32>
    %149 = arith.index_cast %128 : i32 to index
    %c0_54 = arith.constant 0 : index
    %150 = vector.load %arg9[%149, %c0_54] : memref<64x32xf32, #tpu.memory_space<vmem>>, vector<8x32xf32>
    tpu.vector_store %arg9[%149, %c0_54], %148 {strides = array<i32>} : memref<64x32xf32, #tpu.memory_space<vmem>>, vector<8x32xf32>,
    %c7_i32_55 = arith.constant 7 : i32
    %151 = arith.subi %c7_i32_55, %c2_i32 : i32
    %c8_i32_56 = arith.constant 8 : i32
    %152 = arith.muli %151, %c8_i32_56 : i32
    %153 = tpu.assume_multiple %152, 8 : i32
    %154 = arith.index_cast %153 : i32 to index
    %c0_57 = arith.constant 0 : index
    %155 = vector.load %arg16[%154, %c0_57] : memref<64x128xf32, #tpu.memory_space<vmem>>, vector<8x128xf32>
    %cst_58 = arith.constant dense<0.000000e+00> : vector<8x128xf32>
    %156 = tpu.matmul %124, %24, %cst_58 {dimension_numbers = #tpu.dot_dimension_numbers<[1], [0], [0], [1], [0, 0, 1, 1], [], []>} : vector<8x32xf32>, vector<32x128xf32>, vector<8x128xf32> -> vector<8x128xf32>
    %157 = arith.addf %155, %156 : vector<8x128xf32>
    %158 = math.tanh %157 : vector<8x128xf32>
    %159 = arith.negf %157 : vector<8x128xf32>
    %160 = math.exp %159 : vector<8x128xf32>
    %cst_59 = arith.constant 1.000000e+00 : f32
    %161 = vector.broadcast %cst_59 : f32 to vector<8x128xf32>
    %162 = arith.addf %161, %160 : vector<8x128xf32>
    %163 = arith.divf %161, %162 : vector<8x128xf32>
    %164 = arith.select %22, %158, %163 : vector<8x128xi1>, vector<8x128xf32>
    %165 = vector.extract_strided_slice %164 {offsets = [0, 0], sizes = [8, 32], strides = [1, 1]} : vector<8x128xf32> to vector<8x32xf32>
    %166 = vector.extract_strided_slice %164 {offsets = [0, 32], sizes = [8, 32], strides = [1, 1]} : vector<8x128xf32> to vector<8x32xf32>
    %167 = vector.extract_strided_slice %164 {offsets = [0, 64], sizes = [8, 32], strides = [1, 1]} : vector<8x128xf32> to vector<8x32xf32>
    %168 = vector.extract_strided_slice %164 {offsets = [0, 96], sizes = [8, 32], strides = [1, 1]} : vector<8x128xf32> to vector<8x32xf32>
    %169 = arith.mulf %166, %122 : vector<8x32xf32>
    %170 = arith.mulf %165, %167 : vector<8x32xf32>
    %171 = arith.addf %169, %170 : vector<8x32xf32>
    %172 = math.tanh %171 : vector<8x32xf32>
    %173 = arith.mulf %168, %172 : vector<8x32xf32>
    %174 = arith.index_cast %153 : i32 to index
    %c0_60 = arith.constant 0 : index
    %175 = vector.load %arg10[%174, %c0_60] : memref<64x32xf32, #tpu.memory_space<vmem>>, vector<8x32xf32>
    tpu.vector_store %arg10[%174, %c0_60], %173 {strides = array<i32>} : memref<64x32xf32, #tpu.memory_space<vmem>>, vector<8x32xf32>,
    %c3_i32 = arith.constant 3 : i32
    %c8_i32_61 = arith.constant 8 : i32
    %176 = arith.muli %c3_i32, %c8_i32_61 : i32
    %177 = tpu.assume_multiple %176, 8 : i32
    %178 = arith.index_cast %177 : i32 to index
    %c0_62 = arith.constant 0 : index
    %179 = vector.load %arg15[%178, %c0_62] : memref<64x128xf32, #tpu.memory_space<vmem>>, vector<8x128xf32>
    %cst_63 = arith.constant dense<0.000000e+00> : vector<8x128xf32>
    %180 = tpu.matmul %148, %23, %cst_63 {dimension_numbers = #tpu.dot_dimension_numbers<[1], [0], [0], [1], [0, 0, 1, 1], [], []>} : vector<8x32xf32>, vector<32x128xf32>, vector<8x128xf32> -> vector<8x128xf32>
    %181 = arith.addf %179, %180 : vector<8x128xf32>
    %182 = math.tanh %181 : vector<8x128xf32>
    %183 = arith.negf %181 : vector<8x128xf32>
    %184 = math.exp %183 : vector<8x128xf32>
    %cst_64 = arith.constant 1.000000e+00 : f32
    %185 = vector.broadcast %cst_64 : f32 to vector<8x128xf32>
    %186 = arith.addf %185, %184 : vector<8x128xf32>
    %187 = arith.divf %185, %186 : vector<8x128xf32>
    %188 = arith.select %22, %182, %187 : vector<8x128xi1>, vector<8x128xf32>
    %189 = vector.extract_strided_slice %188 {offsets = [0, 0], sizes = [8, 32], strides = [1, 1]} : vector<8x128xf32> to vector<8x32xf32>
    %190 = vector.extract_strided_slice %188 {offsets = [0, 32], sizes = [8, 32], strides = [1, 1]} : vector<8x128xf32> to vector<8x32xf32>
    %191 = vector.extract_strided_slice %188 {offsets = [0, 64], sizes = [8, 32], strides = [1, 1]} : vector<8x128xf32> to vector<8x32xf32>
    %192 = vector.extract_strided_slice %188 {offsets = [0, 96], sizes = [8, 32], strides = [1, 1]} : vector<8x128xf32> to vector<8x32xf32>
    %193 = arith.mulf %190, %146 : vector<8x32xf32>
    %194 = arith.mulf %189, %191 : vector<8x32xf32>
    %195 = arith.addf %193, %194 : vector<8x32xf32>
    %196 = math.tanh %195 : vector<8x32xf32>
    %197 = arith.mulf %192, %196 : vector<8x32xf32>
    %198 = arith.index_cast %177 : i32 to index
    %c0_65 = arith.constant 0 : index
    %199 = vector.load %arg9[%198, %c0_65] : memref<64x32xf32, #tpu.memory_space<vmem>>, vector<8x32xf32>
    tpu.vector_store %arg9[%198, %c0_65], %197 {strides = array<i32>} : memref<64x32xf32, #tpu.memory_space<vmem>>, vector<8x32xf32>,
    %c7_i32_66 = arith.constant 7 : i32
    %200 = arith.subi %c7_i32_66, %c3_i32 : i32
    %c8_i32_67 = arith.constant 8 : i32
    %201 = arith.muli %200, %c8_i32_67 : i32
    %202 = tpu.assume_multiple %201, 8 : i32
    %203 = arith.index_cast %202 : i32 to index
    %c0_68 = arith.constant 0 : index
    %204 = vector.load %arg16[%203, %c0_68] : memref<64x128xf32, #tpu.memory_space<vmem>>, vector<8x128xf32>
    %cst_69 = arith.constant dense<0.000000e+00> : vector<8x128xf32>
    %205 = tpu.matmul %173, %24, %cst_69 {dimension_numbers = #tpu.dot_dimension_numbers<[1], [0], [0], [1], [0, 0, 1, 1], [], []>} : vector<8x32xf32>, vector<32x128xf32>, vector<8x128xf32> -> vector<8x128xf32>
    %206 = arith.addf %204, %205 : vector<8x128xf32>
    %207 = math.tanh %206 : vector<8x128xf32>
    %208 = arith.negf %206 : vector<8x128xf32>
    %209 = math.exp %208 : vector<8x128xf32>
    %cst_70 = arith.constant 1.000000e+00 : f32
    %210 = vector.broadcast %cst_70 : f32 to vector<8x128xf32>
    %211 = arith.addf %210, %209 : vector<8x128xf32>
    %212 = arith.divf %210, %211 : vector<8x128xf32>
    %213 = arith.select %22, %207, %212 : vector<8x128xi1>, vector<8x128xf32>
    %214 = vector.extract_strided_slice %213 {offsets = [0, 0], sizes = [8, 32], strides = [1, 1]} : vector<8x128xf32> to vector<8x32xf32>
    %215 = vector.extract_strided_slice %213 {offsets = [0, 32], sizes = [8, 32], strides = [1, 1]} : vector<8x128xf32> to vector<8x32xf32>
    %216 = vector.extract_strided_slice %213 {offsets = [0, 64], sizes = [8, 32], strides = [1, 1]} : vector<8x128xf32> to vector<8x32xf32>
    %217 = vector.extract_strided_slice %213 {offsets = [0, 96], sizes = [8, 32], strides = [1, 1]} : vector<8x128xf32> to vector<8x32xf32>
    %218 = arith.mulf %215, %171 : vector<8x32xf32>
    %219 = arith.mulf %214, %216 : vector<8x32xf32>
    %220 = arith.addf %218, %219 : vector<8x32xf32>
    %221 = math.tanh %220 : vector<8x32xf32>
    %222 = arith.mulf %217, %221 : vector<8x32xf32>
    %223 = arith.index_cast %202 : i32 to index
    %c0_71 = arith.constant 0 : index
    %224 = vector.load %arg10[%223, %c0_71] : memref<64x32xf32, #tpu.memory_space<vmem>>, vector<8x32xf32>
    tpu.vector_store %arg10[%223, %c0_71], %222 {strides = array<i32>} : memref<64x32xf32, #tpu.memory_space<vmem>>, vector<8x32xf32>,
    %c4_i32 = arith.constant 4 : i32
    %c8_i32_72 = arith.constant 8 : i32
    %225 = arith.muli %c4_i32, %c8_i32_72 : i32
    %226 = tpu.assume_multiple %225, 8 : i32
    %227 = arith.index_cast %226 : i32 to index
    %c0_73 = arith.constant 0 : index
    %228 = vector.load %arg15[%227, %c0_73] : memref<64x128xf32, #tpu.memory_space<vmem>>, vector<8x128xf32>
    %cst_74 = arith.constant dense<0.000000e+00> : vector<8x128xf32>
    %229 = tpu.matmul %197, %23, %cst_74 {dimension_numbers = #tpu.dot_dimension_numbers<[1], [0], [0], [1], [0, 0, 1, 1], [], []>} : vector<8x32xf32>, vector<32x128xf32>, vector<8x128xf32> -> vector<8x128xf32>
    %230 = arith.addf %228, %229 : vector<8x128xf32>
    %231 = math.tanh %230 : vector<8x128xf32>
    %232 = arith.negf %230 : vector<8x128xf32>
    %233 = math.exp %232 : vector<8x128xf32>
    %cst_75 = arith.constant 1.000000e+00 : f32
    %234 = vector.broadcast %cst_75 : f32 to vector<8x128xf32>
    %235 = arith.addf %234, %233 : vector<8x128xf32>
    %236 = arith.divf %234, %235 : vector<8x128xf32>
    %237 = arith.select %22, %231, %236 : vector<8x128xi1>, vector<8x128xf32>
    %238 = vector.extract_strided_slice %237 {offsets = [0, 0], sizes = [8, 32], strides = [1, 1]} : vector<8x128xf32> to vector<8x32xf32>
    %239 = vector.extract_strided_slice %237 {offsets = [0, 32], sizes = [8, 32], strides = [1, 1]} : vector<8x128xf32> to vector<8x32xf32>
    %240 = vector.extract_strided_slice %237 {offsets = [0, 64], sizes = [8, 32], strides = [1, 1]} : vector<8x128xf32> to vector<8x32xf32>
    %241 = vector.extract_strided_slice %237 {offsets = [0, 96], sizes = [8, 32], strides = [1, 1]} : vector<8x128xf32> to vector<8x32xf32>
    %242 = arith.mulf %239, %195 : vector<8x32xf32>
    %243 = arith.mulf %238, %240 : vector<8x32xf32>
    %244 = arith.addf %242, %243 : vector<8x32xf32>
    %245 = math.tanh %244 : vector<8x32xf32>
    %246 = arith.mulf %241, %245 : vector<8x32xf32>
    %247 = arith.index_cast %226 : i32 to index
    %c0_76 = arith.constant 0 : index
    %248 = vector.load %arg9[%247, %c0_76] : memref<64x32xf32, #tpu.memory_space<vmem>>, vector<8x32xf32>
    tpu.vector_store %arg9[%247, %c0_76], %246 {strides = array<i32>} : memref<64x32xf32, #tpu.memory_space<vmem>>, vector<8x32xf32>,
    %c7_i32_77 = arith.constant 7 : i32
    %249 = arith.subi %c7_i32_77, %c4_i32 : i32
    %c8_i32_78 = arith.constant 8 : i32
    %250 = arith.muli %249, %c8_i32_78 : i32
    %251 = tpu.assume_multiple %250, 8 : i32
    %252 = arith.index_cast %251 : i32 to index
    %c0_79 = arith.constant 0 : index
    %253 = vector.load %arg16[%252, %c0_79] : memref<64x128xf32, #tpu.memory_space<vmem>>, vector<8x128xf32>
    %cst_80 = arith.constant dense<0.000000e+00> : vector<8x128xf32>
    %254 = tpu.matmul %222, %24, %cst_80 {dimension_numbers = #tpu.dot_dimension_numbers<[1], [0], [0], [1], [0, 0, 1, 1], [], []>} : vector<8x32xf32>, vector<32x128xf32>, vector<8x128xf32> -> vector<8x128xf32>
    %255 = arith.addf %253, %254 : vector<8x128xf32>
    %256 = math.tanh %255 : vector<8x128xf32>
    %257 = arith.negf %255 : vector<8x128xf32>
    %258 = math.exp %257 : vector<8x128xf32>
    %cst_81 = arith.constant 1.000000e+00 : f32
    %259 = vector.broadcast %cst_81 : f32 to vector<8x128xf32>
    %260 = arith.addf %259, %258 : vector<8x128xf32>
    %261 = arith.divf %259, %260 : vector<8x128xf32>
    %262 = arith.select %22, %256, %261 : vector<8x128xi1>, vector<8x128xf32>
    %263 = vector.extract_strided_slice %262 {offsets = [0, 0], sizes = [8, 32], strides = [1, 1]} : vector<8x128xf32> to vector<8x32xf32>
    %264 = vector.extract_strided_slice %262 {offsets = [0, 32], sizes = [8, 32], strides = [1, 1]} : vector<8x128xf32> to vector<8x32xf32>
    %265 = vector.extract_strided_slice %262 {offsets = [0, 64], sizes = [8, 32], strides = [1, 1]} : vector<8x128xf32> to vector<8x32xf32>
    %266 = vector.extract_strided_slice %262 {offsets = [0, 96], sizes = [8, 32], strides = [1, 1]} : vector<8x128xf32> to vector<8x32xf32>
    %267 = arith.mulf %264, %220 : vector<8x32xf32>
    %268 = arith.mulf %263, %265 : vector<8x32xf32>
    %269 = arith.addf %267, %268 : vector<8x32xf32>
    %270 = math.tanh %269 : vector<8x32xf32>
    %271 = arith.mulf %266, %270 : vector<8x32xf32>
    %272 = arith.index_cast %251 : i32 to index
    %c0_82 = arith.constant 0 : index
    %273 = vector.load %arg10[%272, %c0_82] : memref<64x32xf32, #tpu.memory_space<vmem>>, vector<8x32xf32>
    tpu.vector_store %arg10[%272, %c0_82], %271 {strides = array<i32>} : memref<64x32xf32, #tpu.memory_space<vmem>>, vector<8x32xf32>,
    %c5_i32 = arith.constant 5 : i32
    %c8_i32_83 = arith.constant 8 : i32
    %274 = arith.muli %c5_i32, %c8_i32_83 : i32
    %275 = tpu.assume_multiple %274, 8 : i32
    %276 = arith.index_cast %275 : i32 to index
    %c0_84 = arith.constant 0 : index
    %277 = vector.load %arg15[%276, %c0_84] : memref<64x128xf32, #tpu.memory_space<vmem>>, vector<8x128xf32>
    %cst_85 = arith.constant dense<0.000000e+00> : vector<8x128xf32>
    %278 = tpu.matmul %246, %23, %cst_85 {dimension_numbers = #tpu.dot_dimension_numbers<[1], [0], [0], [1], [0, 0, 1, 1], [], []>} : vector<8x32xf32>, vector<32x128xf32>, vector<8x128xf32> -> vector<8x128xf32>
    %279 = arith.addf %277, %278 : vector<8x128xf32>
    %280 = math.tanh %279 : vector<8x128xf32>
    %281 = arith.negf %279 : vector<8x128xf32>
    %282 = math.exp %281 : vector<8x128xf32>
    %cst_86 = arith.constant 1.000000e+00 : f32
    %283 = vector.broadcast %cst_86 : f32 to vector<8x128xf32>
    %284 = arith.addf %283, %282 : vector<8x128xf32>
    %285 = arith.divf %283, %284 : vector<8x128xf32>
    %286 = arith.select %22, %280, %285 : vector<8x128xi1>, vector<8x128xf32>
    %287 = vector.extract_strided_slice %286 {offsets = [0, 0], sizes = [8, 32], strides = [1, 1]} : vector<8x128xf32> to vector<8x32xf32>
    %288 = vector.extract_strided_slice %286 {offsets = [0, 32], sizes = [8, 32], strides = [1, 1]} : vector<8x128xf32> to vector<8x32xf32>
    %289 = vector.extract_strided_slice %286 {offsets = [0, 64], sizes = [8, 32], strides = [1, 1]} : vector<8x128xf32> to vector<8x32xf32>
    %290 = vector.extract_strided_slice %286 {offsets = [0, 96], sizes = [8, 32], strides = [1, 1]} : vector<8x128xf32> to vector<8x32xf32>
    %291 = arith.mulf %288, %244 : vector<8x32xf32>
    %292 = arith.mulf %287, %289 : vector<8x32xf32>
    %293 = arith.addf %291, %292 : vector<8x32xf32>
    %294 = math.tanh %293 : vector<8x32xf32>
    %295 = arith.mulf %290, %294 : vector<8x32xf32>
    %296 = arith.index_cast %275 : i32 to index
    %c0_87 = arith.constant 0 : index
    %297 = vector.load %arg9[%296, %c0_87] : memref<64x32xf32, #tpu.memory_space<vmem>>, vector<8x32xf32>
    tpu.vector_store %arg9[%296, %c0_87], %295 {strides = array<i32>} : memref<64x32xf32, #tpu.memory_space<vmem>>, vector<8x32xf32>,
    %c7_i32_88 = arith.constant 7 : i32
    %298 = arith.subi %c7_i32_88, %c5_i32 : i32
    %c8_i32_89 = arith.constant 8 : i32
    %299 = arith.muli %298, %c8_i32_89 : i32
    %300 = tpu.assume_multiple %299, 8 : i32
    %301 = arith.index_cast %300 : i32 to index
    %c0_90 = arith.constant 0 : index
    %302 = vector.load %arg16[%301, %c0_90] : memref<64x128xf32, #tpu.memory_space<vmem>>, vector<8x128xf32>
    %cst_91 = arith.constant dense<0.000000e+00> : vector<8x128xf32>
    %303 = tpu.matmul %271, %24, %cst_91 {dimension_numbers = #tpu.dot_dimension_numbers<[1], [0], [0], [1], [0, 0, 1, 1], [], []>} : vector<8x32xf32>, vector<32x128xf32>, vector<8x128xf32> -> vector<8x128xf32>
    %304 = arith.addf %302, %303 : vector<8x128xf32>
    %305 = math.tanh %304 : vector<8x128xf32>
    %306 = arith.negf %304 : vector<8x128xf32>
    %307 = math.exp %306 : vector<8x128xf32>
    %cst_92 = arith.constant 1.000000e+00 : f32
    %308 = vector.broadcast %cst_92 : f32 to vector<8x128xf32>
    %309 = arith.addf %308, %307 : vector<8x128xf32>
    %310 = arith.divf %308, %309 : vector<8x128xf32>
    %311 = arith.select %22, %305, %310 : vector<8x128xi1>, vector<8x128xf32>
    %312 = vector.extract_strided_slice %311 {offsets = [0, 0], sizes = [8, 32], strides = [1, 1]} : vector<8x128xf32> to vector<8x32xf32>
    %313 = vector.extract_strided_slice %311 {offsets = [0, 32], sizes = [8, 32], strides = [1, 1]} : vector<8x128xf32> to vector<8x32xf32>
    %314 = vector.extract_strided_slice %311 {offsets = [0, 64], sizes = [8, 32], strides = [1, 1]} : vector<8x128xf32> to vector<8x32xf32>
    %315 = vector.extract_strided_slice %311 {offsets = [0, 96], sizes = [8, 32], strides = [1, 1]} : vector<8x128xf32> to vector<8x32xf32>
    %316 = arith.mulf %313, %269 : vector<8x32xf32>
    %317 = arith.mulf %312, %314 : vector<8x32xf32>
    %318 = arith.addf %316, %317 : vector<8x32xf32>
    %319 = math.tanh %318 : vector<8x32xf32>
    %320 = arith.mulf %315, %319 : vector<8x32xf32>
    %321 = arith.index_cast %300 : i32 to index
    %c0_93 = arith.constant 0 : index
    %322 = vector.load %arg10[%321, %c0_93] : memref<64x32xf32, #tpu.memory_space<vmem>>, vector<8x32xf32>
    tpu.vector_store %arg10[%321, %c0_93], %320 {strides = array<i32>} : memref<64x32xf32, #tpu.memory_space<vmem>>, vector<8x32xf32>,
    %c6_i32 = arith.constant 6 : i32
    %c8_i32_94 = arith.constant 8 : i32
    %323 = arith.muli %c6_i32, %c8_i32_94 : i32
    %324 = tpu.assume_multiple %323, 8 : i32
    %325 = arith.index_cast %324 : i32 to index
    %c0_95 = arith.constant 0 : index
    %326 = vector.load %arg15[%325, %c0_95] : memref<64x128xf32, #tpu.memory_space<vmem>>, vector<8x128xf32>
    %cst_96 = arith.constant dense<0.000000e+00> : vector<8x128xf32>
    %327 = tpu.matmul %295, %23, %cst_96 {dimension_numbers = #tpu.dot_dimension_numbers<[1], [0], [0], [1], [0, 0, 1, 1], [], []>} : vector<8x32xf32>, vector<32x128xf32>, vector<8x128xf32> -> vector<8x128xf32>
    %328 = arith.addf %326, %327 : vector<8x128xf32>
    %329 = math.tanh %328 : vector<8x128xf32>
    %330 = arith.negf %328 : vector<8x128xf32>
    %331 = math.exp %330 : vector<8x128xf32>
    %cst_97 = arith.constant 1.000000e+00 : f32
    %332 = vector.broadcast %cst_97 : f32 to vector<8x128xf32>
    %333 = arith.addf %332, %331 : vector<8x128xf32>
    %334 = arith.divf %332, %333 : vector<8x128xf32>
    %335 = arith.select %22, %329, %334 : vector<8x128xi1>, vector<8x128xf32>
    %336 = vector.extract_strided_slice %335 {offsets = [0, 0], sizes = [8, 32], strides = [1, 1]} : vector<8x128xf32> to vector<8x32xf32>
    %337 = vector.extract_strided_slice %335 {offsets = [0, 32], sizes = [8, 32], strides = [1, 1]} : vector<8x128xf32> to vector<8x32xf32>
    %338 = vector.extract_strided_slice %335 {offsets = [0, 64], sizes = [8, 32], strides = [1, 1]} : vector<8x128xf32> to vector<8x32xf32>
    %339 = vector.extract_strided_slice %335 {offsets = [0, 96], sizes = [8, 32], strides = [1, 1]} : vector<8x128xf32> to vector<8x32xf32>
    %340 = arith.mulf %337, %293 : vector<8x32xf32>
    %341 = arith.mulf %336, %338 : vector<8x32xf32>
    %342 = arith.addf %340, %341 : vector<8x32xf32>
    %343 = math.tanh %342 : vector<8x32xf32>
    %344 = arith.mulf %339, %343 : vector<8x32xf32>
    %345 = arith.index_cast %324 : i32 to index
    %c0_98 = arith.constant 0 : index
    %346 = vector.load %arg9[%345, %c0_98] : memref<64x32xf32, #tpu.memory_space<vmem>>, vector<8x32xf32>
    tpu.vector_store %arg9[%345, %c0_98], %344 {strides = array<i32>} : memref<64x32xf32, #tpu.memory_space<vmem>>, vector<8x32xf32>,
    %c7_i32_99 = arith.constant 7 : i32
    %347 = arith.subi %c7_i32_99, %c6_i32 : i32
    %c8_i32_100 = arith.constant 8 : i32
    %348 = arith.muli %347, %c8_i32_100 : i32
    %349 = tpu.assume_multiple %348, 8 : i32
    %350 = arith.index_cast %349 : i32 to index
    %c0_101 = arith.constant 0 : index
    %351 = vector.load %arg16[%350, %c0_101] : memref<64x128xf32, #tpu.memory_space<vmem>>, vector<8x128xf32>
    %cst_102 = arith.constant dense<0.000000e+00> : vector<8x128xf32>
    %352 = tpu.matmul %320, %24, %cst_102 {dimension_numbers = #tpu.dot_dimension_numbers<[1], [0], [0], [1], [0, 0, 1, 1], [], []>} : vector<8x32xf32>, vector<32x128xf32>, vector<8x128xf32> -> vector<8x128xf32>
    %353 = arith.addf %351, %352 : vector<8x128xf32>
    %354 = math.tanh %353 : vector<8x128xf32>
    %355 = arith.negf %353 : vector<8x128xf32>
    %356 = math.exp %355 : vector<8x128xf32>
    %cst_103 = arith.constant 1.000000e+00 : f32
    %357 = vector.broadcast %cst_103 : f32 to vector<8x128xf32>
    %358 = arith.addf %357, %356 : vector<8x128xf32>
    %359 = arith.divf %357, %358 : vector<8x128xf32>
    %360 = arith.select %22, %354, %359 : vector<8x128xi1>, vector<8x128xf32>
    %361 = vector.extract_strided_slice %360 {offsets = [0, 0], sizes = [8, 32], strides = [1, 1]} : vector<8x128xf32> to vector<8x32xf32>
    %362 = vector.extract_strided_slice %360 {offsets = [0, 32], sizes = [8, 32], strides = [1, 1]} : vector<8x128xf32> to vector<8x32xf32>
    %363 = vector.extract_strided_slice %360 {offsets = [0, 64], sizes = [8, 32], strides = [1, 1]} : vector<8x128xf32> to vector<8x32xf32>
    %364 = vector.extract_strided_slice %360 {offsets = [0, 96], sizes = [8, 32], strides = [1, 1]} : vector<8x128xf32> to vector<8x32xf32>
    %365 = arith.mulf %362, %318 : vector<8x32xf32>
    %366 = arith.mulf %361, %363 : vector<8x32xf32>
    %367 = arith.addf %365, %366 : vector<8x32xf32>
    %368 = math.tanh %367 : vector<8x32xf32>
    %369 = arith.mulf %364, %368 : vector<8x32xf32>
    %370 = arith.index_cast %349 : i32 to index
    %c0_104 = arith.constant 0 : index
    %371 = vector.load %arg10[%370, %c0_104] : memref<64x32xf32, #tpu.memory_space<vmem>>, vector<8x32xf32>
    tpu.vector_store %arg10[%370, %c0_104], %369 {strides = array<i32>} : memref<64x32xf32, #tpu.memory_space<vmem>>, vector<8x32xf32>,
    %c7_i32_105 = arith.constant 7 : i32
    %c8_i32_106 = arith.constant 8 : i32
    %372 = arith.muli %c7_i32_105, %c8_i32_106 : i32
    %373 = tpu.assume_multiple %372, 8 : i32
    %374 = arith.index_cast %373 : i32 to index
    %c0_107 = arith.constant 0 : index
    %375 = vector.load %arg15[%374, %c0_107] : memref<64x128xf32, #tpu.memory_space<vmem>>, vector<8x128xf32>
    %cst_108 = arith.constant dense<0.000000e+00> : vector<8x128xf32>
    %376 = tpu.matmul %344, %23, %cst_108 {dimension_numbers = #tpu.dot_dimension_numbers<[1], [0], [0], [1], [0, 0, 1, 1], [], []>} : vector<8x32xf32>, vector<32x128xf32>, vector<8x128xf32> -> vector<8x128xf32>
    %377 = arith.addf %375, %376 : vector<8x128xf32>
    %378 = math.tanh %377 : vector<8x128xf32>
    %379 = arith.negf %377 : vector<8x128xf32>
    %380 = math.exp %379 : vector<8x128xf32>
    %cst_109 = arith.constant 1.000000e+00 : f32
    %381 = vector.broadcast %cst_109 : f32 to vector<8x128xf32>
    %382 = arith.addf %381, %380 : vector<8x128xf32>
    %383 = arith.divf %381, %382 : vector<8x128xf32>
    %384 = arith.select %22, %378, %383 : vector<8x128xi1>, vector<8x128xf32>
    %385 = vector.extract_strided_slice %384 {offsets = [0, 0], sizes = [8, 32], strides = [1, 1]} : vector<8x128xf32> to vector<8x32xf32>
    %386 = vector.extract_strided_slice %384 {offsets = [0, 32], sizes = [8, 32], strides = [1, 1]} : vector<8x128xf32> to vector<8x32xf32>
    %387 = vector.extract_strided_slice %384 {offsets = [0, 64], sizes = [8, 32], strides = [1, 1]} : vector<8x128xf32> to vector<8x32xf32>
    %388 = vector.extract_strided_slice %384 {offsets = [0, 96], sizes = [8, 32], strides = [1, 1]} : vector<8x128xf32> to vector<8x32xf32>
    %389 = arith.mulf %386, %342 : vector<8x32xf32>
    %390 = arith.mulf %385, %387 : vector<8x32xf32>
    %391 = arith.addf %389, %390 : vector<8x32xf32>
    %392 = math.tanh %391 : vector<8x32xf32>
    %393 = arith.mulf %388, %392 : vector<8x32xf32>
    %394 = arith.index_cast %373 : i32 to index
    %c0_110 = arith.constant 0 : index
    %395 = vector.load %arg9[%394, %c0_110] : memref<64x32xf32, #tpu.memory_space<vmem>>, vector<8x32xf32>
    tpu.vector_store %arg9[%394, %c0_110], %393 {strides = array<i32>} : memref<64x32xf32, #tpu.memory_space<vmem>>, vector<8x32xf32>,
    %c7_i32_111 = arith.constant 7 : i32
    %396 = arith.subi %c7_i32_111, %c7_i32_105 : i32
    %c8_i32_112 = arith.constant 8 : i32
    %397 = arith.muli %396, %c8_i32_112 : i32
    %398 = tpu.assume_multiple %397, 8 : i32
    %399 = arith.index_cast %398 : i32 to index
    %c0_113 = arith.constant 0 : index
    %400 = vector.load %arg16[%399, %c0_113] : memref<64x128xf32, #tpu.memory_space<vmem>>, vector<8x128xf32>
    %cst_114 = arith.constant dense<0.000000e+00> : vector<8x128xf32>
    %401 = tpu.matmul %369, %24, %cst_114 {dimension_numbers = #tpu.dot_dimension_numbers<[1], [0], [0], [1], [0, 0, 1, 1], [], []>} : vector<8x32xf32>, vector<32x128xf32>, vector<8x128xf32> -> vector<8x128xf32>
    %402 = arith.addf %400, %401 : vector<8x128xf32>
    %403 = math.tanh %402 : vector<8x128xf32>
    %404 = arith.negf %402 : vector<8x128xf32>
    %405 = math.exp %404 : vector<8x128xf32>
    %cst_115 = arith.constant 1.000000e+00 : f32
    %406 = vector.broadcast %cst_115 : f32 to vector<8x128xf32>
    %407 = arith.addf %406, %405 : vector<8x128xf32>
    %408 = arith.divf %406, %407 : vector<8x128xf32>
    %409 = arith.select %22, %403, %408 : vector<8x128xi1>, vector<8x128xf32>
    %410 = vector.extract_strided_slice %409 {offsets = [0, 0], sizes = [8, 32], strides = [1, 1]} : vector<8x128xf32> to vector<8x32xf32>
    %411 = vector.extract_strided_slice %409 {offsets = [0, 32], sizes = [8, 32], strides = [1, 1]} : vector<8x128xf32> to vector<8x32xf32>
    %412 = vector.extract_strided_slice %409 {offsets = [0, 64], sizes = [8, 32], strides = [1, 1]} : vector<8x128xf32> to vector<8x32xf32>
    %413 = vector.extract_strided_slice %409 {offsets = [0, 96], sizes = [8, 32], strides = [1, 1]} : vector<8x128xf32> to vector<8x32xf32>
    %414 = arith.mulf %411, %367 : vector<8x32xf32>
    %415 = arith.mulf %410, %412 : vector<8x32xf32>
    %416 = arith.addf %414, %415 : vector<8x32xf32>
    %417 = math.tanh %416 : vector<8x32xf32>
    %418 = arith.mulf %413, %417 : vector<8x32xf32>
    %419 = arith.index_cast %398 : i32 to index
    %c0_116 = arith.constant 0 : index
    %420 = vector.load %arg10[%419, %c0_116] : memref<64x32xf32, #tpu.memory_space<vmem>>, vector<8x32xf32>
    tpu.vector_store %arg10[%419, %c0_116], %418 {strides = array<i32>} : memref<64x32xf32, #tpu.memory_space<vmem>>, vector<8x32xf32>,
    %c8_i32_117 = arith.constant 8 : i32
    %c0_118 = arith.constant 0 : index
    %c0_119 = arith.constant 0 : index
    %421 = vector.load %arg11[%c0_118, %c0_119] : memref<8x32xf32, #tpu.memory_space<vmem>>, vector<8x32xf32>
    tpu.vector_store %arg11[%c0_118, %c0_119], %393 {strides = array<i32>} : memref<8x32xf32, #tpu.memory_space<vmem>>, vector<8x32xf32>,
    %c0_120 = arith.constant 0 : index
    %c0_121 = arith.constant 0 : index
    %422 = vector.load %arg12[%c0_120, %c0_121] : memref<8x32xf32, #tpu.memory_space<vmem>>, vector<8x32xf32>
    tpu.vector_store %arg12[%c0_120, %c0_121], %391 {strides = array<i32>} : memref<8x32xf32, #tpu.memory_space<vmem>>, vector<8x32xf32>,
    %c0_122 = arith.constant 0 : index
    %c0_123 = arith.constant 0 : index
    %423 = vector.load %arg13[%c0_122, %c0_123] : memref<8x32xf32, #tpu.memory_space<vmem>>, vector<8x32xf32>
    tpu.vector_store %arg13[%c0_122, %c0_123], %418 {strides = array<i32>} : memref<8x32xf32, #tpu.memory_space<vmem>>, vector<8x32xf32>,
    %c0_124 = arith.constant 0 : index
    %c0_125 = arith.constant 0 : index
    %424 = vector.load %arg14[%c0_124, %c0_125] : memref<8x32xf32, #tpu.memory_space<vmem>>, vector<8x32xf32>
    tpu.vector_store %arg14[%c0_124, %c0_125], %416 {strides = array<i32>} : memref<8x32xf32, #tpu.memory_space<vmem>>, vector<8x32xf32>,
    return
  }
  func.func @transform_0(%arg0: i32) -> (i32, i32) {
    %c0_i32 = arith.constant 0 : i32
    %c0_i32_0 = arith.constant 0 : i32
    return %arg0, %c0_i32 : i32, i32
  }
  func.func @transform_1(%arg0: i32) -> (i32, i32) {
    %c0_i32 = arith.constant 0 : i32
    %0 = arith.subi %c0_i32, %arg0 : i32
    %c0_i32_0 = arith.constant 0 : i32
    %c0_i32_1 = arith.constant 0 : i32
    return %0, %c0_i32_0 : i32, i32
  }
  func.func @transform_2(%arg0: i32) -> (i32, i32) {
    %c0_i32 = arith.constant 0 : i32
    %c0_i32_0 = arith.constant 0 : i32
    %c0_i32_1 = arith.constant 0 : i32
    return %c0_i32, %c0_i32_0 : i32, i32
  }
  func.func @transform_3(%arg0: i32) -> (i32, i32) {
    %c0_i32 = arith.constant 0 : i32
    %c0_i32_0 = arith.constant 0 : i32
    %c0_i32_1 = arith.constant 0 : i32
    return %c0_i32, %c0_i32_0 : i32, i32
  }
  func.func @transform_4(%arg0: i32) -> (i32, i32) {
    %c0_i32 = arith.constant 0 : i32
    %c0_i32_0 = arith.constant 0 : i32
    %c0_i32_1 = arith.constant 0 : i32
    return %c0_i32, %c0_i32_0 : i32, i32
  }
  func.func @transform_5(%arg0: i32) -> (i32, i32) {
    %c0_i32 = arith.constant 0 : i32
    %c0_i32_0 = arith.constant 0 : i32
    %c0_i32_1 = arith.constant 0 : i32
    return %c0_i32, %c0_i32_0 : i32, i32
  }
  func.func @transform_6(%arg0: i32) -> (i32, i32) {
    %c0_i32 = arith.constant 0 : i32
    %c0_i32_0 = arith.constant 0 : i32
    %c0_i32_1 = arith.constant 0 : i32
    return %c0_i32, %c0_i32_0 : i32, i32
  }
  func.func @transform_7(%arg0: i32) -> (i32, i32) {
    %c0_i32 = arith.constant 0 : i32
    %c0_i32_0 = arith.constant 0 : i32
    %c0_i32_1 = arith.constant 0 : i32
    return %c0_i32, %c0_i32_0 : i32, i32
  }
  func.func @transform_8(%arg0: i32) -> (i32, i32) {
    %c0_i32 = arith.constant 0 : i32
    %c0_i32_0 = arith.constant 0 : i32
    return %arg0, %c0_i32 : i32, i32
  }
  func.func @transform_9(%arg0: i32) -> (i32, i32) {
    %c0_i32 = arith.constant 0 : i32
    %0 = arith.subi %c0_i32, %arg0 : i32
    %c0_i32_0 = arith.constant 0 : i32
    %c0_i32_1 = arith.constant 0 : i32
    return %0, %c0_i32_0 : i32, i32
  }
}

module attributes {stable_mosaic.version = 11 : i64} {
  func.func @_lstm_layer_kernel(%arg0: i32, %arg1: memref<64x64xf32, #tpu.memory_space<vmem>>, %arg2: memref<64x64xf32, #tpu.memory_space<vmem>>, %arg3: memref<64x128xf32, #tpu.memory_space<vmem>>, %arg4: memref<32x128xf32, #tpu.memory_space<vmem>>, %arg5: memref<1x128xf32, #tpu.memory_space<vmem>>, %arg6: memref<64x128xf32, #tpu.memory_space<vmem>>, %arg7: memref<32x128xf32, #tpu.memory_space<vmem>>, %arg8: memref<1x128xf32, #tpu.memory_space<vmem>>, %arg9: memref<64x32xf32, #tpu.memory_space<vmem>>, %arg10: memref<64x32xf32, #tpu.memory_space<vmem>>, %arg11: memref<8x32xf32, #tpu.memory_space<vmem>>, %arg12: memref<8x32xf32, #tpu.memory_space<vmem>>, %arg13: memref<8x32xf32, #tpu.memory_space<vmem>>, %arg14: memref<8x32xf32, #tpu.memory_space<vmem>>, %arg15: memref<64x128xf32, #tpu.memory_space<vmem>>, %arg16: memref<64x128xf32, #tpu.memory_space<vmem>>) attributes {dimension_semantics = [#tpu.dimension_semantics<arbitrary>], iteration_bounds = array<i64: 1>, scalar_prefetch = 0 : i64, scratch_operands = 6 : i64, tpu.core_type = #tpu.core_type<tc>, window_params = [{transform_indices = @transform_0, window_bounds = array<i64: 64, 64>}, {transform_indices = @transform_1, window_bounds = array<i64: 64, 64>}, {pipeline_mode = #tpu.pipeline_mode<synchronous>, transform_indices = @transform_2, window_bounds = array<i64: 64, 128>}, {pipeline_mode = #tpu.pipeline_mode<synchronous>, transform_indices = @transform_3, window_bounds = array<i64: 32, 128>}, {pipeline_mode = #tpu.pipeline_mode<synchronous>, transform_indices = @transform_4, window_bounds = array<i64: 1, 128>}, {pipeline_mode = #tpu.pipeline_mode<synchronous>, transform_indices = @transform_5, window_bounds = array<i64: 64, 128>}, {pipeline_mode = #tpu.pipeline_mode<synchronous>, transform_indices = @transform_6, window_bounds = array<i64: 32, 128>}, {pipeline_mode = #tpu.pipeline_mode<synchronous>, transform_indices = @transform_7, window_bounds = array<i64: 1, 128>}, {transform_indices = @transform_8, window_bounds = array<i64: 64, 32>}, {transform_indices = @transform_9, window_bounds = array<i64: 64, 32>}]} {
    %c0_i32 = arith.constant 0 : i32
    %0 = arith.cmpi eq, %arg0, %c0_i32 : i32
    %1 = arith.extui %0 : i1 to i32
    %c0_i32_0 = arith.constant 0 : i32
    %2 = arith.cmpi ne, %1, %c0_i32_0 : i32
    scf.if %2 {
      %cst_126 = arith.constant 0.000000e+00 : f32
      %425 = vector.broadcast %cst_126 : f32 to vector<8x32xf32>
      %c0_127 = arith.constant 0 : index
      %c0_128 = arith.constant 0 : index
      %426 = vector.load %arg11[%c0_127, %c0_128] : memref<8x32xf32, #tpu.memory_space<vmem>>, vector<8x32xf32>
      tpu.vector_store %arg11[%c0_127, %c0_128], %425 {strides = array<i32>} : memref<8x32xf32, #tpu.memory_space<vmem>>, vector<8x32xf32>,
      %cst_129 = arith.constant 0.000000e+00 : f32
      %427 = vector.broadcast %cst_129 : f32 to vector<8x32xf32>
      %c0_130 = arith.constant 0 : index
      %c0_131 = arith.constant 0 : index
      %428 = vector.load %arg12[%c0_130, %c0_131] : memref<8x32xf32, #tpu.memory_space<vmem>>, vector<8x32xf32>
      tpu.vector_store %arg12[%c0_130, %c0_131], %427 {strides = array<i32>} : memref<8x32xf32, #tpu.memory_space<vmem>>, vector<8x32xf32>,
      %cst_132 = arith.constant 0.000000e+00 : f32
      %429 = vector.broadcast %cst_132 : f32 to vector<8x32xf32>
      %c0_133 = arith.constant 0 : index
      %c0_134 = arith.constant 0 : index
      %430 = vector.load %arg13[%c0_133, %c0_134] : memref<8x32xf32, #tpu.memory_space<vmem>>, vector<8x32xf32>
      tpu.vector_store %arg13[%c0_133, %c0_134], %429 {strides = array<i32>} : memref<8x32xf32, #tpu.memory_space<vmem>>, vector<8x32xf32>,
      %cst_135 = arith.constant 0.000000e+00 : f32
      %431 = vector.broadcast %cst_135 : f32 to vector<8x32xf32>
      %c0_136 = arith.constant 0 : index
      %c0_137 = arith.constant 0 : index
      %432 = vector.load %arg14[%c0_136, %c0_137] : memref<8x32xf32, #tpu.memory_space<vmem>>, vector<8x32xf32>
      tpu.vector_store %arg14[%c0_136, %c0_137], %431 {strides = array<i32>} : memref<8x32xf32, #tpu.memory_space<vmem>>, vector<8x32xf32>,
    } else {
    }
    %c0 = arith.constant 0 : index
    %c0_1 = arith.constant 0 : index
    %3 = vector.load %arg1[%c0, %c0_1] : memref<64x64xf32, #tpu.memory_space<vmem>>, vector<64x64xf32>
    %c0_2 = arith.constant 0 : index
    %c0_3 = arith.constant 0 : index
    %4 = vector.load %arg3[%c0_2, %c0_3] : memref<64x128xf32, #tpu.memory_space<vmem>>, vector<64x128xf32>
    %cst = arith.constant dense<0.000000e+00> : vector<64x128xf32>
    %5 = tpu.matmul %3, %4, %cst {dimension_numbers = #tpu.dot_dimension_numbers<[1], [0], [0], [1], [0, 0, 1, 1], [], []>} : vector<64x64xf32>, vector<64x128xf32>, vector<64x128xf32> -> vector<64x128xf32>
    %c0_4 = arith.constant 0 : index
    %c0_5 = arith.constant 0 : index
    %6 = vector.load %arg5[%c0_4, %c0_5] : memref<1x128xf32, #tpu.memory_space<vmem>>, vector<1x128xf32>
    %7 = vector.broadcast %6 : vector<1x128xf32> to vector<64x128xf32>
    %8 = arith.addf %5, %7 : vector<64x128xf32>
    %c0_6 = arith.constant 0 : index
    %c0_7 = arith.constant 0 : index
    %9 = vector.load %arg15[%c0_6, %c0_7] : memref<64x128xf32, #tpu.memory_space<vmem>>, vector<64x128xf32>
    tpu.vector_store %arg15[%c0_6, %c0_7], %8 {strides = array<i32>} : memref<64x128xf32, #tpu.memory_space<vmem>>, vector<64x128xf32>,
    %c0_8 = arith.constant 0 : index
    %c0_9 = arith.constant 0 : index
    %10 = vector.load %arg2[%c0_8, %c0_9] : memref<64x64xf32, #tpu.memory_space<vmem>>, vector<64x64xf32>
    %c0_10 = arith.constant 0 : index
    %c0_11 = arith.constant 0 : index
    %11 = vector.load %arg6[%c0_10, %c0_11] : memref<64x128xf32, #tpu.memory_space<vmem>>, vector<64x128xf32>
    %cst_12 = arith.constant dense<0.000000e+00> : vector<64x128xf32>
    %12 = tpu.matmul %10, %11, %cst_12 {dimension_numbers = #tpu.dot_dimension_numbers<[1], [0], [0], [1], [0, 0, 1, 1], [], []>} : vector<64x64xf32>, vector<64x128xf32>, vector<64x128xf32> -> vector<64x128xf32>
    %c0_13 = arith.constant 0 : index
    %c0_14 = arith.constant 0 : index
    %13 = vector.load %arg8[%c0_13, %c0_14] : memref<1x128xf32, #tpu.memory_space<vmem>>, vector<1x128xf32>
    %14 = vector.broadcast %13 : vector<1x128xf32> to vector<64x128xf32>
    %15 = arith.addf %12, %14 : vector<64x128xf32>
    %c0_15 = arith.constant 0 : index
    %c0_16 = arith.constant 0 : index
    %16 = vector.load %arg16[%c0_15, %c0_16] : memref<64x128xf32, #tpu.memory_space<vmem>>, vector<64x128xf32>
    tpu.vector_store %arg16[%c0_15, %c0_16], %15 {strides = array<i32>} : memref<64x128xf32, #tpu.memory_space<vmem>>, vector<64x128xf32>,
    %17 = tpu.iota {dimensions = array<i32: 1>} : vector<8x128xi32>
    %c64_i32 = arith.constant 64 : i32
    %18 = vector.broadcast %c64_i32 : i32 to vector<8x128xi32>
    %19 = arith.cmpi sge, %17, %18 : vector<8x128xi32>
    %c96_i32 = arith.constant 96 : i32
    %20 = vector.broadcast %c96_i32 : i32 to vector<8x128xi32>
    %21 = arith.cmpi slt, %17, %20 : vector<8x128xi32>
    %22 = arith.andi %19, %21 : vector<8x128xi1>
    %c0_17 = arith.constant 0 : index
    %c0_18 = arith.constant 0 : index
    %23 = vector.load %arg4[%c0_17, %c0_18] : memref<32x128xf32, #tpu.memory_space<vmem>>, vector<32x128xf32>
    %c0_19 = arith.constant 0 : index
    %c0_20 = arith.constant 0 : index
    %24 = vector.load %arg7[%c0_19, %c0_20] : memref<32x128xf32, #tpu.memory_space<vmem>>, vector<32x128xf32>
    %c0_21 = arith.constant 0 : index
    %c0_22 = arith.constant 0 : index
    %25 = vector.load %arg11[%c0_21, %c0_22] : memref<8x32xf32, #tpu.memory_space<vmem>>, vector<8x32xf32>
    %c0_23 = arith.constant 0 : index
    %c0_24 = arith.constant 0 : index
    %26 = vector.load %arg12[%c0_23, %c0_24] : memref<8x32xf32, #tpu.memory_space<vmem>>, vector<8x32xf32>
    %c0_25 = arith.constant 0 : index
    %c0_26 = arith.constant 0 : index
    %27 = vector.load %arg13[%c0_25, %c0_26] : memref<8x32xf32, #tpu.memory_space<vmem>>, vector<8x32xf32>
    %c0_27 = arith.constant 0 : index
    %c0_28 = arith.constant 0 : index
    %28 = vector.load %arg14[%c0_27, %c0_28] : memref<8x32xf32, #tpu.memory_space<vmem>>, vector<8x32xf32>
    %c0_i32_29 = arith.constant 0 : i32
    %c8_i32 = arith.constant 8 : i32
    %29 = arith.muli %c0_i32_29, %c8_i32 : i32
    %30 = tpu.assume_multiple %29, 8 : i32
    %31 = arith.index_cast %30 : i32 to index
    %c0_30 = arith.constant 0 : index
    %32 = vector.load %arg15[%31, %c0_30] : memref<64x128xf32, #tpu.memory_space<vmem>>, vector<8x128xf32>
    %cst_31 = arith.constant dense<0.000000e+00> : vector<8x128xf32>
    %33 = tpu.matmul %25, %23, %cst_31 {dimension_numbers = #tpu.dot_dimension_numbers<[1], [0], [0], [1], [0, 0, 1, 1], [], []>} : vector<8x32xf32>, vector<32x128xf32>, vector<8x128xf32> -> vector<8x128xf32>
    %34 = arith.addf %32, %33 : vector<8x128xf32>
    %35 = math.tanh %34 : vector<8x128xf32>
    %36 = arith.negf %34 : vector<8x128xf32>
    %37 = math.exp %36 : vector<8x128xf32>
    %cst_32 = arith.constant 1.000000e+00 : f32
    %38 = vector.broadcast %cst_32 : f32 to vector<8x128xf32>
    %39 = arith.addf %38, %37 : vector<8x128xf32>
    %40 = arith.divf %38, %39 : vector<8x128xf32>
    %41 = arith.select %22, %35, %40 : vector<8x128xi1>, vector<8x128xf32>
    %42 = vector.extract_strided_slice %41 {offsets = [0, 0], sizes = [8, 32], strides = [1, 1]} : vector<8x128xf32> to vector<8x32xf32>
    %43 = vector.extract_strided_slice %41 {offsets = [0, 32], sizes = [8, 32], strides = [1, 1]} : vector<8x128xf32> to vector<8x32xf32>
    %44 = vector.extract_strided_slice %41 {offsets = [0, 64], sizes = [8, 32], strides = [1, 1]} : vector<8x128xf32> to vector<8x32xf32>
    %45 = vector.extract_strided_slice %41 {offsets = [0, 96], sizes = [8, 32], strides = [1, 1]} : vector<8x128xf32> to vector<8x32xf32>
    %46 = arith.mulf %43, %26 : vector<8x32xf32>
    %47 = arith.mulf %42, %44 : vector<8x32xf32>
    %48 = arith.addf %46, %47 : vector<8x32xf32>
    %49 = math.tanh %48 : vector<8x32xf32>
    %50 = arith.mulf %45, %49 : vector<8x32xf32>
    %51 = arith.index_cast %30 : i32 to index
    %c0_33 = arith.constant 0 : index
    %52 = vector.load %arg9[%51, %c0_33] : memref<64x32xf32, #tpu.memory_space<vmem>>, vector<8x32xf32>
    tpu.vector_store %arg9[%51, %c0_33], %50 {strides = array<i32>} : memref<64x32xf32, #tpu.memory_space<vmem>>, vector<8x32xf32>,
    %c7_i32 = arith.constant 7 : i32
    %53 = arith.subi %c7_i32, %c0_i32_29 : i32
    %c8_i32_34 = arith.constant 8 : i32
    %54 = arith.muli %53, %c8_i32_34 : i32
    %55 = tpu.assume_multiple %54, 8 : i32
    %56 = arith.index_cast %55 : i32 to index
    %c0_35 = arith.constant 0 : index
    %57 = vector.load %arg16[%56, %c0_35] : memref<64x128xf32, #tpu.memory_space<vmem>>, vector<8x128xf32>
    %cst_36 = arith.constant dense<0.000000e+00> : vector<8x128xf32>
    %58 = tpu.matmul %27, %24, %cst_36 {dimension_numbers = #tpu.dot_dimension_numbers<[1], [0], [0], [1], [0, 0, 1, 1], [], []>} : vector<8x32xf32>, vector<32x128xf32>, vector<8x128xf32> -> vector<8x128xf32>
    %59 = arith.addf %57, %58 : vector<8x128xf32>
    %60 = math.tanh %59 : vector<8x128xf32>
    %61 = arith.negf %59 : vector<8x128xf32>
    %62 = math.exp %61 : vector<8x128xf32>
    %cst_37 = arith.constant 1.000000e+00 : f32
    %63 = vector.broadcast %cst_37 : f32 to vector<8x128xf32>
    %64 = arith.addf %63, %62 : vector<8x128xf32>
    %65 = arith.divf %63, %64 : vector<8x128xf32>
    %66 = arith.select %22, %60, %65 : vector<8x128xi1>, vector<8x128xf32>
    %67 = vector.extract_strided_slice %66 {offsets = [0, 0], sizes = [8, 32], strides = [1, 1]} : vector<8x128xf32> to vector<8x32xf32>
    %68 = vector.extract_strided_slice %66 {offsets = [0, 32], sizes = [8, 32], strides = [1, 1]} : vector<8x128xf32> to vector<8x32xf32>
    %69 = vector.extract_strided_slice %66 {offsets = [0, 64], sizes = [8, 32], strides = [1, 1]} : vector<8x128xf32> to vector<8x32xf32>
    %70 = vector.extract_strided_slice %66 {offsets = [0, 96], sizes = [8, 32], strides = [1, 1]} : vector<8x128xf32> to vector<8x32xf32>
    %71 = arith.mulf %68, %28 : vector<8x32xf32>
    %72 = arith.mulf %67, %69 : vector<8x32xf32>
    %73 = arith.addf %71, %72 : vector<8x32xf32>
    %74 = math.tanh %73 : vector<8x32xf32>
    %75 = arith.mulf %70, %74 : vector<8x32xf32>
    %76 = arith.index_cast %55 : i32 to index
    %c0_38 = arith.constant 0 : index
    %77 = vector.load %arg10[%76, %c0_38] : memref<64x32xf32, #tpu.memory_space<vmem>>, vector<8x32xf32>
    tpu.vector_store %arg10[%76, %c0_38], %75 {strides = array<i32>} : memref<64x32xf32, #tpu.memory_space<vmem>>, vector<8x32xf32>,
    %c1_i32 = arith.constant 1 : i32
    %c8_i32_39 = arith.constant 8 : i32
    %78 = arith.muli %c1_i32, %c8_i32_39 : i32
    %79 = tpu.assume_multiple %78, 8 : i32
    %80 = arith.index_cast %79 : i32 to index
    %c0_40 = arith.constant 0 : index
    %81 = vector.load %arg15[%80, %c0_40] : memref<64x128xf32, #tpu.memory_space<vmem>>, vector<8x128xf32>
    %cst_41 = arith.constant dense<0.000000e+00> : vector<8x128xf32>
    %82 = tpu.matmul %50, %23, %cst_41 {dimension_numbers = #tpu.dot_dimension_numbers<[1], [0], [0], [1], [0, 0, 1, 1], [], []>} : vector<8x32xf32>, vector<32x128xf32>, vector<8x128xf32> -> vector<8x128xf32>
    %83 = arith.addf %81, %82 : vector<8x128xf32>
    %84 = math.tanh %83 : vector<8x128xf32>
    %85 = arith.negf %83 : vector<8x128xf32>
    %86 = math.exp %85 : vector<8x128xf32>
    %cst_42 = arith.constant 1.000000e+00 : f32
    %87 = vector.broadcast %cst_42 : f32 to vector<8x128xf32>
    %88 = arith.addf %87, %86 : vector<8x128xf32>
    %89 = arith.divf %87, %88 : vector<8x128xf32>
    %90 = arith.select %22, %84, %89 : vector<8x128xi1>, vector<8x128xf32>
    %91 = vector.extract_strided_slice %90 {offsets = [0, 0], sizes = [8, 32], strides = [1, 1]} : vector<8x128xf32> to vector<8x32xf32>
    %92 = vector.extract_strided_slice %90 {offsets = [0, 32], sizes = [8, 32], strides = [1, 1]} : vector<8x128xf32> to vector<8x32xf32>
    %93 = vector.extract_strided_slice %90 {offsets = [0, 64], sizes = [8, 32], strides = [1, 1]} : vector<8x128xf32> to vector<8x32xf32>
    %94 = vector.extract_strided_slice %90 {offsets = [0, 96], sizes = [8, 32], strides = [1, 1]} : vector<8x128xf32> to vector<8x32xf32>
    %95 = arith.mulf %92, %48 : vector<8x32xf32>
    %96 = arith.mulf %91, %93 : vector<8x32xf32>
    %97 = arith.addf %95, %96 : vector<8x32xf32>
    %98 = math.tanh %97 : vector<8x32xf32>
    %99 = arith.mulf %94, %98 : vector<8x32xf32>
    %100 = arith.index_cast %79 : i32 to index
    %c0_43 = arith.constant 0 : index
    %101 = vector.load %arg9[%100, %c0_43] : memref<64x32xf32, #tpu.memory_space<vmem>>, vector<8x32xf32>
    tpu.vector_store %arg9[%100, %c0_43], %99 {strides = array<i32>} : memref<64x32xf32, #tpu.memory_space<vmem>>, vector<8x32xf32>,
    %c7_i32_44 = arith.constant 7 : i32
    %102 = arith.subi %c7_i32_44, %c1_i32 : i32
    %c8_i32_45 = arith.constant 8 : i32
    %103 = arith.muli %102, %c8_i32_45 : i32
    %104 = tpu.assume_multiple %103, 8 : i32
    %105 = arith.index_cast %104 : i32 to index
    %c0_46 = arith.constant 0 : index
    %106 = vector.load %arg16[%105, %c0_46] : memref<64x128xf32, #tpu.memory_space<vmem>>, vector<8x128xf32>
    %cst_47 = arith.constant dense<0.000000e+00> : vector<8x128xf32>
    %107 = tpu.matmul %75, %24, %cst_47 {dimension_numbers = #tpu.dot_dimension_numbers<[1], [0], [0], [1], [0, 0, 1, 1], [], []>} : vector<8x32xf32>, vector<32x128xf32>, vector<8x128xf32> -> vector<8x128xf32>
    %108 = arith.addf %106, %107 : vector<8x128xf32>
    %109 = math.tanh %108 : vector<8x128xf32>
    %110 = arith.negf %108 : vector<8x128xf32>
    %111 = math.exp %110 : vector<8x128xf32>
    %cst_48 = arith.constant 1.000000e+00 : f32
    %112 = vector.broadcast %cst_48 : f32 to vector<8x128xf32>
    %113 = arith.addf %112, %111 : vector<8x128xf32>
    %114 = arith.divf %112, %113 : vector<8x128xf32>
    %115 = arith.select %22, %109, %114 : vector<8x128xi1>, vector<8x128xf32>
    %116 = vector.extract_strided_slice %115 {offsets = [0, 0], sizes = [8, 32], strides = [1, 1]} : vector<8x128xf32> to vector<8x32xf32>
    %117 = vector.extract_strided_slice %115 {offsets = [0, 32], sizes = [8, 32], strides = [1, 1]} : vector<8x128xf32> to vector<8x32xf32>
    %118 = vector.extract_strided_slice %115 {offsets = [0, 64], sizes = [8, 32], strides = [1, 1]} : vector<8x128xf32> to vector<8x32xf32>
    %119 = vector.extract_strided_slice %115 {offsets = [0, 96], sizes = [8, 32], strides = [1, 1]} : vector<8x128xf32> to vector<8x32xf32>
    %120 = arith.mulf %117, %73 : vector<8x32xf32>
    %121 = arith.mulf %116, %118 : vector<8x32xf32>
    %122 = arith.addf %120, %121 : vector<8x32xf32>
    %123 = math.tanh %122 : vector<8x32xf32>
    %124 = arith.mulf %119, %123 : vector<8x32xf32>
    %125 = arith.index_cast %104 : i32 to index
    %c0_49 = arith.constant 0 : index
    %126 = vector.load %arg10[%125, %c0_49] : memref<64x32xf32, #tpu.memory_space<vmem>>, vector<8x32xf32>
    tpu.vector_store %arg10[%125, %c0_49], %124 {strides = array<i32>} : memref<64x32xf32, #tpu.memory_space<vmem>>, vector<8x32xf32>,
    %c2_i32 = arith.constant 2 : i32
    %c8_i32_50 = arith.constant 8 : i32
    %127 = arith.muli %c2_i32, %c8_i32_50 : i32
    %128 = tpu.assume_multiple %127, 8 : i32
    %129 = arith.index_cast %128 : i32 to index
    %c0_51 = arith.constant 0 : index
    %130 = vector.load %arg15[%129, %c0_51] : memref<64x128xf32, #tpu.memory_space<vmem>>, vector<8x128xf32>
    %cst_52 = arith.constant dense<0.000000e+00> : vector<8x128xf32>
    %131 = tpu.matmul %99, %23, %cst_52 {dimension_numbers = #tpu.dot_dimension_numbers<[1], [0], [0], [1], [0, 0, 1, 1], [], []>} : vector<8x32xf32>, vector<32x128xf32>, vector<8x128xf32> -> vector<8x128xf32>
    %132 = arith.addf %130, %131 : vector<8x128xf32>
    %133 = math.tanh %132 : vector<8x128xf32>
    %134 = arith.negf %132 : vector<8x128xf32>
    %135 = math.exp %134 : vector<8x128xf32>
    %cst_53 = arith.constant 1.000000e+00 : f32
    %136 = vector.broadcast %cst_53 : f32 to vector<8x128xf32>
    %137 = arith.addf %136, %135 : vector<8x128xf32>
    %138 = arith.divf %136, %137 : vector<8x128xf32>
    %139 = arith.select %22, %133, %138 : vector<8x128xi1>, vector<8x128xf32>
    %140 = vector.extract_strided_slice %139 {offsets = [0, 0], sizes = [8, 32], strides = [1, 1]} : vector<8x128xf32> to vector<8x32xf32>
    %141 = vector.extract_strided_slice %139 {offsets = [0, 32], sizes = [8, 32], strides = [1, 1]} : vector<8x128xf32> to vector<8x32xf32>
    %142 = vector.extract_strided_slice %139 {offsets = [0, 64], sizes = [8, 32], strides = [1, 1]} : vector<8x128xf32> to vector<8x32xf32>
    %143 = vector.extract_strided_slice %139 {offsets = [0, 96], sizes = [8, 32], strides = [1, 1]} : vector<8x128xf32> to vector<8x32xf32>
    %144 = arith.mulf %141, %97 : vector<8x32xf32>
    %145 = arith.mulf %140, %142 : vector<8x32xf32>
    %146 = arith.addf %144, %145 : vector<8x32xf32>
    %147 = math.tanh %146 : vector<8x32xf32>
    %148 = arith.mulf %143, %147 : vector<8x32xf32>
    %149 = arith.index_cast %128 : i32 to index
    %c0_54 = arith.constant 0 : index
    %150 = vector.load %arg9[%149, %c0_54] : memref<64x32xf32, #tpu.memory_space<vmem>>, vector<8x32xf32>
    tpu.vector_store %arg9[%149, %c0_54], %148 {strides = array<i32>} : memref<64x32xf32, #tpu.memory_space<vmem>>, vector<8x32xf32>,
    %c7_i32_55 = arith.constant 7 : i32
    %151 = arith.subi %c7_i32_55, %c2_i32 : i32
    %c8_i32_56 = arith.constant 8 : i32
    %152 = arith.muli %151, %c8_i32_56 : i32
    %153 = tpu.assume_multiple %152, 8 : i32
    %154 = arith.index_cast %153 : i32 to index
    %c0_57 = arith.constant 0 : index
    %155 = vector.load %arg16[%154, %c0_57] : memref<64x128xf32, #tpu.memory_space<vmem>>, vector<8x128xf32>
    %cst_58 = arith.constant dense<0.000000e+00> : vector<8x128xf32>
    %156 = tpu.matmul %124, %24, %cst_58 {dimension_numbers = #tpu.dot_dimension_numbers<[1], [0], [0], [1], [0, 0, 1, 1], [], []>} : vector<8x32xf32>, vector<32x128xf32>, vector<8x128xf32> -> vector<8x128xf32>
    %157 = arith.addf %155, %156 : vector<8x128xf32>
    %158 = math.tanh %157 : vector<8x128xf32>
    %159 = arith.negf %157 : vector<8x128xf32>
    %160 = math.exp %159 : vector<8x128xf32>
    %cst_59 = arith.constant 1.000000e+00 : f32
    %161 = vector.broadcast %cst_59 : f32 to vector<8x128xf32>
    %162 = arith.addf %161, %160 : vector<8x128xf32>
    %163 = arith.divf %161, %162 : vector<8x128xf32>
    %164 = arith.select %22, %158, %163 : vector<8x128xi1>, vector<8x128xf32>
    %165 = vector.extract_strided_slice %164 {offsets = [0, 0], sizes = [8, 32], strides = [1, 1]} : vector<8x128xf32> to vector<8x32xf32>
    %166 = vector.extract_strided_slice %164 {offsets = [0, 32], sizes = [8, 32], strides = [1, 1]} : vector<8x128xf32> to vector<8x32xf32>
    %167 = vector.extract_strided_slice %164 {offsets = [0, 64], sizes = [8, 32], strides = [1, 1]} : vector<8x128xf32> to vector<8x32xf32>
    %168 = vector.extract_strided_slice %164 {offsets = [0, 96], sizes = [8, 32], strides = [1, 1]} : vector<8x128xf32> to vector<8x32xf32>
    %169 = arith.mulf %166, %122 : vector<8x32xf32>
    %170 = arith.mulf %165, %167 : vector<8x32xf32>
    %171 = arith.addf %169, %170 : vector<8x32xf32>
    %172 = math.tanh %171 : vector<8x32xf32>
    %173 = arith.mulf %168, %172 : vector<8x32xf32>
    %174 = arith.index_cast %153 : i32 to index
    %c0_60 = arith.constant 0 : index
    %175 = vector.load %arg10[%174, %c0_60] : memref<64x32xf32, #tpu.memory_space<vmem>>, vector<8x32xf32>
    tpu.vector_store %arg10[%174, %c0_60], %173 {strides = array<i32>} : memref<64x32xf32, #tpu.memory_space<vmem>>, vector<8x32xf32>,
    %c3_i32 = arith.constant 3 : i32
    %c8_i32_61 = arith.constant 8 : i32
    %176 = arith.muli %c3_i32, %c8_i32_61 : i32
    %177 = tpu.assume_multiple %176, 8 : i32
    %178 = arith.index_cast %177 : i32 to index
    %c0_62 = arith.constant 0 : index
    %179 = vector.load %arg15[%178, %c0_62] : memref<64x128xf32, #tpu.memory_space<vmem>>, vector<8x128xf32>
    %cst_63 = arith.constant dense<0.000000e+00> : vector<8x128xf32>
    %180 = tpu.matmul %148, %23, %cst_63 {dimension_numbers = #tpu.dot_dimension_numbers<[1], [0], [0], [1], [0, 0, 1, 1], [], []>} : vector<8x32xf32>, vector<32x128xf32>, vector<8x128xf32> -> vector<8x128xf32>
    %181 = arith.addf %179, %180 : vector<8x128xf32>
    %182 = math.tanh %181 : vector<8x128xf32>
    %183 = arith.negf %181 : vector<8x128xf32>
    %184 = math.exp %183 : vector<8x128xf32>
    %cst_64 = arith.constant 1.000000e+00 : f32
    %185 = vector.broadcast %cst_64 : f32 to vector<8x128xf32>
    %186 = arith.addf %185, %184 : vector<8x128xf32>
    %187 = arith.divf %185, %186 : vector<8x128xf32>
    %188 = arith.select %22, %182, %187 : vector<8x128xi1>, vector<8x128xf32>
    %189 = vector.extract_strided_slice %188 {offsets = [0, 0], sizes = [8, 32], strides = [1, 1]} : vector<8x128xf32> to vector<8x32xf32>
    %190 = vector.extract_strided_slice %188 {offsets = [0, 32], sizes = [8, 32], strides = [1, 1]} : vector<8x128xf32> to vector<8x32xf32>
    %191 = vector.extract_strided_slice %188 {offsets = [0, 64], sizes = [8, 32], strides = [1, 1]} : vector<8x128xf32> to vector<8x32xf32>
    %192 = vector.extract_strided_slice %188 {offsets = [0, 96], sizes = [8, 32], strides = [1, 1]} : vector<8x128xf32> to vector<8x32xf32>
    %193 = arith.mulf %190, %146 : vector<8x32xf32>
    %194 = arith.mulf %189, %191 : vector<8x32xf32>
    %195 = arith.addf %193, %194 : vector<8x32xf32>
    %196 = math.tanh %195 : vector<8x32xf32>
    %197 = arith.mulf %192, %196 : vector<8x32xf32>
    %198 = arith.index_cast %177 : i32 to index
    %c0_65 = arith.constant 0 : index
    %199 = vector.load %arg9[%198, %c0_65] : memref<64x32xf32, #tpu.memory_space<vmem>>, vector<8x32xf32>
    tpu.vector_store %arg9[%198, %c0_65], %197 {strides = array<i32>} : memref<64x32xf32, #tpu.memory_space<vmem>>, vector<8x32xf32>,
    %c7_i32_66 = arith.constant 7 : i32
    %200 = arith.subi %c7_i32_66, %c3_i32 : i32
    %c8_i32_67 = arith.constant 8 : i32
    %201 = arith.muli %200, %c8_i32_67 : i32
    %202 = tpu.assume_multiple %201, 8 : i32
    %203 = arith.index_cast %202 : i32 to index
    %c0_68 = arith.constant 0 : index
    %204 = vector.load %arg16[%203, %c0_68] : memref<64x128xf32, #tpu.memory_space<vmem>>, vector<8x128xf32>
    %cst_69 = arith.constant dense<0.000000e+00> : vector<8x128xf32>
    %205 = tpu.matmul %173, %24, %cst_69 {dimension_numbers = #tpu.dot_dimension_numbers<[1], [0], [0], [1], [0, 0, 1, 1], [], []>} : vector<8x32xf32>, vector<32x128xf32>, vector<8x128xf32> -> vector<8x128xf32>
    %206 = arith.addf %204, %205 : vector<8x128xf32>
    %207 = math.tanh %206 : vector<8x128xf32>
    %208 = arith.negf %206 : vector<8x128xf32>
    %209 = math.exp %208 : vector<8x128xf32>
    %cst_70 = arith.constant 1.000000e+00 : f32
    %210 = vector.broadcast %cst_70 : f32 to vector<8x128xf32>
    %211 = arith.addf %210, %209 : vector<8x128xf32>
    %212 = arith.divf %210, %211 : vector<8x128xf32>
    %213 = arith.select %22, %207, %212 : vector<8x128xi1>, vector<8x128xf32>
    %214 = vector.extract_strided_slice %213 {offsets = [0, 0], sizes = [8, 32], strides = [1, 1]} : vector<8x128xf32> to vector<8x32xf32>
    %215 = vector.extract_strided_slice %213 {offsets = [0, 32], sizes = [8, 32], strides = [1, 1]} : vector<8x128xf32> to vector<8x32xf32>
    %216 = vector.extract_strided_slice %213 {offsets = [0, 64], sizes = [8, 32], strides = [1, 1]} : vector<8x128xf32> to vector<8x32xf32>
    %217 = vector.extract_strided_slice %213 {offsets = [0, 96], sizes = [8, 32], strides = [1, 1]} : vector<8x128xf32> to vector<8x32xf32>
    %218 = arith.mulf %215, %171 : vector<8x32xf32>
    %219 = arith.mulf %214, %216 : vector<8x32xf32>
    %220 = arith.addf %218, %219 : vector<8x32xf32>
    %221 = math.tanh %220 : vector<8x32xf32>
    %222 = arith.mulf %217, %221 : vector<8x32xf32>
    %223 = arith.index_cast %202 : i32 to index
    %c0_71 = arith.constant 0 : index
    %224 = vector.load %arg10[%223, %c0_71] : memref<64x32xf32, #tpu.memory_space<vmem>>, vector<8x32xf32>
    tpu.vector_store %arg10[%223, %c0_71], %222 {strides = array<i32>} : memref<64x32xf32, #tpu.memory_space<vmem>>, vector<8x32xf32>,
    %c4_i32 = arith.constant 4 : i32
    %c8_i32_72 = arith.constant 8 : i32
    %225 = arith.muli %c4_i32, %c8_i32_72 : i32
    %226 = tpu.assume_multiple %225, 8 : i32
    %227 = arith.index_cast %226 : i32 to index
    %c0_73 = arith.constant 0 : index
    %228 = vector.load %arg15[%227, %c0_73] : memref<64x128xf32, #tpu.memory_space<vmem>>, vector<8x128xf32>
    %cst_74 = arith.constant dense<0.000000e+00> : vector<8x128xf32>
    %229 = tpu.matmul %197, %23, %cst_74 {dimension_numbers = #tpu.dot_dimension_numbers<[1], [0], [0], [1], [0, 0, 1, 1], [], []>} : vector<8x32xf32>, vector<32x128xf32>, vector<8x128xf32> -> vector<8x128xf32>
    %230 = arith.addf %228, %229 : vector<8x128xf32>
    %231 = math.tanh %230 : vector<8x128xf32>
    %232 = arith.negf %230 : vector<8x128xf32>
    %233 = math.exp %232 : vector<8x128xf32>
    %cst_75 = arith.constant 1.000000e+00 : f32
    %234 = vector.broadcast %cst_75 : f32 to vector<8x128xf32>
    %235 = arith.addf %234, %233 : vector<8x128xf32>
    %236 = arith.divf %234, %235 : vector<8x128xf32>
    %237 = arith.select %22, %231, %236 : vector<8x128xi1>, vector<8x128xf32>
    %238 = vector.extract_strided_slice %237 {offsets = [0, 0], sizes = [8, 32], strides = [1, 1]} : vector<8x128xf32> to vector<8x32xf32>
    %239 = vector.extract_strided_slice %237 {offsets = [0, 32], sizes = [8, 32], strides = [1, 1]} : vector<8x128xf32> to vector<8x32xf32>
    %240 = vector.extract_strided_slice %237 {offsets = [0, 64], sizes = [8, 32], strides = [1, 1]} : vector<8x128xf32> to vector<8x32xf32>
    %241 = vector.extract_strided_slice %237 {offsets = [0, 96], sizes = [8, 32], strides = [1, 1]} : vector<8x128xf32> to vector<8x32xf32>
    %242 = arith.mulf %239, %195 : vector<8x32xf32>
    %243 = arith.mulf %238, %240 : vector<8x32xf32>
    %244 = arith.addf %242, %243 : vector<8x32xf32>
    %245 = math.tanh %244 : vector<8x32xf32>
    %246 = arith.mulf %241, %245 : vector<8x32xf32>
    %247 = arith.index_cast %226 : i32 to index
    %c0_76 = arith.constant 0 : index
    %248 = vector.load %arg9[%247, %c0_76] : memref<64x32xf32, #tpu.memory_space<vmem>>, vector<8x32xf32>
    tpu.vector_store %arg9[%247, %c0_76], %246 {strides = array<i32>} : memref<64x32xf32, #tpu.memory_space<vmem>>, vector<8x32xf32>,
    %c7_i32_77 = arith.constant 7 : i32
    %249 = arith.subi %c7_i32_77, %c4_i32 : i32
    %c8_i32_78 = arith.constant 8 : i32
    %250 = arith.muli %249, %c8_i32_78 : i32
    %251 = tpu.assume_multiple %250, 8 : i32
    %252 = arith.index_cast %251 : i32 to index
    %c0_79 = arith.constant 0 : index
    %253 = vector.load %arg16[%252, %c0_79] : memref<64x128xf32, #tpu.memory_space<vmem>>, vector<8x128xf32>
    %cst_80 = arith.constant dense<0.000000e+00> : vector<8x128xf32>
    %254 = tpu.matmul %222, %24, %cst_80 {dimension_numbers = #tpu.dot_dimension_numbers<[1], [0], [0], [1], [0, 0, 1, 1], [], []>} : vector<8x32xf32>, vector<32x128xf32>, vector<8x128xf32> -> vector<8x128xf32>
    %255 = arith.addf %253, %254 : vector<8x128xf32>
    %256 = math.tanh %255 : vector<8x128xf32>
    %257 = arith.negf %255 : vector<8x128xf32>
    %258 = math.exp %257 : vector<8x128xf32>
    %cst_81 = arith.constant 1.000000e+00 : f32
    %259 = vector.broadcast %cst_81 : f32 to vector<8x128xf32>
    %260 = arith.addf %259, %258 : vector<8x128xf32>
    %261 = arith.divf %259, %260 : vector<8x128xf32>
    %262 = arith.select %22, %256, %261 : vector<8x128xi1>, vector<8x128xf32>
    %263 = vector.extract_strided_slice %262 {offsets = [0, 0], sizes = [8, 32], strides = [1, 1]} : vector<8x128xf32> to vector<8x32xf32>
    %264 = vector.extract_strided_slice %262 {offsets = [0, 32], sizes = [8, 32], strides = [1, 1]} : vector<8x128xf32> to vector<8x32xf32>
    %265 = vector.extract_strided_slice %262 {offsets = [0, 64], sizes = [8, 32], strides = [1, 1]} : vector<8x128xf32> to vector<8x32xf32>
    %266 = vector.extract_strided_slice %262 {offsets = [0, 96], sizes = [8, 32], strides = [1, 1]} : vector<8x128xf32> to vector<8x32xf32>
    %267 = arith.mulf %264, %220 : vector<8x32xf32>
    %268 = arith.mulf %263, %265 : vector<8x32xf32>
    %269 = arith.addf %267, %268 : vector<8x32xf32>
    %270 = math.tanh %269 : vector<8x32xf32>
    %271 = arith.mulf %266, %270 : vector<8x32xf32>
    %272 = arith.index_cast %251 : i32 to index
    %c0_82 = arith.constant 0 : index
    %273 = vector.load %arg10[%272, %c0_82] : memref<64x32xf32, #tpu.memory_space<vmem>>, vector<8x32xf32>
    tpu.vector_store %arg10[%272, %c0_82], %271 {strides = array<i32>} : memref<64x32xf32, #tpu.memory_space<vmem>>, vector<8x32xf32>,
    %c5_i32 = arith.constant 5 : i32
    %c8_i32_83 = arith.constant 8 : i32
    %274 = arith.muli %c5_i32, %c8_i32_83 : i32
    %275 = tpu.assume_multiple %274, 8 : i32
    %276 = arith.index_cast %275 : i32 to index
    %c0_84 = arith.constant 0 : index
    %277 = vector.load %arg15[%276, %c0_84] : memref<64x128xf32, #tpu.memory_space<vmem>>, vector<8x128xf32>
    %cst_85 = arith.constant dense<0.000000e+00> : vector<8x128xf32>
    %278 = tpu.matmul %246, %23, %cst_85 {dimension_numbers = #tpu.dot_dimension_numbers<[1], [0], [0], [1], [0, 0, 1, 1], [], []>} : vector<8x32xf32>, vector<32x128xf32>, vector<8x128xf32> -> vector<8x128xf32>
    %279 = arith.addf %277, %278 : vector<8x128xf32>
    %280 = math.tanh %279 : vector<8x128xf32>
    %281 = arith.negf %279 : vector<8x128xf32>
    %282 = math.exp %281 : vector<8x128xf32>
    %cst_86 = arith.constant 1.000000e+00 : f32
    %283 = vector.broadcast %cst_86 : f32 to vector<8x128xf32>
    %284 = arith.addf %283, %282 : vector<8x128xf32>
    %285 = arith.divf %283, %284 : vector<8x128xf32>
    %286 = arith.select %22, %280, %285 : vector<8x128xi1>, vector<8x128xf32>
    %287 = vector.extract_strided_slice %286 {offsets = [0, 0], sizes = [8, 32], strides = [1, 1]} : vector<8x128xf32> to vector<8x32xf32>
    %288 = vector.extract_strided_slice %286 {offsets = [0, 32], sizes = [8, 32], strides = [1, 1]} : vector<8x128xf32> to vector<8x32xf32>
    %289 = vector.extract_strided_slice %286 {offsets = [0, 64], sizes = [8, 32], strides = [1, 1]} : vector<8x128xf32> to vector<8x32xf32>
    %290 = vector.extract_strided_slice %286 {offsets = [0, 96], sizes = [8, 32], strides = [1, 1]} : vector<8x128xf32> to vector<8x32xf32>
    %291 = arith.mulf %288, %244 : vector<8x32xf32>
    %292 = arith.mulf %287, %289 : vector<8x32xf32>
    %293 = arith.addf %291, %292 : vector<8x32xf32>
    %294 = math.tanh %293 : vector<8x32xf32>
    %295 = arith.mulf %290, %294 : vector<8x32xf32>
    %296 = arith.index_cast %275 : i32 to index
    %c0_87 = arith.constant 0 : index
    %297 = vector.load %arg9[%296, %c0_87] : memref<64x32xf32, #tpu.memory_space<vmem>>, vector<8x32xf32>
    tpu.vector_store %arg9[%296, %c0_87], %295 {strides = array<i32>} : memref<64x32xf32, #tpu.memory_space<vmem>>, vector<8x32xf32>,
    %c7_i32_88 = arith.constant 7 : i32
    %298 = arith.subi %c7_i32_88, %c5_i32 : i32
    %c8_i32_89 = arith.constant 8 : i32
    %299 = arith.muli %298, %c8_i32_89 : i32
    %300 = tpu.assume_multiple %299, 8 : i32
    %301 = arith.index_cast %300 : i32 to index
    %c0_90 = arith.constant 0 : index
    %302 = vector.load %arg16[%301, %c0_90] : memref<64x128xf32, #tpu.memory_space<vmem>>, vector<8x128xf32>
    %cst_91 = arith.constant dense<0.000000e+00> : vector<8x128xf32>
    %303 = tpu.matmul %271, %24, %cst_91 {dimension_numbers = #tpu.dot_dimension_numbers<[1], [0], [0], [1], [0, 0, 1, 1], [], []>} : vector<8x32xf32>, vector<32x128xf32>, vector<8x128xf32> -> vector<8x128xf32>
    %304 = arith.addf %302, %303 : vector<8x128xf32>
    %305 = math.tanh %304 : vector<8x128xf32>
    %306 = arith.negf %304 : vector<8x128xf32>
    %307 = math.exp %306 : vector<8x128xf32>
    %cst_92 = arith.constant 1.000000e+00 : f32
    %308 = vector.broadcast %cst_92 : f32 to vector<8x128xf32>
    %309 = arith.addf %308, %307 : vector<8x128xf32>
    %310 = arith.divf %308, %309 : vector<8x128xf32>
    %311 = arith.select %22, %305, %310 : vector<8x128xi1>, vector<8x128xf32>
    %312 = vector.extract_strided_slice %311 {offsets = [0, 0], sizes = [8, 32], strides = [1, 1]} : vector<8x128xf32> to vector<8x32xf32>
    %313 = vector.extract_strided_slice %311 {offsets = [0, 32], sizes = [8, 32], strides = [1, 1]} : vector<8x128xf32> to vector<8x32xf32>
    %314 = vector.extract_strided_slice %311 {offsets = [0, 64], sizes = [8, 32], strides = [1, 1]} : vector<8x128xf32> to vector<8x32xf32>
    %315 = vector.extract_strided_slice %311 {offsets = [0, 96], sizes = [8, 32], strides = [1, 1]} : vector<8x128xf32> to vector<8x32xf32>
    %316 = arith.mulf %313, %269 : vector<8x32xf32>
    %317 = arith.mulf %312, %314 : vector<8x32xf32>
    %318 = arith.addf %316, %317 : vector<8x32xf32>
    %319 = math.tanh %318 : vector<8x32xf32>
    %320 = arith.mulf %315, %319 : vector<8x32xf32>
    %321 = arith.index_cast %300 : i32 to index
    %c0_93 = arith.constant 0 : index
    %322 = vector.load %arg10[%321, %c0_93] : memref<64x32xf32, #tpu.memory_space<vmem>>, vector<8x32xf32>
    tpu.vector_store %arg10[%321, %c0_93], %320 {strides = array<i32>} : memref<64x32xf32, #tpu.memory_space<vmem>>, vector<8x32xf32>,
    %c6_i32 = arith.constant 6 : i32
    %c8_i32_94 = arith.constant 8 : i32
    %323 = arith.muli %c6_i32, %c8_i32_94 : i32
    %324 = tpu.assume_multiple %323, 8 : i32
    %325 = arith.index_cast %324 : i32 to index
    %c0_95 = arith.constant 0 : index
    %326 = vector.load %arg15[%325, %c0_95] : memref<64x128xf32, #tpu.memory_space<vmem>>, vector<8x128xf32>
    %cst_96 = arith.constant dense<0.000000e+00> : vector<8x128xf32>
    %327 = tpu.matmul %295, %23, %cst_96 {dimension_numbers = #tpu.dot_dimension_numbers<[1], [0], [0], [1], [0, 0, 1, 1], [], []>} : vector<8x32xf32>, vector<32x128xf32>, vector<8x128xf32> -> vector<8x128xf32>
    %328 = arith.addf %326, %327 : vector<8x128xf32>
    %329 = math.tanh %328 : vector<8x128xf32>
    %330 = arith.negf %328 : vector<8x128xf32>
    %331 = math.exp %330 : vector<8x128xf32>
    %cst_97 = arith.constant 1.000000e+00 : f32
    %332 = vector.broadcast %cst_97 : f32 to vector<8x128xf32>
    %333 = arith.addf %332, %331 : vector<8x128xf32>
    %334 = arith.divf %332, %333 : vector<8x128xf32>
    %335 = arith.select %22, %329, %334 : vector<8x128xi1>, vector<8x128xf32>
    %336 = vector.extract_strided_slice %335 {offsets = [0, 0], sizes = [8, 32], strides = [1, 1]} : vector<8x128xf32> to vector<8x32xf32>
    %337 = vector.extract_strided_slice %335 {offsets = [0, 32], sizes = [8, 32], strides = [1, 1]} : vector<8x128xf32> to vector<8x32xf32>
    %338 = vector.extract_strided_slice %335 {offsets = [0, 64], sizes = [8, 32], strides = [1, 1]} : vector<8x128xf32> to vector<8x32xf32>
    %339 = vector.extract_strided_slice %335 {offsets = [0, 96], sizes = [8, 32], strides = [1, 1]} : vector<8x128xf32> to vector<8x32xf32>
    %340 = arith.mulf %337, %293 : vector<8x32xf32>
    %341 = arith.mulf %336, %338 : vector<8x32xf32>
    %342 = arith.addf %340, %341 : vector<8x32xf32>
    %343 = math.tanh %342 : vector<8x32xf32>
    %344 = arith.mulf %339, %343 : vector<8x32xf32>
    %345 = arith.index_cast %324 : i32 to index
    %c0_98 = arith.constant 0 : index
    %346 = vector.load %arg9[%345, %c0_98] : memref<64x32xf32, #tpu.memory_space<vmem>>, vector<8x32xf32>
    tpu.vector_store %arg9[%345, %c0_98], %344 {strides = array<i32>} : memref<64x32xf32, #tpu.memory_space<vmem>>, vector<8x32xf32>,
    %c7_i32_99 = arith.constant 7 : i32
    %347 = arith.subi %c7_i32_99, %c6_i32 : i32
    %c8_i32_100 = arith.constant 8 : i32
    %348 = arith.muli %347, %c8_i32_100 : i32
    %349 = tpu.assume_multiple %348, 8 : i32
    %350 = arith.index_cast %349 : i32 to index
    %c0_101 = arith.constant 0 : index
    %351 = vector.load %arg16[%350, %c0_101] : memref<64x128xf32, #tpu.memory_space<vmem>>, vector<8x128xf32>
    %cst_102 = arith.constant dense<0.000000e+00> : vector<8x128xf32>
    %352 = tpu.matmul %320, %24, %cst_102 {dimension_numbers = #tpu.dot_dimension_numbers<[1], [0], [0], [1], [0, 0, 1, 1], [], []>} : vector<8x32xf32>, vector<32x128xf32>, vector<8x128xf32> -> vector<8x128xf32>
    %353 = arith.addf %351, %352 : vector<8x128xf32>
    %354 = math.tanh %353 : vector<8x128xf32>
    %355 = arith.negf %353 : vector<8x128xf32>
    %356 = math.exp %355 : vector<8x128xf32>
    %cst_103 = arith.constant 1.000000e+00 : f32
    %357 = vector.broadcast %cst_103 : f32 to vector<8x128xf32>
    %358 = arith.addf %357, %356 : vector<8x128xf32>
    %359 = arith.divf %357, %358 : vector<8x128xf32>
    %360 = arith.select %22, %354, %359 : vector<8x128xi1>, vector<8x128xf32>
    %361 = vector.extract_strided_slice %360 {offsets = [0, 0], sizes = [8, 32], strides = [1, 1]} : vector<8x128xf32> to vector<8x32xf32>
    %362 = vector.extract_strided_slice %360 {offsets = [0, 32], sizes = [8, 32], strides = [1, 1]} : vector<8x128xf32> to vector<8x32xf32>
    %363 = vector.extract_strided_slice %360 {offsets = [0, 64], sizes = [8, 32], strides = [1, 1]} : vector<8x128xf32> to vector<8x32xf32>
    %364 = vector.extract_strided_slice %360 {offsets = [0, 96], sizes = [8, 32], strides = [1, 1]} : vector<8x128xf32> to vector<8x32xf32>
    %365 = arith.mulf %362, %318 : vector<8x32xf32>
    %366 = arith.mulf %361, %363 : vector<8x32xf32>
    %367 = arith.addf %365, %366 : vector<8x32xf32>
    %368 = math.tanh %367 : vector<8x32xf32>
    %369 = arith.mulf %364, %368 : vector<8x32xf32>
    %370 = arith.index_cast %349 : i32 to index
    %c0_104 = arith.constant 0 : index
    %371 = vector.load %arg10[%370, %c0_104] : memref<64x32xf32, #tpu.memory_space<vmem>>, vector<8x32xf32>
    tpu.vector_store %arg10[%370, %c0_104], %369 {strides = array<i32>} : memref<64x32xf32, #tpu.memory_space<vmem>>, vector<8x32xf32>,
    %c7_i32_105 = arith.constant 7 : i32
    %c8_i32_106 = arith.constant 8 : i32
    %372 = arith.muli %c7_i32_105, %c8_i32_106 : i32
    %373 = tpu.assume_multiple %372, 8 : i32
    %374 = arith.index_cast %373 : i32 to index
    %c0_107 = arith.constant 0 : index
    %375 = vector.load %arg15[%374, %c0_107] : memref<64x128xf32, #tpu.memory_space<vmem>>, vector<8x128xf32>
    %cst_108 = arith.constant dense<0.000000e+00> : vector<8x128xf32>
    %376 = tpu.matmul %344, %23, %cst_108 {dimension_numbers = #tpu.dot_dimension_numbers<[1], [0], [0], [1], [0, 0, 1, 1], [], []>} : vector<8x32xf32>, vector<32x128xf32>, vector<8x128xf32> -> vector<8x128xf32>
    %377 = arith.addf %375, %376 : vector<8x128xf32>
    %378 = math.tanh %377 : vector<8x128xf32>
    %379 = arith.negf %377 : vector<8x128xf32>
    %380 = math.exp %379 : vector<8x128xf32>
    %cst_109 = arith.constant 1.000000e+00 : f32
    %381 = vector.broadcast %cst_109 : f32 to vector<8x128xf32>
    %382 = arith.addf %381, %380 : vector<8x128xf32>
    %383 = arith.divf %381, %382 : vector<8x128xf32>
    %384 = arith.select %22, %378, %383 : vector<8x128xi1>, vector<8x128xf32>
    %385 = vector.extract_strided_slice %384 {offsets = [0, 0], sizes = [8, 32], strides = [1, 1]} : vector<8x128xf32> to vector<8x32xf32>
    %386 = vector.extract_strided_slice %384 {offsets = [0, 32], sizes = [8, 32], strides = [1, 1]} : vector<8x128xf32> to vector<8x32xf32>
    %387 = vector.extract_strided_slice %384 {offsets = [0, 64], sizes = [8, 32], strides = [1, 1]} : vector<8x128xf32> to vector<8x32xf32>
    %388 = vector.extract_strided_slice %384 {offsets = [0, 96], sizes = [8, 32], strides = [1, 1]} : vector<8x128xf32> to vector<8x32xf32>
    %389 = arith.mulf %386, %342 : vector<8x32xf32>
    %390 = arith.mulf %385, %387 : vector<8x32xf32>
    %391 = arith.addf %389, %390 : vector<8x32xf32>
    %392 = math.tanh %391 : vector<8x32xf32>
    %393 = arith.mulf %388, %392 : vector<8x32xf32>
    %394 = arith.index_cast %373 : i32 to index
    %c0_110 = arith.constant 0 : index
    %395 = vector.load %arg9[%394, %c0_110] : memref<64x32xf32, #tpu.memory_space<vmem>>, vector<8x32xf32>
    tpu.vector_store %arg9[%394, %c0_110], %393 {strides = array<i32>} : memref<64x32xf32, #tpu.memory_space<vmem>>, vector<8x32xf32>,
    %c7_i32_111 = arith.constant 7 : i32
    %396 = arith.subi %c7_i32_111, %c7_i32_105 : i32
    %c8_i32_112 = arith.constant 8 : i32
    %397 = arith.muli %396, %c8_i32_112 : i32
    %398 = tpu.assume_multiple %397, 8 : i32
    %399 = arith.index_cast %398 : i32 to index
    %c0_113 = arith.constant 0 : index
    %400 = vector.load %arg16[%399, %c0_113] : memref<64x128xf32, #tpu.memory_space<vmem>>, vector<8x128xf32>
    %cst_114 = arith.constant dense<0.000000e+00> : vector<8x128xf32>
    %401 = tpu.matmul %369, %24, %cst_114 {dimension_numbers = #tpu.dot_dimension_numbers<[1], [0], [0], [1], [0, 0, 1, 1], [], []>} : vector<8x32xf32>, vector<32x128xf32>, vector<8x128xf32> -> vector<8x128xf32>
    %402 = arith.addf %400, %401 : vector<8x128xf32>
    %403 = math.tanh %402 : vector<8x128xf32>
    %404 = arith.negf %402 : vector<8x128xf32>
    %405 = math.exp %404 : vector<8x128xf32>
    %cst_115 = arith.constant 1.000000e+00 : f32
    %406 = vector.broadcast %cst_115 : f32 to vector<8x128xf32>
    %407 = arith.addf %406, %405 : vector<8x128xf32>
    %408 = arith.divf %406, %407 : vector<8x128xf32>
    %409 = arith.select %22, %403, %408 : vector<8x128xi1>, vector<8x128xf32>
    %410 = vector.extract_strided_slice %409 {offsets = [0, 0], sizes = [8, 32], strides = [1, 1]} : vector<8x128xf32> to vector<8x32xf32>
    %411 = vector.extract_strided_slice %409 {offsets = [0, 32], sizes = [8, 32], strides = [1, 1]} : vector<8x128xf32> to vector<8x32xf32>
    %412 = vector.extract_strided_slice %409 {offsets = [0, 64], sizes = [8, 32], strides = [1, 1]} : vector<8x128xf32> to vector<8x32xf32>
    %413 = vector.extract_strided_slice %409 {offsets = [0, 96], sizes = [8, 32], strides = [1, 1]} : vector<8x128xf32> to vector<8x32xf32>
    %414 = arith.mulf %411, %367 : vector<8x32xf32>
    %415 = arith.mulf %410, %412 : vector<8x32xf32>
    %416 = arith.addf %414, %415 : vector<8x32xf32>
    %417 = math.tanh %416 : vector<8x32xf32>
    %418 = arith.mulf %413, %417 : vector<8x32xf32>
    %419 = arith.index_cast %398 : i32 to index
    %c0_116 = arith.constant 0 : index
    %420 = vector.load %arg10[%419, %c0_116] : memref<64x32xf32, #tpu.memory_space<vmem>>, vector<8x32xf32>
    tpu.vector_store %arg10[%419, %c0_116], %418 {strides = array<i32>} : memref<64x32xf32, #tpu.memory_space<vmem>>, vector<8x32xf32>,
    %c8_i32_117 = arith.constant 8 : i32
    %c0_118 = arith.constant 0 : index
    %c0_119 = arith.constant 0 : index
    %421 = vector.load %arg11[%c0_118, %c0_119] : memref<8x32xf32, #tpu.memory_space<vmem>>, vector<8x32xf32>
    tpu.vector_store %arg11[%c0_118, %c0_119], %393 {strides = array<i32>} : memref<8x32xf32, #tpu.memory_space<vmem>>, vector<8x32xf32>,
    %c0_120 = arith.constant 0 : index
    %c0_121 = arith.constant 0 : index
    %422 = vector.load %arg12[%c0_120, %c0_121] : memref<8x32xf32, #tpu.memory_space<vmem>>, vector<8x32xf32>
    tpu.vector_store %arg12[%c0_120, %c0_121], %391 {strides = array<i32>} : memref<8x32xf32, #tpu.memory_space<vmem>>, vector<8x32xf32>,
    %c0_122 = arith.constant 0 : index
    %c0_123 = arith.constant 0 : index
    %423 = vector.load %arg13[%c0_122, %c0_123] : memref<8x32xf32, #tpu.memory_space<vmem>>, vector<8x32xf32>
    tpu.vector_store %arg13[%c0_122, %c0_123], %418 {strides = array<i32>} : memref<8x32xf32, #tpu.memory_space<vmem>>, vector<8x32xf32>,
    %c0_124 = arith.constant 0 : index
    %c0_125 = arith.constant 0 : index
    %424 = vector.load %arg14[%c0_124, %c0_125] : memref<8x32xf32, #tpu.memory_space<vmem>>, vector<8x32xf32>
    tpu.vector_store %arg14[%c0_124, %c0_125], %416 {strides = array<i32>} : memref<8x32xf32, #tpu.memory_space<vmem>>, vector<8x32xf32>,
    return
  }
  func.func @transform_0(%arg0: i32) -> (i32, i32) {
    %c0_i32 = arith.constant 0 : i32
    %c0_i32_0 = arith.constant 0 : i32
    return %arg0, %c0_i32 : i32, i32
  }
  func.func @transform_1(%arg0: i32) -> (i32, i32) {
    %c0_i32 = arith.constant 0 : i32
    %0 = arith.subi %c0_i32, %arg0 : i32
    %c0_i32_0 = arith.constant 0 : i32
    %c0_i32_1 = arith.constant 0 : i32
    return %0, %c0_i32_0 : i32, i32
  }
  func.func @transform_2(%arg0: i32) -> (i32, i32) {
    %c0_i32 = arith.constant 0 : i32
    %c0_i32_0 = arith.constant 0 : i32
    %c0_i32_1 = arith.constant 0 : i32
    return %c0_i32, %c0_i32_0 : i32, i32
  }
  func.func @transform_3(%arg0: i32) -> (i32, i32) {
    %c0_i32 = arith.constant 0 : i32
    %c0_i32_0 = arith.constant 0 : i32
    %c0_i32_1 = arith.constant 0 : i32
    return %c0_i32, %c0_i32_0 : i32, i32
  }
  func.func @transform_4(%arg0: i32) -> (i32, i32) {
    %c0_i32 = arith.constant 0 : i32
    %c0_i32_0 = arith.constant 0 : i32
    %c0_i32_1 = arith.constant 0 : i32
    return %c0_i32, %c0_i32_0 : i32, i32
  }
  func.func @transform_5(%arg0: i32) -> (i32, i32) {
    %c0_i32 = arith.constant 0 : i32
    %c0_i32_0 = arith.constant 0 : i32
    %c0_i32_1 = arith.constant 0 : i32
    return %c0_i32, %c0_i32_0 : i32, i32
  }
  func.func @transform_6(%arg0: i32) -> (i32, i32) {
    %c0_i32 = arith.constant 0 : i32
    %c0_i32_0 = arith.constant 0 : i32
    %c0_i32_1 = arith.constant 0 : i32
    return %c0_i32, %c0_i32_0 : i32, i32
  }
  func.func @transform_7(%arg0: i32) -> (i32, i32) {
    %c0_i32 = arith.constant 0 : i32
    %c0_i32_0 = arith.constant 0 : i32
    %c0_i32_1 = arith.constant 0 : i32
    return %c0_i32, %c0_i32_0 : i32, i32
  }
  func.func @transform_8(%arg0: i32) -> (i32, i32) {
    %c0_i32 = arith.constant 0 : i32
    %c0_i32_0 = arith.constant 0 : i32
    return %arg0, %c0_i32 : i32, i32
  }
  func.func @transform_9(%arg0: i32) -> (i32, i32) {
    %c0_i32 = arith.constant 0 : i32
    %0 = arith.subi %c0_i32, %arg0 : i32
    %c0_i32_0 = arith.constant 0 : i32
    %c0_i32_1 = arith.constant 0 : i32
    return %0, %c0_i32_0 : i32, i32
  }
}

</mosaic_0001>

<llo_original>
// kernel: lstm_forward.2
$region0: #{lstm_forward.2}
  #allocation0 [shape = 'u32[]', space=smem, size = 0x4, offset = 0x4, fixed_abs, tag = 'smem constant byte address 0x4 - core index']
  #allocation1 [shape = 'u32[144,128]{1,0:T(1,128)}', space=vmem, size = 0x12000, scoped, tag = 'internal scratch']
  #allocation2 [shape = 'f32[8,32]{1,0:T(8,128)}', space=vmem, size = 0x1000, scoped, tag = 'scratch operand']
  #allocation3 [shape = 'f32[8,32]{1,0:T(8,128)}', space=vmem, size = 0x1000, scoped, tag = 'scratch operand']
  #allocation4 [shape = 'f32[8,32]{1,0:T(8,128)}', space=vmem, size = 0x1000, scoped, tag = 'scratch operand']
  #allocation5 [shape = 'f32[8,32]{1,0:T(8,128)}', space=vmem, size = 0x1000, scoped, tag = 'scratch operand']
  #allocation6 [shape = 'f32[64,128]{1,0:T(8,128)}', space=vmem, size = 0x8000, scoped, tag = 'scratch operand']
  #allocation7 [shape = 'f32[64,128]{1,0:T(8,128)}', space=vmem, size = 0x8000, scoped, tag = 'scratch operand']
  %s0 = inlined_call_operand.vmem [shape: f32[64,16], index: 0, kind: input, shape index: {}, may-alias: {0,1}]
  %s1 = inlined_call_operand.vmem [shape: f32[64,16], index: 1, kind: input, shape index: {}, may-alias: {0,1}]
  %s2 = inlined_call_operand.vmem [shape: f32[16,128], index: 2, kind: input, shape index: {}]
  %s3 = inlined_call_operand.vmem [shape: f32[32,128], index: 3, kind: input, shape index: {}]
  %s4 = inlined_call_operand.vmem [shape: f32[1,128], index: 4, kind: input, shape index: {}]
  %s5 = inlined_call_operand.vmem [shape: f32[16,128], index: 5, kind: input, shape index: {}]
  %s6 = inlined_call_operand.vmem [shape: f32[32,128], index: 6, kind: input, shape index: {}]
  %s7 = inlined_call_operand.vmem [shape: f32[1,128], index: 7, kind: input, shape index: {}]
  %s8 = inlined_call_operand.vmem [shape: f32[64,32], index: 8, kind: output, shape index: {0}]
  %s9 = inlined_call_operand.vmem [shape: f32[64,32], index: 9, kind: output, shape index: {1}]
  %10 = xla_tuple %s8, %s9
  %s11 = sld [smem:[#allocation0]]
  $region54: #{lstm_forward.2} parent=0
    _
  %s13 = ssub.s32 1, %s11
  %s14 = scalar_select 0, %s13, %s11
  // Predicated region
  $region2: #{lstm_forward.2} parent=0 // pred_check
    _
  $region3: #{lstm_forward.2} parent=0 // pred_check_branch
    %16 = sbr.rel (0) target = $region5
  $region4: #{lstm_forward.2} parent=0 // pred_region
    _
  $region5: #{lstm_forward.2} parent=0 // pred_fallthru
    _
  // Predicated region
  $region6: #{lstm_forward.2} parent=0 // pred_check
    _
  $region7: #{lstm_forward.2} parent=0 // pred_check_branch
    %18 = sbr.rel (0) target = $region9
  $region8: #{lstm_forward.2} parent=0 // pred_region
    %s19 = ssub.s32 0, 0
    %s20 = smul.u32 8, %s19
    %p21 = scmp.lt.s32.totalorder %s20, 7
    %s22 = scalar_select %p21, %s20, 7
    %s23 = smul.addr %s22, 8
    %s24 = scalar_lea.vmem %s1, %s23
    %s25 = ssub.s32 0, 0
    %s26 = smul.u32 8, %s25
  $region9: #{lstm_forward.2} parent=0 // pred_fallthru
    _
  // Predicated region
  $region10: #{lstm_forward.2} parent=0 // pred_check
    _
  $region11: #{lstm_forward.2} parent=0 // pred_check_branch
    %28 = sbr.rel (0) target = $region13
  $region12: #{lstm_forward.2} parent=0 // pred_region
    _
  $region13: #{lstm_forward.2} parent=0 // pred_fallthru
    _
  // Predicated region
  $region14: #{lstm_forward.2} parent=0 // pred_check
    _
  $region15: #{lstm_forward.2} parent=0 // pred_check_branch
    %30 = sbr.rel (0) target = $region17
  $region16: #{lstm_forward.2} parent=0 // pred_region
    _
  $region17: #{lstm_forward.2} parent=0 // pred_fallthru
    _
  // Predicated region
  $region18: #{lstm_forward.2} parent=0 // pred_check
    _
  $region19: #{lstm_forward.2} parent=0 // pred_check_branch
    %32 = sbr.rel (0) target = $region21
  $region20: #{lstm_forward.2} parent=0 // pred_region
    _
  $region21: #{lstm_forward.2} parent=0 // pred_fallthru
    _
  // Predicated region
  $region22: #{lstm_forward.2} parent=0 // pred_check
    _
  $region23: #{lstm_forward.2} parent=0 // pred_check_branch
    %34 = sbr.rel (0) target = $region25
  $region24: #{lstm_forward.2} parent=0 // pred_region
    _
  $region25: #{lstm_forward.2} parent=0 // pred_fallthru
    _
  // Predicated region
  $region26: #{lstm_forward.2} parent=0 // pred_check
    _
  $region27: #{lstm_forward.2} parent=0 // pred_check_branch
    %36 = sbr.rel (0) target = $region29
  $region28: #{lstm_forward.2} parent=0 // pred_region
    _
  $region29: #{lstm_forward.2} parent=0 // pred_fallthru
    _
  // Predicated region
  $region30: #{lstm_forward.2} parent=0 // pred_check
    _
  $region31: #{lstm_forward.2} parent=0 // pred_check_branch
    %38 = sbr.rel (0) target = $region33
  $region32: #{lstm_forward.2} parent=0 // pred_region
    _
  $region33: #{lstm_forward.2} parent=0 // pred_fallthru
    _
  %s39 = ssub.s32 0, 0
  %s40 = smul.u32 8, %s39
  %p41 = scmp.lt.s32.totalorder %s40, 7
  %s42 = scalar_select %p41, %s40, 7
  %s43 = smul.addr %s42, 8
  %s44 = scalar_lea.vmem %s1, %s43
  %s45 = ssub.s32 0, 0
  %s46 = smul.u32 8, %s45
  %p47 = scmp.lt.s32.totalorder %s46, 7
  %s48 = scalar_select %p47, %s46, 7
  %s49 = smul.addr %s48, 8
  %s50 = scalar_lea.vmem %s9, %s49
  %s51 = ssub.s32 0, 0
  %s52 = smul.u32 8, %s51
  %p53 = scmp.lt.s32.totalorder %s52, 7
  %s54 = scalar_select %p53, %s52, 7
  %s55 = smul.addr %s54, 8
  %s56 = scalar_lea.vmem %s1, %s55
  %s57 = ssub.s32 0, 0
  %s58 = smul.u32 8, %s57
  %s59 = ssub.s32 0, 0
  %s60 = smul.u32 8, %s59
  %p61 = scmp.lt.s32.totalorder %s60, 7
  %s62 = scalar_select %p61, %s60, 7
  %s63 = smul.addr %s62, 8
  %s64 = scalar_lea.vmem %s9, %s63
  %s65 = ssub.s32 0, 0
  %s66 = smul.u32 8, %s65
  %p67 = scmp.eq.s32.totalorder 0, 0
  // Predicated region
  $region34: #{lstm_forward.2} parent=0 // pred_check
    %p68 = pneg %p67
  $region35: #{lstm_forward.2} parent=0 // pred_check_branch
    %70 = sbr.rel (%p68) target = $region37
  $region36: #{lstm_forward.2} parent=0 // pred_region
    %vm71 = vcmask 261120
    %72 = vst.msk [vmem:[#allocation2] sm:$0xff] %vm71, 0.0
    %73 = vst.msk [vmem:[#allocation3] sm:$0xff] %vm71, 0.0
    %74 = vst.msk [vmem:[#allocation4] sm:$0xff] %vm71, 0.0
    %75 = vst.msk [vmem:[#allocation5] sm:$0xff] %vm71, 0.0
  $region37: #{lstm_forward.2} parent=0 // pred_fallthru
    _
  %v76 = vld [vmem:[%s0] sm:$0xff]
  %v77 = vld [vmem:[%s0 + $0x8] sm:$0xff]
  %v78 = vld [vmem:[%s0 + $0x10] sm:$0xff]
  %v79 = vld [vmem:[%s0 + $0x18] sm:$0xff]
  %v80 = vld [vmem:[%s0 + $0x20] sm:$0xff]
  %v81 = vld [vmem:[%s0 + $0x28] sm:$0xff]
  %v82 = vld [vmem:[%s0 + $0x30] sm:$0xff]
  %v83 = vld [vmem:[%s0 + $0x38] sm:$0xff]
  %v84 = vld [vmem:[%s2] sm:$0xff]
  %v85 = vld [vmem:[%s2 + $0x8] sm:$0xff]
  %v86 = vld [vmem:[%s4] sm:$0x1]
  %v88 = vlaneseq
  %v89 = vshrl.u32 %v88, 7
  %v90 = vsub.s32 0, %v89
  %v91 = vrot.slane %v86, %v90
  %vm93 = vcmask 130048
  %v95 = vsel %vm93, %v76, 0
  %v98 = vsel %vm93, %v77, 0
  %v101 = vsel %vm93, %v78, 0
  %v104 = vsel %vm93, %v79, 0
  %v107 = vsel %vm93, %v80, 0
  %v110 = vsel %vm93, %v81, 0
  %v113 = vsel %vm93, %v82, 0
  %v116 = vsel %vm93, %v83, 0
  %118 = vmatprep.subr.mxu0 0.0
  %119 = vmatpush1.msra.mxu0 %v84
  %120 = vmatprep.subr.mxu0 0.0
  %121 = vmatpush1.msra.mxu0 %v85
  %122 = vmatprep.subr.mxu0 0.0
  %123 = vmatpush1.msra.mxu0 0.0
  %124 = vmatprep.subr.mxu0 0.0
  %125 = vmatpush1.msra.mxu0 0.0
  %126 = vmatprep.subr.mxu0 0.0
  %127 = vmatpush1.msra.mxu0 0.0
  %128 = vmatprep.subr.mxu0 0.0
  %129 = vmatpush1.msra.mxu0 0.0
  %130 = vmatprep.subr.mxu0 0.0
  %131 = vmatpush1.msra.mxu0 0.0
  %132 = vmatprep.subr.mxu0 0.0
  %133 = vmatpush1.msra.mxu0 0.0
  %134 = vmatprep.subr.mxu0 0.0
  %135 = vmatpush1.msra.mxu0 0.0
  %136 = vmatprep.subr.mxu0 0.0
  %137 = vmatpush1.msra.mxu0 0.0
  %138 = vmatprep.subr.mxu0 0.0
  %139 = vmatpush1.msra.mxu0 0.0
  %140 = vmatprep.subr.mxu0 0.0
  %141 = vmatpush1.msra.mxu0 0.0
  %142 = vmatprep.subr.mxu0 0.0
  %143 = vmatpush1.msra.mxu0 0.0
  %144 = vmatprep.subr.mxu0 0.0
  %145 = vmatpush1.msra.mxu0 0.0
  %146 = vmatprep.subr.mxu0 0.0
  %147 = vmatpush1.msra.mxu0 0.0
  %148 = vmatprep.subr.mxu0 0.0
  %149 = vmatpush1.msra.mxu0 0.0
  %150 = vmatprep.subr.mxu0 0.0
  %151 = vmatpush1.msra.mxu0 0.0
  %152 = vmatprep.subr.mxu0 0.0
  %153 = vmatpush1.msra.mxu0 0.0
  %154 = vmatprep.subr.mxu0 0.0
  %155 = vmatpush1.msra.mxu0 0.0
  %156 = vmatprep.subr.mxu0 0.0
  %157 = vmatpush1.msra.mxu0 0.0
  %158 = vmatprep.subr.mxu0 0.0
  %159 = vmatpush1.msra.mxu0 0.0
  %160 = vmatprep.subr.mxu0 0.0
  %161 = vmatpush1.msra.mxu0 0.0
  %162 = vmatprep.subr.mxu0 0.0
  %163 = vmatpush1.msra.mxu0 0.0
  %164 = vmatprep.subr.mxu0 0.0
  %165 = vmatpush1.msra.mxu0 0.0
  %166 = vmatprep.subr.mxu0 0.0
  %167 = vmatpush1.msra.mxu0 0.0
  %168 = vmatprep.subr.mxu0 0.0
  %169 = vmatpush1.msra.mxu0 0.0
  %170 = vmatprep.subr.mxu0 0.0
  %171 = vmatpush1.msra.mxu0 0.0
  %172 = vmatprep.subr.mxu0 0.0
  %173 = vmatpush1.msra.mxu0 0.0
  %174 = vmatprep.subr.mxu0 0.0
  %175 = vmatpush1.msra.mxu0 0.0
  %176 = vmatprep.subr.mxu0 0.0
  %177 = vmatpush1.msra.mxu0 0.0
  %178 = vmatprep.subr.mxu0 0.0
  %179 = vmatpush1.msra.mxu0 0.0
  %180 = vmatprep.subr.mxu0 0.0
  %181 = vmatpush1.msra.mxu0 0.0
  %182 = vmatprep.mubr.f32.mxu0 0.0
  %183 = vmatmul.mubr.f32.gmra.mrb[0].mxu0 %v95
  %v184 = vpop.f32.mrb[0].mxu0
  %v185 = vadd.f32 %v91, %v184
  %v186 = vpop.f32.mrb[0].mxu0
  %187 = vmatprep.mubr.f32.mxu0 0.0
  %188 = vmatmul.mubr.f32.gmra.mrb[0].mxu0 %v98
  %v189 = vpop.f32.mrb[0].mxu0
  %v190 = vadd.f32 %v91, %v189
  %v191 = vpop.f32.mrb[0].mxu0
  %192 = vmatprep.mubr.f32.mxu0 0.0
  %193 = vmatmul.mubr.f32.gmra.mrb[0].mxu0 %v101
  %v194 = vpop.f32.mrb[0].mxu0
  %v195 = vadd.f32 %v91, %v194
  %v196 = vpop.f32.mrb[0].mxu0
  %197 = vmatprep.mubr.f32.mxu0 0.0
  %198 = vmatmul.mubr.f32.gmra.mrb[0].mxu0 %v104
  %v199 = vpop.f32.mrb[0].mxu0
  %v200 = vadd.f32 %v91, %v199
  %v201 = vpop.f32.mrb[0].mxu0
  %202 = vmatprep.mubr.f32.mxu0 0.0
  %203 = vmatmul.mubr.f32.gmra.mrb[0].mxu0 %v107
  %v204 = vpop.f32.mrb[0].mxu0
  %v205 = vadd.f32 %v91, %v204
  %v206 = vpop.f32.mrb[0].mxu0
  %207 = vmatprep.mubr.f32.mxu0 0.0
  %208 = vmatmul.mubr.f32.gmra.mrb[0].mxu0 %v110
  %v209 = vpop.f32.mrb[0].mxu0
  %v210 = vadd.f32 %v91, %v209
  %v211 = vpop.f32.mrb[0].mxu0
  %212 = vmatprep.mubr.f32.mxu0 0.0
  %213 = vmatmul.mubr.f32.gmra.mrb[0].mxu0 %v113
  %v214 = vpop.f32.mrb[0].mxu0
  %v215 = vadd.f32 %v91, %v214
  %v216 = vpop.f32.mrb[0].mxu0
  %217 = vmatprep.mubr.f32.mxu0 0.0
  %218 = vmatmul.mubr.f32.gmra.mrb[0].mxu0 %v116
  %v219 = vpop.f32.mrb[0].mxu0
  %v220 = vadd.f32 %v91, %v219
  %v221 = vpop.f32.mrb[0].mxu0
  %222 = vdwg.mxu0
  %223 = vst [vmem:[#allocation6] sm:$0xff] %v185
  %224 = vst [vmem:[#allocation6 + $0x8] sm:$0xff] %v190
  %225 = vst [vmem:[#allocation6 + $0x10] sm:$0xff] %v195
  %226 = vst [vmem:[#allocation6 + $0x18] sm:$0xff] %v200
  %227 = vst [vmem:[#allocation6 + $0x20] sm:$0xff] %v205
  %228 = vst [vmem:[#allocation6 + $0x28] sm:$0xff] %v210
  %229 = vst [vmem:[#allocation6 + $0x30] sm:$0xff] %v215
  %230 = vst [vmem:[#allocation6 + $0x38] sm:$0xff] %v220
  %v231 = vld [vmem:[%s56] sm:$0xff]
  %v232 = vld [vmem:[%s56 + $0x8] sm:$0xff]
  %v233 = vld [vmem:[%s56 + $0x10] sm:$0xff]
  %v234 = vld [vmem:[%s56 + $0x18] sm:$0xff]
  %v235 = vld [vmem:[%s56 + $0x20] sm:$0xff]
  %v236 = vld [vmem:[%s56 + $0x28] sm:$0xff]
  %v237 = vld [vmem:[%s56 + $0x30] sm:$0xff]
  %v238 = vld [vmem:[%s56 + $0x38] sm:$0xff]
  %v239 = vld [vmem:[%s5] sm:$0xff]
  %v240 = vld [vmem:[%s5 + $0x8] sm:$0xff]
  %v241 = vld [vmem:[%s7] sm:$0x1]
  %v243 = vlaneseq
  %v244 = vshrl.u32 %v243, 7
  %v245 = vsub.s32 0, %v244
  %v246 = vrot.slane %v241, %v245
  %v249 = vsel %vm93, %v231, 0
  %v252 = vsel %vm93, %v232, 0
  %v255 = vsel %vm93, %v233, 0
  %v258 = vsel %vm93, %v234, 0
  %v261 = vsel %vm93, %v235, 0
  %v264 = vsel %vm93, %v236, 0
  %v267 = vsel %vm93, %v237, 0
  %v270 = vsel %vm93, %v238, 0
  %272 = vmatprep.subr.mxu0 0.0
  %273 = vmatpush1.msra.mxu0 %v239
  %274 = vmatprep.subr.mxu0 0.0
  %275 = vmatpush1.msra.mxu0 %v240
  %276 = vmatprep.subr.mxu0 0.0
  %277 = vmatpush1.msra.mxu0 0.0
  %278 = vmatprep.subr.mxu0 0.0
  %279 = vmatpush1.msra.mxu0 0.0
  %280 = vmatprep.subr.mxu0 0.0
  %281 = vmatpush1.msra.mxu0 0.0
  %282 = vmatprep.subr.mxu0 0.0
  %283 = vmatpush1.msra.mxu0 0.0
  %284 = vmatprep.subr.mxu0 0.0
  %285 = vmatpush1.msra.mxu0 0.0
  %286 = vmatprep.subr.mxu0 0.0
  %287 = vmatpush1.msra.mxu0 0.0
  %288 = vmatprep.subr.mxu0 0.0
  %289 = vmatpush1.msra.mxu0 0.0
  %290 = vmatprep.subr.mxu0 0.0
  %291 = vmatpush1.msra.mxu0 0.0
  %292 = vmatprep.subr.mxu0 0.0
  %293 = vmatpush1.msra.mxu0 0.0
  %294 = vmatprep.subr.mxu0 0.0
  %295 = vmatpush1.msra.mxu0 0.0
  %296 = vmatprep.subr.mxu0 0.0
  %297 = vmatpush1.msra.mxu0 0.0
  %298 = vmatprep.subr.mxu0 0.0
  %299 = vmatpush1.msra.mxu0 0.0
  %300 = vmatprep.subr.mxu0 0.0
  %301 = vmatpush1.msra.mxu0 0.0
  %302 = vmatprep.subr.mxu0 0.0
  %303 = vmatpush1.msra.mxu0 0.0
  %304 = vmatprep.subr.mxu0 0.0
  %305 = vmatpush1.msra.mxu0 0.0
  %306 = vmatprep.subr.mxu0 0.0
  %307 = vmatpush1.msra.mxu0 0.0
  %308 = vmatprep.subr.mxu0 0.0
  %309 = vmatpush1.msra.mxu0 0.0
  %310 = vmatprep.subr.mxu0 0.0
  %311 = vmatpush1.msra.mxu0 0.0
  %312 = vmatprep.subr.mxu0 0.0
  %313 = vmatpush1.msra.mxu0 0.0
  %314 = vmatprep.subr.mxu0 0.0
  %315 = vmatpush1.msra.mxu0 0.0
  %316 = vmatprep.subr.mxu0 0.0
  %317 = vmatpush1.msra.mxu0 0.0
  %318 = vmatprep.subr.mxu0 0.0
  %319 = vmatpush1.msra.mxu0 0.0
  %320 = vmatprep.subr.mxu0 0.0
  %321 = vmatpush1.msra.mxu0 0.0
  %322 = vmatprep.subr.mxu0 0.0
  %323 = vmatpush1.msra.mxu0 0.0
  %324 = vmatprep.subr.mxu0 0.0
  %325 = vmatpush1.msra.mxu0 0.0
  %326 = vmatprep.subr.mxu0 0.0
  %327 = vmatpush1.msra.mxu0 0.0
  %328 = vmatprep.subr.mxu0 0.0
  %329 = vmatpush1.msra.mxu0 0.0
  %330 = vmatprep.subr.mxu0 0.0
  %331 = vmatpush1.msra.mxu0 0.0
  %332 = vmatprep.subr.mxu0 0.0
  %333 = vmatpush1.msra.mxu0 0.0
  %334 = vmatprep.subr.mxu0 0.0
  %335 = vmatpush1.msra.mxu0 0.0
  %336 = vmatprep.mubr.f32.mxu0 0.0
  %337 = vmatmul.mubr.f32.gmra.mrb[0].mxu0 %v249
  %v338 = vpop.f32.mrb[0].mxu0
  %v339 = vadd.f32 %v246, %v338
  %v340 = vpop.f32.mrb[0].mxu0
  %341 = vmatprep.mubr.f32.mxu0 0.0
  %342 = vmatmul.mubr.f32.gmra.mrb[0].mxu0 %v252
  %v343 = vpop.f32.mrb[0].mxu0
  %v344 = vadd.f32 %v246, %v343
  %v345 = vpop.f32.mrb[0].mxu0
  %346 = vmatprep.mubr.f32.mxu0 0.0
  %347 = vmatmul.mubr.f32.gmra.mrb[0].mxu0 %v255
  %v348 = vpop.f32.mrb[0].mxu0
  %v349 = vadd.f32 %v246, %v348
  %v350 = vpop.f32.mrb[0].mxu0
  %351 = vmatprep.mubr.f32.mxu0 0.0
  %352 = vmatmul.mubr.f32.gmra.mrb[0].mxu0 %v258
  %v353 = vpop.f32.mrb[0].mxu0
  %v354 = vadd.f32 %v246, %v353
  %v355 = vpop.f32.mrb[0].mxu0
  %356 = vmatprep.mubr.f32.mxu0 0.0
  %357 = vmatmul.mubr.f32.gmra.mrb[0].mxu0 %v261
  %v358 = vpop.f32.mrb[0].mxu0
  %v359 = vadd.f32 %v246, %v358
  %v360 = vpop.f32.mrb[0].mxu0
  %361 = vmatprep.mubr.f32.mxu0 0.0
  %362 = vmatmul.mubr.f32.gmra.mrb[0].mxu0 %v264
  %v363 = vpop.f32.mrb[0].mxu0
  %v364 = vadd.f32 %v246, %v363
  %v365 = vpop.f32.mrb[0].mxu0
  %366 = vmatprep.mubr.f32.mxu0 0.0
  %367 = vmatmul.mubr.f32.gmra.mrb[0].mxu0 %v267
  %v368 = vpop.f32.mrb[0].mxu0
  %v369 = vadd.f32 %v246, %v368
  %v370 = vpop.f32.mrb[0].mxu0
  %371 = vmatprep.mubr.f32.mxu0 0.0
  %372 = vmatmul.mubr.f32.gmra.mrb[0].mxu0 %v270
  %v373 = vpop.f32.mrb[0].mxu0
  %v374 = vadd.f32 %v246, %v373
  %v375 = vpop.f32.mrb[0].mxu0
  %376 = vdwg.mxu0
  %377 = vst [vmem:[#allocation7] sm:$0xff] %v339
  %378 = vst [vmem:[#allocation7 + $0x8] sm:$0xff] %v344
  %379 = vst [vmem:[#allocation7 + $0x10] sm:$0xff] %v349
  %380 = vst [vmem:[#allocation7 + $0x18] sm:$0xff] %v354
  %381 = vst [vmem:[#allocation7 + $0x20] sm:$0xff] %v359
  %382 = vst [vmem:[#allocation7 + $0x28] sm:$0xff] %v364
  %383 = vst [vmem:[#allocation7 + $0x30] sm:$0xff] %v369
  %384 = vst [vmem:[#allocation7 + $0x38] sm:$0xff] %v374
  %v385 = vlaneseq
  %v386 = vand.u32 %v385, 127
  %vm387 = vcmp.ge.s32.totalorder %v386, 64
  %vm388 = vcmp.lt.s32.totalorder %v386, 96
  %vm389 = vmand %vm387, %vm388
  %v390 = vld [vmem:[%s3] sm:$0xff]
  %v391 = vld [vmem:[%s3 + $0x8] sm:$0xff]
  %v392 = vld [vmem:[%s3 + $0x10] sm:$0xff]
  %v393 = vld [vmem:[%s3 + $0x18] sm:$0xff]
  %v394 = vld [vmem:[%s6] sm:$0xff]
  %v395 = vld [vmem:[%s6 + $0x8] sm:$0xff]
  %v396 = vld [vmem:[%s6 + $0x10] sm:$0xff]
  %v397 = vld [vmem:[%s6 + $0x18] sm:$0xff]
  %v398 = vld [vmem:[#allocation2] sm:$0xff]
  %v399 = vld [vmem:[#allocation3] sm:$0xff]
  %v400 = vld [vmem:[#allocation4] sm:$0xff]
  %v401 = vld [vmem:[#allocation5] sm:$0xff]
  %v402 = vld [vmem:[#allocation6] sm:$0xff]
  %vm403 = vcmask 261120
  %v405 = vsel %vm403, %v398, 0
  %407 = vmatprep.subr.mxu0 0.0
  %408 = vmatpush1.msra.mxu0 %v390
  %409 = vmatprep.subr.mxu0 0.0
  %410 = vmatpush1.msra.mxu0 %v391
  %411 = vmatprep.subr.mxu0 0.0
  %412 = vmatpush1.msra.mxu0 %v392
  %413 = vmatprep.subr.mxu0 0.0
  %414 = vmatpush1.msra.mxu0 %v393
  %415 = vmatprep.subr.mxu0 0.0
  %416 = vmatpush1.msra.mxu0 0.0
  %417 = vmatprep.subr.mxu0 0.0
  %418 = vmatpush1.msra.mxu0 0.0
  %419 = vmatprep.subr.mxu0 0.0
  %420 = vmatpush1.msra.mxu0 0.0
  %421 = vmatprep.subr.mxu0 0.0
  %422 = vmatpush1.msra.mxu0 0.0
  %423 = vmatprep.subr.mxu0 0.0
  %424 = vmatpush1.msra.mxu0 0.0
  %425 = vmatprep.subr.mxu0 0.0
  %426 = vmatpush1.msra.mxu0 0.0
  %427 = vmatprep.subr.mxu0 0.0
  %428 = vmatpush1.msra.mxu0 0.0
  %429 = vmatprep.subr.mxu0 0.0
  %430 = vmatpush1.msra.mxu0 0.0
  %431 = vmatprep.subr.mxu0 0.0
  %432 = vmatpush1.msra.mxu0 0.0
  %433 = vmatprep.subr.mxu0 0.0
  %434 = vmatpush1.msra.mxu0 0.0
  %435 = vmatprep.subr.mxu0 0.0
  %436 = vmatpush1.msra.mxu0 0.0
  %437 = vmatprep.subr.mxu0 0.0
  %438 = vmatpush1.msra.mxu0 0.0
  %439 = vmatprep.subr.mxu0 0.0
  %440 = vmatpush1.msra.mxu0 0.0
  %441 = vmatprep.subr.mxu0 0.0
  %442 = vmatpush1.msra.mxu0 0.0
  %443 = vmatprep.subr.mxu0 0.0
  %444 = vmatpush1.msra.mxu0 0.0
  %445 = vmatprep.subr.mxu0 0.0
  %446 = vmatpush1.msra.mxu0 0.0
  %447 = vmatprep.subr.mxu0 0.0
  %448 = vmatpush1.msra.mxu0 0.0
  %449 = vmatprep.subr.mxu0 0.0
  %450 = vmatpush1.msra.mxu0 0.0
  %451 = vmatprep.subr.mxu0 0.0
  %452 = vmatpush1.msra.mxu0 0.0
  %453 = vmatprep.subr.mxu0 0.0
  %454 = vmatpush1.msra.mxu0 0.0
  %455 = vmatprep.subr.mxu0 0.0
  %456 = vmatpush1.msra.mxu0 0.0
  %457 = vmatprep.subr.mxu0 0.0
  %458 = vmatpush1.msra.mxu0 0.0
  %459 = vmatprep.subr.mxu0 0.0
  %460 = vmatpush1.msra.mxu0 0.0
  %461 = vmatprep.subr.mxu0 0.0
  %462 = vmatpush1.msra.mxu0 0.0
  %463 = vmatprep.subr.mxu0 0.0
  %464 = vmatpush1.msra.mxu0 0.0
  %465 = vmatprep.subr.mxu0 0.0
  %466 = vmatpush1.msra.mxu0 0.0
  %467 = vmatprep.subr.mxu0 0.0
  %468 = vmatpush1.msra.mxu0 0.0
  %469 = vmatprep.subr.mxu0 0.0
  %470 = vmatpush1.msra.mxu0 0.0
  %471 = vmatprep.mubr.f32.mxu0 0.0
  %472 = vmatmul.mubr.f32.gmra.mrb[0].mxu0 %v405
  %v473 = vpop.f32.mrb[0].mxu0
  %v474 = vadd.f32 0.0, %v473
  %v475 = vpop.f32.mrb[0].mxu0
  %476 = vdwg.mxu0
  %v477 = vadd.f32 %v402, %v474
  %v478 = vtanh.pop %v477
  %v479 = vxor.u32 %v477, 2147483648
  %v480 = vmul.f32 %v479, 1.442695
  %v481 = vpow.pop %v480
  %v482 = vadd.f32 %v481, 1.0
  %v483 = vrcp.pop %v482
  %v484 = vmul.f32 1.0, %v483
  %v485 = vsel %vm389, %v478, %v484
  %487 = vrot.lane.b32.xlu0 %v399, 32
  %v488 = vpop.permute.xlu0 %487
  %v490 = vmul.f32 %v485, %v488
  %492 = vrot.lane.b32.xlu0 %v485, 64
  %v493 = vpop.permute.xlu0 %492
  %v495 = vmul.f32 %v485, %v493
  %497 = vrot.lane.b32.xlu0 %v495, 32
  %v498 = vpop.permute.xlu0 %497
  %v500 = vadd.f32 %v490, %v498
  %v501 = vtanh.pop %v500
  %503 = vrot.lane.b32.xlu0 %v501, 64
  %v504 = vpop.permute.xlu0 %503
  %v506 = vmul.f32 %v485, %v504
  %508 = vrot.lane.b32.xlu0 %v506, 32
  %v509 = vpop.permute.xlu0 %508
  %511 = vst.msk [vmem:[%s8] sm:$0xff] %vm403, %v509
  %s512 = scalar_lea.vmem [#allocation7], 56
  %v513 = vld [vmem:[%s512] sm:$0xff]
  %v515 = vsel %vm403, %v400, 0
  %517 = vmatprep.subr.mxu0 0.0
  %518 = vmatpush1.msra.mxu0 %v394
  %519 = vmatprep.subr.mxu0 0.0
  %520 = vmatpush1.msra.mxu0 %v395
  %521 = vmatprep.subr.mxu0 0.0
  %522 = vmatpush1.msra.mxu0 %v396
  %523 = vmatprep.subr.mxu0 0.0
  %524 = vmatpush1.msra.mxu0 %v397
  %525 = vmatprep.subr.mxu0 0.0
  %526 = vmatpush1.msra.mxu0 0.0
  %527 = vmatprep.subr.mxu0 0.0
  %528 = vmatpush1.msra.mxu0 0.0
  %529 = vmatprep.subr.mxu0 0.0
  %530 = vmatpush1.msra.mxu0 0.0
  %531 = vmatprep.subr.mxu0 0.0
  %532 = vmatpush1.msra.mxu0 0.0
  %533 = vmatprep.subr.mxu0 0.0
  %534 = vmatpush1.msra.mxu0 0.0
  %535 = vmatprep.subr.mxu0 0.0
  %536 = vmatpush1.msra.mxu0 0.0
  %537 = vmatprep.subr.mxu0 0.0
  %538 = vmatpush1.msra.mxu0 0.0
  %539 = vmatprep.subr.mxu0 0.0
  %540 = vmatpush1.msra.mxu0 0.0
  %541 = vmatprep.subr.mxu0 0.0
  %542 = vmatpush1.msra.mxu0 0.0
  %543 = vmatprep.subr.mxu0 0.0
  %544 = vmatpush1.msra.mxu0 0.0
  %545 = vmatprep.subr.mxu0 0.0
  %546 = vmatpush1.msra.mxu0 0.0
  %547 = vmatprep.subr.mxu0 0.0
  %548 = vmatpush1.msra.mxu0 0.0
  %549 = vmatprep.subr.mxu0 0.0
  %550 = vmatpush1.msra.mxu0 0.0
  %551 = vmatprep.subr.mxu0 0.0
  %552 = vmatpush1.msra.mxu0 0.0
  %553 = vmatprep.subr.mxu0 0.0
  %554 = vmatpush1.msra.mxu0 0.0
  %555 = vmatprep.subr.mxu0 0.0
  %556 = vmatpush1.msra.mxu0 0.0
  %557 = vmatprep.subr.mxu0 0.0
  %558 = vmatpush1.msra.mxu0 0.0
  %559 = vmatprep.subr.mxu0 0.0
  %560 = vmatpush1.msra.mxu0 0.0
  %561 = vmatprep.subr.mxu0 0.0
  %562 = vmatpush1.msra.mxu0 0.0
  %563 = vmatprep.subr.mxu0 0.0
  %564 = vmatpush1.msra.mxu0 0.0
  %565 = vmatprep.subr.mxu0 0.0
  %566 = vmatpush1.msra.mxu0 0.0
  %567 = vmatprep.subr.mxu0 0.0
  %568 = vmatpush1.msra.mxu0 0.0
  %569 = vmatprep.subr.mxu0 0.0
  %570 = vmatpush1.msra.mxu0 0.0
  %571 = vmatprep.subr.mxu0 0.0
  %572 = vmatpush1.msra.mxu0 0.0
  %573 = vmatprep.subr.mxu0 0.0
  %574 = vmatpush1.msra.mxu0 0.0
  %575 = vmatprep.subr.mxu0 0.0
  %576 = vmatpush1.msra.mxu0 0.0
  %577 = vmatprep.subr.mxu0 0.0
  %578 = vmatpush1.msra.mxu0 0.0
  %579 = vmatprep.subr.mxu0 0.0
  %580 = vmatpush1.msra.mxu0 0.0
  %581 = vmatprep.mubr.f32.mxu0 0.0
  %582 = vmatmul.mubr.f32.gmra.mrb[0].mxu0 %v515
  %v583 = vpop.f32.mrb[0].mxu0
  %v584 = vadd.f32 0.0, %v583
  %v585 = vpop.f32.mrb[0].mxu0
  %586 = vdwg.mxu0
  %v587 = vadd.f32 %v513, %v584
  %v588 = vtanh.pop %v587
  %v589 = vxor.u32 %v587, 2147483648
  %v590 = vmul.f32 %v589, 1.442695
  %v591 = vpow.pop %v590
  %v592 = vadd.f32 %v591, 1.0
  %v593 = vrcp.pop %v592
  %v594 = vmul.f32 1.0, %v593
  %v595 = vsel %vm389, %v588, %v594
  %597 = vrot.lane.b32.xlu0 %v401, 32
  %v598 = vpop.permute.xlu0 %597
  %v600 = vmul.f32 %v595, %v598
  %602 = vrot.lane.b32.xlu0 %v595, 64
  %v603 = vpop.permute.xlu0 %602
  %v605 = vmul.f32 %v595, %v603
  %607 = vrot.lane.b32.xlu0 %v605, 32
  %v608 = vpop.permute.xlu0 %607
  %v610 = vadd.f32 %v600, %v608
  %v611 = vtanh.pop %v610
  %613 = vrot.lane.b32.xlu0 %v611, 64
  %v614 = vpop.permute.xlu0 %613
  %v616 = vmul.f32 %v595, %v614
  %618 = vrot.lane.b32.xlu0 %v616, 32
  %v619 = vpop.permute.xlu0 %618
  %s621 = scalar_lea.vmem %s64, 56
  %622 = vst.msk [vmem:[%s621] sm:$0xff] %vm403, %v619
  %s623 = scalar_lea.vmem [#allocation6], 8
  %v624 = vld [vmem:[%s623] sm:$0xff]
  %v625 = vsel %vm403, %v509, 0
  %627 = vmatprep.subr.mxu0 0.0
  %628 = vmatpush1.msra.mxu0 %v390
  %629 = vmatprep.subr.mxu0 0.0
  %630 = vmatpush1.msra.mxu0 %v391
  %631 = vmatprep.subr.mxu0 0.0
  %632 = vmatpush1.msra.mxu0 %v392
  %633 = vmatprep.subr.mxu0 0.0
  %634 = vmatpush1.msra.mxu0 %v393
  %635 = vmatprep.subr.mxu0 0.0
  %636 = vmatpush1.msra.mxu0 0.0
  %637 = vmatprep.subr.mxu0 0.0
  %638 = vmatpush1.msra.mxu0 0.0
  %639 = vmatprep.subr.mxu0 0.0
  %640 = vmatpush1.msra.mxu0 0.0
  %641 = vmatprep.subr.mxu0 0.0
  %642 = vmatpush1.msra.mxu0 0.0
  %643 = vmatprep.subr.mxu0 0.0
  %644 = vmatpush1.msra.mxu0 0.0
  %645 = vmatprep.subr.mxu0 0.0
  %646 = vmatpush1.msra.mxu0 0.0
  %647 = vmatprep.subr.mxu0 0.0
  %648 = vmatpush1.msra.mxu0 0.0
  %649 = vmatprep.subr.mxu0 0.0
  %650 = vmatpush1.msra.mxu0 0.0
  %651 = vmatprep.subr.mxu0 0.0
  %652 = vmatpush1.msra.mxu0 0.0
  %653 = vmatprep.subr.mxu0 0.0
  %654 = vmatpush1.msra.mxu0 0.0
  %655 = vmatprep.subr.mxu0 0.0
  %656 = vmatpush1.msra.mxu0 0.0
  %657 = vmatprep.subr.mxu0 0.0
  %658 = vmatpush1.msra.mxu0 0.0
  %659 = vmatprep.subr.mxu0 0.0
  %660 = vmatpush1.msra.mxu0 0.0
  %661 = vmatprep.subr.mxu0 0.0
  %662 = vmatpush1.msra.mxu0 0.0
  %663 = vmatprep.subr.mxu0 0.0
  %664 = vmatpush1.msra.mxu0 0.0
  %665 = vmatprep.subr.mxu0 0.0
  %666 = vmatpush1.msra.mxu0 0.0
  %667 = vmatprep.subr.mxu0 0.0
  %668 = vmatpush1.msra.mxu0 0.0
  %669 = vmatprep.subr.mxu0 0.0
  %670 = vmatpush1.msra.mxu0 0.0
  %671 = vmatprep.subr.mxu0 0.0
  %672 = vmatpush1.msra.mxu0 0.0
  %673 = vmatprep.subr.mxu0 0.0
  %674 = vmatpush1.msra.mxu0 0.0
  %675 = vmatprep.subr.mxu0 0.0
  %676 = vmatpush1.msra.mxu0 0.0
  %677 = vmatprep.subr.mxu0 0.0
  %678 = vmatpush1.msra.mxu0 0.0
  %679 = vmatprep.subr.mxu0 0.0
  %680 = vmatpush1.msra.mxu0 0.0
  %681 = vmatprep.subr.mxu0 0.0
  %682 = vmatpush1.msra.mxu0 0.0
  %683 = vmatprep.subr.mxu0 0.0
  %684 = vmatpush1.msra.mxu0 0.0
  %685 = vmatprep.subr.mxu0 0.0
  %686 = vmatpush1.msra.mxu0 0.0
  %687 = vmatprep.subr.mxu0 0.0
  %688 = vmatpush1.msra.mxu0 0.0
  %689 = vmatprep.subr.mxu0 0.0
  %690 = vmatpush1.msra.mxu0 0.0
  %691 = vmatprep.mubr.f32.mxu0 0.0
  %692 = vmatmul.mubr.f32.gmra.mrb[0].mxu0 %v625
  %v693 = vpop.f32.mrb[0].mxu0
  %v694 = vadd.f32 0.0, %v693
  %v695 = vpop.f32.mrb[0].mxu0
  %696 = vdwg.mxu0
  %v697 = vadd.f32 %v624, %v694
  %v698 = vtanh.pop %v697
  %v699 = vxor.u32 %v697, 2147483648
  %v700 = vmul.f32 %v699, 1.442695
  %v701 = vpow.pop %v700
  %v702 = vadd.f32 %v701, 1.0
  %v703 = vrcp.pop %v702
  %v704 = vmul.f32 1.0, %v703
  %v705 = vsel %vm389, %v698, %v704
  %v706 = vmul.f32 %v705, %v500
  %708 = vrot.lane.b32.xlu0 %v705, 64
  %v709 = vpop.permute.xlu0 %708
  %v711 = vmul.f32 %v705, %v709
  %713 = vrot.lane.b32.xlu0 %v711, 32
  %v714 = vpop.permute.xlu0 %713
  %v716 = vadd.f32 %v706, %v714
  %v717 = vtanh.pop %v716
  %719 = vrot.lane.b32.xlu0 %v717, 64
  %v720 = vpop.permute.xlu0 %719
  %v722 = vmul.f32 %v705, %v720
  %724 = vrot.lane.b32.xlu0 %v722, 32
  %v725 = vpop.permute.xlu0 %724
  %s727 = scalar_lea.vmem %s8, 8
  %728 = vst.msk [vmem:[%s727] sm:$0xff] %vm403, %v725
  %s729 = scalar_lea.vmem [#allocation7], 48
  %v730 = vld [vmem:[%s729] sm:$0xff]
  %v731 = vsel %vm403, %v619, 0
  %733 = vmatprep.subr.mxu0 0.0
  %734 = vmatpush1.msra.mxu0 %v394
  %735 = vmatprep.subr.mxu0 0.0
  %736 = vmatpush1.msra.mxu0 %v395
  %737 = vmatprep.subr.mxu0 0.0
  %738 = vmatpush1.msra.mxu0 %v396
  %739 = vmatprep.subr.mxu0 0.0
  %740 = vmatpush1.msra.mxu0 %v397
  %741 = vmatprep.subr.mxu0 0.0
  %742 = vmatpush1.msra.mxu0 0.0
  %743 = vmatprep.subr.mxu0 0.0
  %744 = vmatpush1.msra.mxu0 0.0
  %745 = vmatprep.subr.mxu0 0.0
  %746 = vmatpush1.msra.mxu0 0.0
  %747 = vmatprep.subr.mxu0 0.0
  %748 = vmatpush1.msra.mxu0 0.0
  %749 = vmatprep.subr.mxu0 0.0
  %750 = vmatpush1.msra.mxu0 0.0
  %751 = vmatprep.subr.mxu0 0.0
  %752 = vmatpush1.msra.mxu0 0.0
  %753 = vmatprep.subr.mxu0 0.0
  %754 = vmatpush1.msra.mxu0 0.0
  %755 = vmatprep.subr.mxu0 0.0
  %756 = vmatpush1.msra.mxu0 0.0
  %757 = vmatprep.subr.mxu0 0.0
  %758 = vmatpush1.msra.mxu0 0.0
  %759 = vmatprep.subr.mxu0 0.0
  %760 = vmatpush1.msra.mxu0 0.0
  %761 = vmatprep.subr.mxu0 0.0
  %762 = vmatpush1.msra.mxu0 0.0
  %763 = vmatprep.subr.mxu0 0.0
  %764 = vmatpush1.msra.mxu0 0.0
  %765 = vmatprep.subr.mxu0 0.0
  %766 = vmatpush1.msra.mxu0 0.0
  %767 = vmatprep.subr.mxu0 0.0
  %768 = vmatpush1.msra.mxu0 0.0
  %769 = vmatprep.subr.mxu0 0.0
  %770 = vmatpush1.msra.mxu0 0.0
  %771 = vmatprep.subr.mxu0 0.0
  %772 = vmatpush1.msra.mxu0 0.0
  %773 = vmatprep.subr.mxu0 0.0
  %774 = vmatpush1.msra.mxu0 0.0
  %775 = vmatprep.subr.mxu0 0.0
  %776 = vmatpush1.msra.mxu0 0.0
  %777 = vmatprep.subr.mxu0 0.0
  %778 = vmatpush1.msra.mxu0 0.0
  %779 = vmatprep.subr.mxu0 0.0
  %780 = vmatpush1.msra.mxu0 0.0
  %781 = vmatprep.subr.mxu0 0.0
  %782 = vmatpush1.msra.mxu0 0.0
  %783 = vmatprep.subr.mxu0 0.0
  %784 = vmatpush1.msra.mxu0 0.0
  %785 = vmatprep.subr.mxu0 0.0
  %786 = vmatpush1.msra.mxu0 0.0
  %787 = vmatprep.subr.mxu0 0.0
  %788 = vmatpush1.msra.mxu0 0.0
  %789 = vmatprep.subr.mxu0 0.0
  %790 = vmatpush1.msra.mxu0 0.0
  %791 = vmatprep.subr.mxu0 0.0
  %792 = vmatpush1.msra.mxu0 0.0
  %793 = vmatprep.subr.mxu0 0.0
  %794 = vmatpush1.msra.mxu0 0.0
  %795 = vmatprep.subr.mxu0 0.0
  %796 = vmatpush1.msra.mxu0 0.0
  %797 = vmatprep.mubr.f32.mxu0 0.0
  %798 = vmatmul.mubr.f32.gmra.mrb[0].mxu0 %v731
  %v799 = vpop.f32.mrb[0].mxu0
  %v800 = vadd.f32 0.0, %v799
  %v801 = vpop.f32.mrb[0].mxu0
  %802 = vdwg.mxu0
  %v803 = vadd.f32 %v730, %v800
  %v804 = vtanh.pop %v803
  %v805 = vxor.u32 %v803, 2147483648
  %v806 = vmul.f32 %v805, 1.442695
  %v807 = vpow.pop %v806
  %v808 = vadd.f32 %v807, 1.0
  %v809 = vrcp.pop %v808
  %v810 = vmul.f32 1.0, %v809
  %v811 = vsel %vm389, %v804, %v810
  %v812 = vmul.f32 %v811, %v610
  %814 = vrot.lane.b32.xlu0 %v811, 64
  %v815 = vpop.permute.xlu0 %814
  %v817 = vmul.f32 %v811, %v815
  %819 = vrot.lane.b32.xlu0 %v817, 32
  %v820 = vpop.permute.xlu0 %819
  %v822 = vadd.f32 %v812, %v820
  %v823 = vtanh.pop %v822
  %825 = vrot.lane.b32.xlu0 %v823, 64
  %v826 = vpop.permute.xlu0 %825
  %v828 = vmul.f32 %v811, %v826
  %830 = vrot.lane.b32.xlu0 %v828, 32
  %v831 = vpop.permute.xlu0 %830
  %s833 = scalar_lea.vmem %s64, 48
  %834 = vst.msk [vmem:[%s833] sm:$0xff] %vm403, %v831
  %s835 = scalar_lea.vmem [#allocation6], 16
  %v836 = vld [vmem:[%s835] sm:$0xff]
  %v837 = vsel %vm403, %v725, 0
  %839 = vmatprep.subr.mxu0 0.0
  %840 = vmatpush1.msra.mxu0 %v390
  %841 = vmatprep.subr.mxu0 0.0
  %842 = vmatpush1.msra.mxu0 %v391
  %843 = vmatprep.subr.mxu0 0.0
  %844 = vmatpush1.msra.mxu0 %v392
  %845 = vmatprep.subr.mxu0 0.0
  %846 = vmatpush1.msra.mxu0 %v393
  %847 = vmatprep.subr.mxu0 0.0
  %848 = vmatpush1.msra.mxu0 0.0
  %849 = vmatprep.subr.mxu0 0.0
  %850 = vmatpush1.msra.mxu0 0.0
  %851 = vmatprep.subr.mxu0 0.0
  %852 = vmatpush1.msra.mxu0 0.0
  %853 = vmatprep.subr.mxu0 0.0
  %854 = vmatpush1.msra.mxu0 0.0
  %855 = vmatprep.subr.mxu0 0.0
  %856 = vmatpush1.msra.mxu0 0.0
  %857 = vmatprep.subr.mxu0 0.0
  %858 = vmatpush1.msra.mxu0 0.0
  %859 = vmatprep.subr.mxu0 0.0
  %860 = vmatpush1.msra.mxu0 0.0
  %861 = vmatprep.subr.mxu0 0.0
  %862 = vmatpush1.msra.mxu0 0.0
  %863 = vmatprep.subr.mxu0 0.0
  %864 = vmatpush1.msra.mxu0 0.0
  %865 = vmatprep.subr.mxu0 0.0
  %866 = vmatpush1.msra.mxu0 0.0
  %867 = vmatprep.subr.mxu0 0.0
  %868 = vmatpush1.msra.mxu0 0.0
  %869 = vmatprep.subr.mxu0 0.0
  %870 = vmatpush1.msra.mxu0 0.0
  %871 = vmatprep.subr.mxu0 0.0
  %872 = vmatpush1.msra.mxu0 0.0
  %873 = vmatprep.subr.mxu0 0.0
  %874 = vmatpush1.msra.mxu0 0.0
  %875 = vmatprep.subr.mxu0 0.0
  %876 = vmatpush1.msra.mxu0 0.0
  %877 = vmatprep.subr.mxu0 0.0
  %878 = vmatpush1.msra.mxu0 0.0
  %879 = vmatprep.subr.mxu0 0.0
  %880 = vmatpush1.msra.mxu0 0.0
  %881 = vmatprep.subr.mxu0 0.0
  %882 = vmatpush1.msra.mxu0 0.0
  %883 = vmatprep.subr.mxu0 0.0
  %884 = vmatpush1.msra.mxu0 0.0
  %885 = vmatprep.subr.mxu0 0.0
  %886 = vmatpush1.msra.mxu0 0.0
  %887 = vmatprep.subr.mxu0 0.0
  %888 = vmatpush1.msra.mxu0 0.0
  %889 = vmatprep.subr.mxu0 0.0
  %890 = vmatpush1.msra.mxu0 0.0
  %891 = vmatprep.subr.mxu0 0.0
  %892 = vmatpush1.msra.mxu0 0.0
  %893 = vmatprep.subr.mxu0 0.0
  %894 = vmatpush1.msra.mxu0 0.0
  %895 = vmatprep.subr.mxu0 0.0
  %896 = vmatpush1.msra.mxu0 0.0
  %897 = vmatprep.subr.mxu0 0.0
  %898 = vmatpush1.msra.mxu0 0.0
  %899 = vmatprep.subr.mxu0 0.0
  %900 = vmatpush1.msra.mxu0 0.0
  %901 = vmatprep.subr.mxu0 0.0
  %902 = vmatpush1.msra.mxu0 0.0
  %903 = vmatprep.mubr.f32.mxu0 0.0
  %904 = vmatmul.mubr.f32.gmra.mrb[0].mxu0 %v837
  %v905 = vpop.f32.mrb[0].mxu0
  %v906 = vadd.f32 0.0, %v905
  %v907 = vpop.f32.mrb[0].mxu0
  %908 = vdwg.mxu0
  %v909 = vadd.f32 %v836, %v906
  %v910 = vtanh.pop %v909
  %v911 = vxor.u32 %v909, 2147483648
  %v912 = vmul.f32 %v911, 1.442695
  %v913 = vpow.pop %v912
  %v914 = vadd.f32 %v913, 1.0
  %v915 = vrcp.pop %v914
  %v916 = vmul.f32 1.0, %v915
  %v917 = vsel %vm389, %v910, %v916
  %v918 = vmul.f32 %v917, %v716
  %920 = vrot.lane.b32.xlu0 %v917, 64
  %v921 = vpop.permute.xlu0 %920
  %v923 = vmul.f32 %v917, %v921
  %925 = vrot.lane.b32.xlu0 %v923, 32
  %v926 = vpop.permute.xlu0 %925
  %v928 = vadd.f32 %v918, %v926
  %v929 = vtanh.pop %v928
  %931 = vrot.lane.b32.xlu0 %v929, 64
  %v932 = vpop.permute.xlu0 %931
  %v934 = vmul.f32 %v917, %v932
  %936 = vrot.lane.b32.xlu0 %v934, 32
  %v937 = vpop.permute.xlu0 %936
  %s939 = scalar_lea.vmem %s8, 16
  %940 = vst.msk [vmem:[%s939] sm:$0xff] %vm403, %v937
  %s941 = scalar_lea.vmem [#allocation7], 40
  %v942 = vld [vmem:[%s941] sm:$0xff]
  %v943 = vsel %vm403, %v831, 0
  %945 = vmatprep.subr.mxu0 0.0
  %946 = vmatpush1.msra.mxu0 %v394
  %947 = vmatprep.subr.mxu0 0.0
  %948 = vmatpush1.msra.mxu0 %v395
  %949 = vmatprep.subr.mxu0 0.0
  %950 = vmatpush1.msra.mxu0 %v396
  %951 = vmatprep.subr.mxu0 0.0
  %952 = vmatpush1.msra.mxu0 %v397
  %953 = vmatprep.subr.mxu0 0.0
  %954 = vmatpush1.msra.mxu0 0.0
  %955 = vmatprep.subr.mxu0 0.0
  %956 = vmatpush1.msra.mxu0 0.0
  %957 = vmatprep.subr.mxu0 0.0
  %958 = vmatpush1.msra.mxu0 0.0
  %959 = vmatprep.subr.mxu0 0.0
  %960 = vmatpush1.msra.mxu0 0.0
  %961 = vmatprep.subr.mxu0 0.0
  %962 = vmatpush1.msra.mxu0 0.0
  %963 = vmatprep.subr.mxu0 0.0
  %964 = vmatpush1.msra.mxu0 0.0
  %965 = vmatprep.subr.mxu0 0.0
  %966 = vmatpush1.msra.mxu0 0.0
  %967 = vmatprep.subr.mxu0 0.0
  %968 = vmatpush1.msra.mxu0 0.0
  %969 = vmatprep.subr.mxu0 0.0
  %970 = vmatpush1.msra.mxu0 0.0
  %971 = vmatprep.subr.mxu0 0.0
  %972 = vmatpush1.msra.mxu0 0.0
  %973 = vmatprep.subr.mxu0 0.0
  %974 = vmatpush1.msra.mxu0 0.0
  %975 = vmatprep.subr.mxu0 0.0
  %976 = vmatpush1.msra.mxu0 0.0
  %977 = vmatprep.subr.mxu0 0.0
  %978 = vmatpush1.msra.mxu0 0.0
  %979 = vmatprep.subr.mxu0 0.0
  %980 = vmatpush1.msra.mxu0 0.0
  %981 = vmatprep.subr.mxu0 0.0
  %982 = vmatpush1.msra.mxu0 0.0
  %983 = vmatprep.subr.mxu0 0.0
  %984 = vmatpush1.msra.mxu0 0.0
  %985 = vmatprep.subr.mxu0 0.0
  %986 = vmatpush1.msra.mxu0 0.0
  %987 = vmatprep.subr.mxu0 0.0
  %988 = vmatpush1.msra.mxu0 0.0
  %989 = vmatprep.subr.mxu0 0.0
  %990 = vmatpush1.msra.mxu0 0.0
  %991 = vmatprep.subr.mxu0 0.0
  %992 = vmatpush1.msra.mxu0 0.0
  %993 = vmatprep.subr.mxu0 0.0
  %994 = vmatpush1.msra.mxu0 0.0
  %995 = vmatprep.subr.mxu0 0.0
  %996 = vmatpush1.msra.mxu0 0.0
  %997 = vmatprep.subr.mxu0 0.0
  %998 = vmatpush1.msra.mxu0 0.0
  %999 = vmatprep.subr.mxu0 0.0
  %1000 = vmatpush1.msra.mxu0 0.0
  %1001 = vmatprep.subr.mxu0 0.0
  %1002 = vmatpush1.msra.mxu0 0.0
  %1003 = vmatprep.subr.mxu0 0.0
  %1004 = vmatpush1.msra.mxu0 0.0
  %1005 = vmatprep.subr.mxu0 0.0
  %1006 = vmatpush1.msra.mxu0 0.0
  %1007 = vmatprep.subr.mxu0 0.0
  %1008 = vmatpush1.msra.mxu0 0.0
  %1009 = vmatprep.mubr.f32.mxu0 0.0
  %1010 = vmatmul.mubr.f32.gmra.mrb[0].mxu0 %v943
  %v1011 = vpop.f32.mrb[0].mxu0
  %v1012 = vadd.f32 0.0, %v1011
  %v1013 = vpop.f32.mrb[0].mxu0
  %1014 = vdwg.mxu0
  %v1015 = vadd.f32 %v942, %v1012
  %v1016 = vtanh.pop %v1015
  %v1017 = vxor.u32 %v1015, 2147483648
  %v1018 = vmul.f32 %v1017, 1.442695
  %v1019 = vpow.pop %v1018
  %v1020 = vadd.f32 %v1019, 1.0
  %v1021 = vrcp.pop %v1020
  %v1022 = vmul.f32 1.0, %v1021
  %v1023 = vsel %vm389, %v1016, %v1022
  %v1024 = vmul.f32 %v1023, %v822
  %1026 = vrot.lane.b32.xlu0 %v1023, 64
  %v1027 = vpop.permute.xlu0 %1026
  %v1029 = vmul.f32 %v1023, %v1027
  %1031 = vrot.lane.b32.xlu0 %v1029, 32
  %v1032 = vpop.permute.xlu0 %1031
  %v1034 = vadd.f32 %v1024, %v1032
  %v1035 = vtanh.pop %v1034
  %1037 = vrot.lane.b32.xlu0 %v1035, 64
  %v1038 = vpop.permute.xlu0 %1037
  %v1040 = vmul.f32 %v1023, %v1038
  %1042 = vrot.lane.b32.xlu0 %v1040, 32
  %v1043 = vpop.permute.xlu0 %1042
  %s1045 = scalar_lea.vmem %s64, 40
  %1046 = vst.msk [vmem:[%s1045] sm:$0xff] %vm403, %v1043
  %s1047 = scalar_lea.vmem [#allocation6], 24
  %v1048 = vld [vmem:[%s1047] sm:$0xff]
  %v1049 = vsel %vm403, %v937, 0
  %1051 = vmatprep.subr.mxu0 0.0
  %1052 = vmatpush1.msra.mxu0 %v390
  %1053 = vmatprep.subr.mxu0 0.0
  %1054 = vmatpush1.msra.mxu0 %v391
  %1055 = vmatprep.subr.mxu0 0.0
  %1056 = vmatpush1.msra.mxu0 %v392
  %1057 = vmatprep.subr.mxu0 0.0
  %1058 = vmatpush1.msra.mxu0 %v393
  %1059 = vmatprep.subr.mxu0 0.0
  %1060 = vmatpush1.msra.mxu0 0.0
  %1061 = vmatprep.subr.mxu0 0.0
  %1062 = vmatpush1.msra.mxu0 0.0
  %1063 = vmatprep.subr.mxu0 0.0
  %1064 = vmatpush1.msra.mxu0 0.0
  %1065 = vmatprep.subr.mxu0 0.0
  %1066 = vmatpush1.msra.mxu0 0.0
  %1067 = vmatprep.subr.mxu0 0.0
  %1068 = vmatpush1.msra.mxu0 0.0
  %1069 = vmatprep.subr.mxu0 0.0
  %1070 = vmatpush1.msra.mxu0 0.0
  %1071 = vmatprep.subr.mxu0 0.0
  %1072 = vmatpush1.msra.mxu0 0.0
  %1073 = vmatprep.subr.mxu0 0.0
  %1074 = vmatpush1.msra.mxu0 0.0
  %1075 = vmatprep.subr.mxu0 0.0
  %1076 = vmatpush1.msra.mxu0 0.0
  %1077 = vmatprep.subr.mxu0 0.0
  %1078 = vmatpush1.msra.mxu0 0.0
  %1079 = vmatprep.subr.mxu0 0.0
  %1080 = vmatpush1.msra.mxu0 0.0
  %1081 = vmatprep.subr.mxu0 0.0
  %1082 = vmatpush1.msra.mxu0 0.0
  %1083 = vmatprep.subr.mxu0 0.0
  %1084 = vmatpush1.msra.mxu0 0.0
  %1085 = vmatprep.subr.mxu0 0.0
  %1086 = vmatpush1.msra.mxu0 0.0
  %1087 = vmatprep.subr.mxu0 0.0
  %1088 = vmatpush1.msra.mxu0 0.0
  %1089 = vmatprep.subr.mxu0 0.0
  %1090 = vmatpush1.msra.mxu0 0.0
  %1091 = vmatprep.subr.mxu0 0.0
  %1092 = vmatpush1.msra.mxu0 0.0
  %1093 = vmatprep.subr.mxu0 0.0
  %1094 = vmatpush1.msra.mxu0 0.0
  %1095 = vmatprep.subr.mxu0 0.0
  %1096 = vmatpush1.msra.mxu0 0.0
  %1097 = vmatprep.subr.mxu0 0.0
  %1098 = vmatpush1.msra.mxu0 0.0
  %1099 = vmatprep.subr.mxu0 0.0
  %1100 = vmatpush1.msra.mxu0 0.0
  %1101 = vmatprep.subr.mxu0 0.0
  %1102 = vmatpush1.msra.mxu0 0.0
  %1103 = vmatprep.subr.mxu0 0.0
  %1104 = vmatpush1.msra.mxu0 0.0
  %1105 = vmatprep.subr.mxu0 0.0
  %1106 = vmatpush1.msra.mxu0 0.0
  %1107 = vmatprep.subr.mxu0 0.0
  %1108 = vmatpush1.msra.mxu0 0.0
  %1109 = vmatprep.subr.mxu0 0.0
  %1110 = vmatpush1.msra.mxu0 0.0
  %1111 = vmatprep.subr.mxu0 0.0
  %1112 = vmatpush1.msra.mxu0 0.0
  %1113 = vmatprep.subr.mxu0 0.0
  %1114 = vmatpush1.msra.mxu0 0.0
  %1115 = vmatprep.mubr.f32.mxu0 0.0
  %1116 = vmatmul.mubr.f32.gmra.mrb[0].mxu0 %v1049
  %v1117 = vpop.f32.mrb[0].mxu0
  %v1118 = vadd.f32 0.0, %v1117
  %v1119 = vpop.f32.mrb[0].mxu0
  %1120 = vdwg.mxu0
  %v1121 = vadd.f32 %v1048, %v1118
  %v1122 = vtanh.pop %v1121
  %v1123 = vxor.u32 %v1121, 2147483648
  %v1124 = vmul.f32 %v1123, 1.442695
  %v1125 = vpow.pop %v1124
  %v1126 = vadd.f32 %v1125, 1.0
  %v1127 = vrcp.pop %v1126
  %v1128 = vmul.f32 1.0, %v1127
  %v1129 = vsel %vm389, %v1122, %v1128
  %v1130 = vmul.f32 %v1129, %v928
  %1132 = vrot.lane.b32.xlu0 %v1129, 64
  %v1133 = vpop.permute.xlu0 %1132
  %v1135 = vmul.f32 %v1129, %v1133
  %1137 = vrot.lane.b32.xlu0 %v1135, 32
  %v1138 = vpop.permute.xlu0 %1137
  %v1140 = vadd.f32 %v1130, %v1138
  %v1141 = vtanh.pop %v1140
  %1143 = vrot.lane.b32.xlu0 %v1141, 64
  %v1144 = vpop.permute.xlu0 %1143
  %v1146 = vmul.f32 %v1129, %v1144
  %1148 = vrot.lane.b32.xlu0 %v1146, 32
  %v1149 = vpop.permute.xlu0 %1148
  %s1151 = scalar_lea.vmem %s8, 24
  %1152 = vst.msk [vmem:[%s1151] sm:$0xff] %vm403, %v1149
  %s1153 = scalar_lea.vmem [#allocation7], 32
  %v1154 = vld [vmem:[%s1153] sm:$0xff]
  %v1155 = vsel %vm403, %v1043, 0
  %1157 = vmatprep.subr.mxu0 0.0
  %1158 = vmatpush1.msra.mxu0 %v394
  %1159 = vmatprep.subr.mxu0 0.0
  %1160 = vmatpush1.msra.mxu0 %v395
  %1161 = vmatprep.subr.mxu0 0.0
  %1162 = vmatpush1.msra.mxu0 %v396
  %1163 = vmatprep.subr.mxu0 0.0
  %1164 = vmatpush1.msra.mxu0 %v397
  %1165 = vmatprep.subr.mxu0 0.0
  %1166 = vmatpush1.msra.mxu0 0.0
  %1167 = vmatprep.subr.mxu0 0.0
  %1168 = vmatpush1.msra.mxu0 0.0
  %1169 = vmatprep.subr.mxu0 0.0
  %1170 = vmatpush1.msra.mxu0 0.0
  %1171 = vmatprep.subr.mxu0 0.0
  %1172 = vmatpush1.msra.mxu0 0.0
  %1173 = vmatprep.subr.mxu0 0.0
  %1174 = vmatpush1.msra.mxu0 0.0
  %1175 = vmatprep.subr.mxu0 0.0
  %1176 = vmatpush1.msra.mxu0 0.0
  %1177 = vmatprep.subr.mxu0 0.0
  %1178 = vmatpush1.msra.mxu0 0.0
  %1179 = vmatprep.subr.mxu0 0.0
  %1180 = vmatpush1.msra.mxu0 0.0
  %1181 = vmatprep.subr.mxu0 0.0
  %1182 = vmatpush1.msra.mxu0 0.0
  %1183 = vmatprep.subr.mxu0 0.0
  %1184 = vmatpush1.msra.mxu0 0.0
  %1185 = vmatprep.subr.mxu0 0.0
  %1186 = vmatpush1.msra.mxu0 0.0
  %1187 = vmatprep.subr.mxu0 0.0
  %1188 = vmatpush1.msra.mxu0 0.0
  %1189 = vmatprep.subr.mxu0 0.0
  %1190 = vmatpush1.msra.mxu0 0.0
  %1191 = vmatprep.subr.mxu0 0.0
  %1192 = vmatpush1.msra.mxu0 0.0
  %1193 = vmatprep.subr.mxu0 0.0
  %1194 = vmatpush1.msra.mxu0 0.0
  %1195 = vmatprep.subr.mxu0 0.0
  %1196 = vmatpush1.msra.mxu0 0.0
  %1197 = vmatprep.subr.mxu0 0.0
  %1198 = vmatpush1.msra.mxu0 0.0
  %1199 = vmatprep.subr.mxu0 0.0
  %1200 = vmatpush1.msra.mxu0 0.0
  %1201 = vmatprep.subr.mxu0 0.0
  %1202 = vmatpush1.msra.mxu0 0.0
  %1203 = vmatprep.subr.mxu0 0.0
  %1204 = vmatpush1.msra.mxu0 0.0
  %1205 = vmatprep.subr.mxu0 0.0
  %1206 = vmatpush1.msra.mxu0 0.0
  %1207 = vmatprep.subr.mxu0 0.0
  %1208 = vmatpush1.msra.mxu0 0.0
  %1209 = vmatprep.subr.mxu0 0.0
  %1210 = vmatpush1.msra.mxu0 0.0
  %1211 = vmatprep.subr.mxu0 0.0
  %1212 = vmatpush1.msra.mxu0 0.0
  %1213 = vmatprep.subr.mxu0 0.0
  %1214 = vmatpush1.msra.mxu0 0.0
  %1215 = vmatprep.subr.mxu0 0.0
  %1216 = vmatpush1.msra.mxu0 0.0
  %1217 = vmatprep.subr.mxu0 0.0
  %1218 = vmatpush1.msra.mxu0 0.0
  %1219 = vmatprep.subr.mxu0 0.0
  %1220 = vmatpush1.msra.mxu0 0.0
  %1221 = vmatprep.mubr.f32.mxu0 0.0
  %1222 = vmatmul.mubr.f32.gmra.mrb[0].mxu0 %v1155
  %v1223 = vpop.f32.mrb[0].mxu0
  %v1224 = vadd.f32 0.0, %v1223
  %v1225 = vpop.f32.mrb[0].mxu0
  %1226 = vdwg.mxu0
  %v1227 = vadd.f32 %v1154, %v1224
  %v1228 = vtanh.pop %v1227
  %v1229 = vxor.u32 %v1227, 2147483648
  %v1230 = vmul.f32 %v1229, 1.442695
  %v1231 = vpow.pop %v1230
  %v1232 = vadd.f32 %v1231, 1.0
  %v1233 = vrcp.pop %v1232
  %v1234 = vmul.f32 1.0, %v1233
  %v1235 = vsel %vm389, %v1228, %v1234
  %v1236 = vmul.f32 %v1235, %v1034
  %1238 = vrot.lane.b32.xlu0 %v1235, 64
  %v1239 = vpop.permute.xlu0 %1238
  %v1241 = vmul.f32 %v1235, %v1239
  %1243 = vrot.lane.b32.xlu0 %v1241, 32
  %v1244 = vpop.permute.xlu0 %1243
  %v1246 = vadd.f32 %v1236, %v1244
  %v1247 = vtanh.pop %v1246
  %1249 = vrot.lane.b32.xlu0 %v1247, 64
  %v1250 = vpop.permute.xlu0 %1249
  %v1252 = vmul.f32 %v1235, %v1250
  %1254 = vrot.lane.b32.xlu0 %v1252, 32
  %v1255 = vpop.permute.xlu0 %1254
  %s1257 = scalar_lea.vmem %s64, 32
  %1258 = vst.msk [vmem:[%s1257] sm:$0xff] %vm403, %v1255
  %s1259 = scalar_lea.vmem [#allocation6], 32
  %v1260 = vld [vmem:[%s1259] sm:$0xff]
  %v1261 = vsel %vm403, %v1149, 0
  %1263 = vmatprep.subr.mxu0 0.0
  %1264 = vmatpush1.msra.mxu0 %v390
  %1265 = vmatprep.subr.mxu0 0.0
  %1266 = vmatpush1.msra.mxu0 %v391
  %1267 = vmatprep.subr.mxu0 0.0
  %1268 = vmatpush1.msra.mxu0 %v392
  %1269 = vmatprep.subr.mxu0 0.0
  %1270 = vmatpush1.msra.mxu0 %v393
  %1271 = vmatprep.subr.mxu0 0.0
  %1272 = vmatpush1.msra.mxu0 0.0
  %1273 = vmatprep.subr.mxu0 0.0
  %1274 = vmatpush1.msra.mxu0 0.0
  %1275 = vmatprep.subr.mxu0 0.0
  %1276 = vmatpush1.msra.mxu0 0.0
  %1277 = vmatprep.subr.mxu0 0.0
  %1278 = vmatpush1.msra.mxu0 0.0
  %1279 = vmatprep.subr.mxu0 0.0
  %1280 = vmatpush1.msra.mxu0 0.0
  %1281 = vmatprep.subr.mxu0 0.0
  %1282 = vmatpush1.msra.mxu0 0.0
  %1283 = vmatprep.subr.mxu0 0.0
  %1284 = vmatpush1.msra.mxu0 0.0
  %1285 = vmatprep.subr.mxu0 0.0
  %1286 = vmatpush1.msra.mxu0 0.0
  %1287 = vmatprep.subr.mxu0 0.0
  %1288 = vmatpush1.msra.mxu0 0.0
  %1289 = vmatprep.subr.mxu0 0.0
  %1290 = vmatpush1.msra.mxu0 0.0
  %1291 = vmatprep.subr.mxu0 0.0
  %1292 = vmatpush1.msra.mxu0 0.0
  %1293 = vmatprep.subr.mxu0 0.0
  %1294 = vmatpush1.msra.mxu0 0.0
  %1295 = vmatprep.subr.mxu0 0.0
  %1296 = vmatpush1.msra.mxu0 0.0
  %1297 = vmatprep.subr.mxu0 0.0
  %1298 = vmatpush1.msra.mxu0 0.0
  %1299 = vmatprep.subr.mxu0 0.0
  %1300 = vmatpush1.msra.mxu0 0.0
  %1301 = vmatprep.subr.mxu0 0.0
  %1302 = vmatpush1.msra.mxu0 0.0
  %1303 = vmatprep.subr.mxu0 0.0
  %1304 = vmatpush1.msra.mxu0 0.0
  %1305 = vmatprep.subr.mxu0 0.0
  %1306 = vmatpush1.msra.mxu0 0.0
  %1307 = vmatprep.subr.mxu0 0.0
  %1308 = vmatpush1.msra.mxu0 0.0
  %1309 = vmatprep.subr.mxu0 0.0
  %1310 = vmatpush1.msra.mxu0 0.0
  %1311 = vmatprep.subr.mxu0 0.0
  %1312 = vmatpush1.msra.mxu0 0.0
  %1313 = vmatprep.subr.mxu0 0.0
  %1314 = vmatpush1.msra.mxu0 0.0
  %1315 = vmatprep.subr.mxu0 0.0
  %1316 = vmatpush1.msra.mxu0 0.0
  %1317 = vmatprep.subr.mxu0 0.0
  %1318 = vmatpush1.msra.mxu0 0.0
  %1319 = vmatprep.subr.mxu0 0.0
  %1320 = vmatpush1.msra.mxu0 0.0
  %1321 = vmatprep.subr.mxu0 0.0
  %1322 = vmatpush1.msra.mxu0 0.0
  %1323 = vmatprep.subr.mxu0 0.0
  %1324 = vmatpush1.msra.mxu0 0.0
  %1325 = vmatprep.subr.mxu0 0.0
  %1326 = vmatpush1.msra.mxu0 0.0
  %1327 = vmatprep.mubr.f32.mxu0 0.0
  %1328 = vmatmul.mubr.f32.gmra.mrb[0].mxu0 %v1261
  %v1329 = vpop.f32.mrb[0].mxu0
  %v1330 = vadd.f32 0.0, %v1329
  %v1331 = vpop.f32.mrb[0].mxu0
  %1332 = vdwg.mxu0
  %v1333 = vadd.f32 %v1260, %v1330
  %v1334 = vtanh.pop %v1333
  %v1335 = vxor.u32 %v1333, 2147483648
  %v1336 = vmul.f32 %v1335, 1.442695
  %v1337 = vpow.pop %v1336
  %v1338 = vadd.f32 %v1337, 1.0
  %v1339 = vrcp.pop %v1338
  %v1340 = vmul.f32 1.0, %v1339
  %v1341 = vsel %vm389, %v1334, %v1340
  %v1342 = vmul.f32 %v1341, %v1140
  %1344 = vrot.lane.b32.xlu0 %v1341, 64
  %v1345 = vpop.permute.xlu0 %1344
  %v1347 = vmul.f32 %v1341, %v1345
  %1349 = vrot.lane.b32.xlu0 %v1347, 32
  %v1350 = vpop.permute.xlu0 %1349
  %v1352 = vadd.f32 %v1342, %v1350
  %v1353 = vtanh.pop %v1352
  %1355 = vrot.lane.b32.xlu0 %v1353, 64
  %v1356 = vpop.permute.xlu0 %1355
  %v1358 = vmul.f32 %v1341, %v1356
  %1360 = vrot.lane.b32.xlu0 %v1358, 32
  %v1361 = vpop.permute.xlu0 %1360
  %s1363 = scalar_lea.vmem %s8, 32
  %1364 = vst.msk [vmem:[%s1363] sm:$0xff] %vm403, %v1361
  %s1365 = scalar_lea.vmem [#allocation7], 24
  %v1366 = vld [vmem:[%s1365] sm:$0xff]
  %v1367 = vsel %vm403, %v1255, 0
  %1369 = vmatprep.subr.mxu0 0.0
  %1370 = vmatpush1.msra.mxu0 %v394
  %1371 = vmatprep.subr.mxu0 0.0
  %1372 = vmatpush1.msra.mxu0 %v395
  %1373 = vmatprep.subr.mxu0 0.0
  %1374 = vmatpush1.msra.mxu0 %v396
  %1375 = vmatprep.subr.mxu0 0.0
  %1376 = vmatpush1.msra.mxu0 %v397
  %1377 = vmatprep.subr.mxu0 0.0
  %1378 = vmatpush1.msra.mxu0 0.0
  %1379 = vmatprep.subr.mxu0 0.0
  %1380 = vmatpush1.msra.mxu0 0.0
  %1381 = vmatprep.subr.mxu0 0.0
  %1382 = vmatpush1.msra.mxu0 0.0
  %1383 = vmatprep.subr.mxu0 0.0
  %1384 = vmatpush1.msra.mxu0 0.0
  %1385 = vmatprep.subr.mxu0 0.0
  %1386 = vmatpush1.msra.mxu0 0.0
  %1387 = vmatprep.subr.mxu0 0.0
  %1388 = vmatpush1.msra.mxu0 0.0
  %1389 = vmatprep.subr.mxu0 0.0
  %1390 = vmatpush1.msra.mxu0 0.0
  %1391 = vmatprep.subr.mxu0 0.0
  %1392 = vmatpush1.msra.mxu0 0.0
  %1393 = vmatprep.subr.mxu0 0.0
  %1394 = vmatpush1.msra.mxu0 0.0
  %1395 = vmatprep.subr.mxu0 0.0
  %1396 = vmatpush1.msra.mxu0 0.0
  %1397 = vmatprep.subr.mxu0 0.0
  %1398 = vmatpush1.msra.mxu0 0.0
  %1399 = vmatprep.subr.mxu0 0.0
  %1400 = vmatpush1.msra.mxu0 0.0
  %1401 = vmatprep.subr.mxu0 0.0
  %1402 = vmatpush1.msra.mxu0 0.0
  %1403 = vmatprep.subr.mxu0 0.0
  %1404 = vmatpush1.msra.mxu0 0.0
  %1405 = vmatprep.subr.mxu0 0.0
  %1406 = vmatpush1.msra.mxu0 0.0
  %1407 = vmatprep.subr.mxu0 0.0
  %1408 = vmatpush1.msra.mxu0 0.0
  %1409 = vmatprep.subr.mxu0 0.0
  %1410 = vmatpush1.msra.mxu0 0.0
  %1411 = vmatprep.subr.mxu0 0.0
  %1412 = vmatpush1.msra.mxu0 0.0
  %1413 = vmatprep.subr.mxu0 0.0
  %1414 = vmatpush1.msra.mxu0 0.0
  %1415 = vmatprep.subr.mxu0 0.0
  %1416 = vmatpush1.msra.mxu0 0.0
  %1417 = vmatprep.subr.mxu0 0.0
  %1418 = vmatpush1.msra.mxu0 0.0
  %1419 = vmatprep.subr.mxu0 0.0
  %1420 = vmatpush1.msra.mxu0 0.0
  %1421 = vmatprep.subr.mxu0 0.0
  %1422 = vmatpush1.msra.mxu0 0.0
  %1423 = vmatprep.subr.mxu0 0.0
  %1424 = vmatpush1.msra.mxu0 0.0
  %1425 = vmatprep.subr.mxu0 0.0
  %1426 = vmatpush1.msra.mxu0 0.0
  %1427 = vmatprep.subr.mxu0 0.0
  %1428 = vmatpush1.msra.mxu0 0.0
  %1429 = vmatprep.subr.mxu0 0.0
  %1430 = vmatpush1.msra.mxu0 0.0
  %1431 = vmatprep.subr.mxu0 0.0
  %1432 = vmatpush1.msra.mxu0 0.0
  %1433 = vmatprep.mubr.f32.mxu0 0.0
  %1434 = vmatmul.mubr.f32.gmra.mrb[0].mxu0 %v1367
  %v1435 = vpop.f32.mrb[0].mxu0
  %v1436 = vadd.f32 0.0, %v1435
  %v1437 = vpop.f32.mrb[0].mxu0
  %1438 = vdwg.mxu0
  %v1439 = vadd.f32 %v1366, %v1436
  %v1440 = vtanh.pop %v1439
  %v1441 = vxor.u32 %v1439, 2147483648
  %v1442 = vmul.f32 %v1441, 1.442695
  %v1443 = vpow.pop %v1442
  %v1444 = vadd.f32 %v1443, 1.0
  %v1445 = vrcp.pop %v1444
  %v1446 = vmul.f32 1.0, %v1445
  %v1447 = vsel %vm389, %v1440, %v1446
  %v1448 = vmul.f32 %v1447, %v1246
  %1450 = vrot.lane.b32.xlu0 %v1447, 64
  %v1451 = vpop.permute.xlu0 %1450
  %v1453 = vmul.f32 %v1447, %v1451
  %1455 = vrot.lane.b32.xlu0 %v1453, 32
  %v1456 = vpop.permute.xlu0 %1455
  %v1458 = vadd.f32 %v1448, %v1456
  %v1459 = vtanh.pop %v1458
  %1461 = vrot.lane.b32.xlu0 %v1459, 64
  %v1462 = vpop.permute.xlu0 %1461
  %v1464 = vmul.f32 %v1447, %v1462
  %1466 = vrot.lane.b32.xlu0 %v1464, 32
  %v1467 = vpop.permute.xlu0 %1466
  %s1469 = scalar_lea.vmem %s64, 24
  %1470 = vst.msk [vmem:[%s1469] sm:$0xff] %vm403, %v1467
  %s1471 = scalar_lea.vmem [#allocation6], 40
  %v1472 = vld [vmem:[%s1471] sm:$0xff]
  %v1473 = vsel %vm403, %v1361, 0
  %1475 = vmatprep.subr.mxu0 0.0
  %1476 = vmatpush1.msra.mxu0 %v390
  %1477 = vmatprep.subr.mxu0 0.0
  %1478 = vmatpush1.msra.mxu0 %v391
  %1479 = vmatprep.subr.mxu0 0.0
  %1480 = vmatpush1.msra.mxu0 %v392
  %1481 = vmatprep.subr.mxu0 0.0
  %1482 = vmatpush1.msra.mxu0 %v393
  %1483 = vmatprep.subr.mxu0 0.0
  %1484 = vmatpush1.msra.mxu0 0.0
  %1485 = vmatprep.subr.mxu0 0.0
  %1486 = vmatpush1.msra.mxu0 0.0
  %1487 = vmatprep.subr.mxu0 0.0
  %1488 = vmatpush1.msra.mxu0 0.0
  %1489 = vmatprep.subr.mxu0 0.0
  %1490 = vmatpush1.msra.mxu0 0.0
  %1491 = vmatprep.subr.mxu0 0.0
  %1492 = vmatpush1.msra.mxu0 0.0
  %1493 = vmatprep.subr.mxu0 0.0
  %1494 = vmatpush1.msra.mxu0 0.0
  %1495 = vmatprep.subr.mxu0 0.0
  %1496 = vmatpush1.msra.mxu0 0.0
  %1497 = vmatprep.subr.mxu0 0.0
  %1498 = vmatpush1.msra.mxu0 0.0
  %1499 = vmatprep.subr.mxu0 0.0
  %1500 = vmatpush1.msra.mxu0 0.0
  %1501 = vmatprep.subr.mxu0 0.0
  %1502 = vmatpush1.msra.mxu0 0.0
  %1503 = vmatprep.subr.mxu0 0.0
  %1504 = vmatpush1.msra.mxu0 0.0
  %1505 = vmatprep.subr.mxu0 0.0
  %1506 = vmatpush1.msra.mxu0 0.0
  %1507 = vmatprep.subr.mxu0 0.0
  %1508 = vmatpush1.msra.mxu0 0.0
  %1509 = vmatprep.subr.mxu0 0.0
  %1510 = vmatpush1.msra.mxu0 0.0
  %1511 = vmatprep.subr.mxu0 0.0
  %1512 = vmatpush1.msra.mxu0 0.0
  %1513 = vmatprep.subr.mxu0 0.0
  %1514 = vmatpush1.msra.mxu0 0.0
  %1515 = vmatprep.subr.mxu0 0.0
  %1516 = vmatpush1.msra.mxu0 0.0
  %1517 = vmatprep.subr.mxu0 0.0
  %1518 = vmatpush1.msra.mxu0 0.0
  %1519 = vmatprep.subr.mxu0 0.0
  %1520 = vmatpush1.msra.mxu0 0.0
  %1521 = vmatprep.subr.mxu0 0.0
  %1522 = vmatpush1.msra.mxu0 0.0
  %1523 = vmatprep.subr.mxu0 0.0
  %1524 = vmatpush1.msra.mxu0 0.0
  %1525 = vmatprep.subr.mxu0 0.0
  %1526 = vmatpush1.msra.mxu0 0.0
  %1527 = vmatprep.subr.mxu0 0.0
  %1528 = vmatpush1.msra.mxu0 0.0
  %1529 = vmatprep.subr.mxu0 0.0
  %1530 = vmatpush1.msra.mxu0 0.0
  %1531 = vmatprep.subr.mxu0 0.0
  %1532 = vmatpush1.msra.mxu0 0.0
  %1533 = vmatprep.subr.mxu0 0.0
  %1534 = vmatpush1.msra.mxu0 0.0
  %1535 = vmatprep.subr.mxu0 0.0
  %1536 = vmatpush1.msra.mxu0 0.0
  %1537 = vmatprep.subr.mxu0 0.0
  %1538 = vmatpush1.msra.mxu0 0.0
  %1539 = vmatprep.mubr.f32.mxu0 0.0
  %1540 = vmatmul.mubr.f32.gmra.mrb[0].mxu0 %v1473
  %v1541 = vpop.f32.mrb[0].mxu0
  %v1542 = vadd.f32 0.0, %v1541
  %v1543 = vpop.f32.mrb[0].mxu0
  %1544 = vdwg.mxu0
  %v1545 = vadd.f32 %v1472, %v1542
  %v1546 = vtanh.pop %v1545
  %v1547 = vxor.u32 %v1545, 2147483648
  %v1548 = vmul.f32 %v1547, 1.442695
  %v1549 = vpow.pop %v1548
  %v1550 = vadd.f32 %v1549, 1.0
  %v1551 = vrcp.pop %v1550
  %v1552 = vmul.f32 1.0, %v1551
  %v1553 = vsel %vm389, %v1546, %v1552
  %v1554 = vmul.f32 %v1553, %v1352
  %1556 = vrot.lane.b32.xlu0 %v1553, 64
  %v1557 = vpop.permute.xlu0 %1556
  %v1559 = vmul.f32 %v1553, %v1557
  %1561 = vrot.lane.b32.xlu0 %v1559, 32
  %v1562 = vpop.permute.xlu0 %1561
  %v1564 = vadd.f32 %v1554, %v1562
  %v1565 = vtanh.pop %v1564
  %1567 = vrot.lane.b32.xlu0 %v1565, 64
  %v1568 = vpop.permute.xlu0 %1567
  %v1570 = vmul.f32 %v1553, %v1568
  %1572 = vrot.lane.b32.xlu0 %v1570, 32
  %v1573 = vpop.permute.xlu0 %1572
  %s1575 = scalar_lea.vmem %s8, 40
  %1576 = vst.msk [vmem:[%s1575] sm:$0xff] %vm403, %v1573
  %s1577 = scalar_lea.vmem [#allocation7], 16
  %v1578 = vld [vmem:[%s1577] sm:$0xff]
  %v1579 = vsel %vm403, %v1467, 0
  %1581 = vmatprep.subr.mxu0 0.0
  %1582 = vmatpush1.msra.mxu0 %v394
  %1583 = vmatprep.subr.mxu0 0.0
  %1584 = vmatpush1.msra.mxu0 %v395
  %1585 = vmatprep.subr.mxu0 0.0
  %1586 = vmatpush1.msra.mxu0 %v396
  %1587 = vmatprep.subr.mxu0 0.0
  %1588 = vmatpush1.msra.mxu0 %v397
  %1589 = vmatprep.subr.mxu0 0.0
  %1590 = vmatpush1.msra.mxu0 0.0
  %1591 = vmatprep.subr.mxu0 0.0
  %1592 = vmatpush1.msra.mxu0 0.0
  %1593 = vmatprep.subr.mxu0 0.0
  %1594 = vmatpush1.msra.mxu0 0.0
  %1595 = vmatprep.subr.mxu0 0.0
  %1596 = vmatpush1.msra.mxu0 0.0
  %1597 = vmatprep.subr.mxu0 0.0
  %1598 = vmatpush1.msra.mxu0 0.0
  %1599 = vmatprep.subr.mxu0 0.0
  %1600 = vmatpush1.msra.mxu0 0.0
  %1601 = vmatprep.subr.mxu0 0.0
  %1602 = vmatpush1.msra.mxu0 0.0
  %1603 = vmatprep.subr.mxu0 0.0
  %1604 = vmatpush1.msra.mxu0 0.0
  %1605 = vmatprep.subr.mxu0 0.0
  %1606 = vmatpush1.msra.mxu0 0.0
  %1607 = vmatprep.subr.mxu0 0.0
  %1608 = vmatpush1.msra.mxu0 0.0
  %1609 = vmatprep.subr.mxu0 0.0
  %1610 = vmatpush1.msra.mxu0 0.0
  %1611 = vmatprep.subr.mxu0 0.0
  %1612 = vmatpush1.msra.mxu0 0.0
  %1613 = vmatprep.subr.mxu0 0.0
  %1614 = vmatpush1.msra.mxu0 0.0
  %1615 = vmatprep.subr.mxu0 0.0
  %1616 = vmatpush1.msra.mxu0 0.0
  %1617 = vmatprep.subr.mxu0 0.0
  %1618 = vmatpush1.msra.mxu0 0.0
  %1619 = vmatprep.subr.mxu0 0.0
  %1620 = vmatpush1.msra.mxu0 0.0
  %1621 = vmatprep.subr.mxu0 0.0
  %1622 = vmatpush1.msra.mxu0 0.0
  %1623 = vmatprep.subr.mxu0 0.0
  %1624 = vmatpush1.msra.mxu0 0.0
  %1625 = vmatprep.subr.mxu0 0.0
  %1626 = vmatpush1.msra.mxu0 0.0
  %1627 = vmatprep.subr.mxu0 0.0
  %1628 = vmatpush1.msra.mxu0 0.0
  %1629 = vmatprep.subr.mxu0 0.0
  %1630 = vmatpush1.msra.mxu0 0.0
  %1631 = vmatprep.subr.mxu0 0.0
  %1632 = vmatpush1.msra.mxu0 0.0
  %1633 = vmatprep.subr.mxu0 0.0
  %1634 = vmatpush1.msra.mxu0 0.0
  %1635 = vmatprep.subr.mxu0 0.0
  %1636 = vmatpush1.msra.mxu0 0.0
  %1637 = vmatprep.subr.mxu0 0.0
  %1638 = vmatpush1.msra.mxu0 0.0
  %1639 = vmatprep.subr.mxu0 0.0
  %1640 = vmatpush1.msra.mxu0 0.0
  %1641 = vmatprep.subr.mxu0 0.0
  %1642 = vmatpush1.msra.mxu0 0.0
  %1643 = vmatprep.subr.mxu0 0.0
  %1644 = vmatpush1.msra.mxu0 0.0
  %1645 = vmatprep.mubr.f32.mxu0 0.0
  %1646 = vmatmul.mubr.f32.gmra.mrb[0].mxu0 %v1579
  %v1647 = vpop.f32.mrb[0].mxu0
  %v1648 = vadd.f32 0.0, %v1647
  %v1649 = vpop.f32.mrb[0].mxu0
  %1650 = vdwg.mxu0
  %v1651 = vadd.f32 %v1578, %v1648
  %v1652 = vtanh.pop %v1651
  %v1653 = vxor.u32 %v1651, 2147483648
  %v1654 = vmul.f32 %v1653, 1.442695
  %v1655 = vpow.pop %v1654
  %v1656 = vadd.f32 %v1655, 1.0
  %v1657 = vrcp.pop %v1656
  %v1658 = vmul.f32 1.0, %v1657
  %v1659 = vsel %vm389, %v1652, %v1658
  %v1660 = vmul.f32 %v1659, %v1458
  %1662 = vrot.lane.b32.xlu0 %v1659, 64
  %v1663 = vpop.permute.xlu0 %1662
  %v1665 = vmul.f32 %v1659, %v1663
  %1667 = vrot.lane.b32.xlu0 %v1665, 32
  %v1668 = vpop.permute.xlu0 %1667
  %v1670 = vadd.f32 %v1660, %v1668
  %v1671 = vtanh.pop %v1670
  %1673 = vrot.lane.b32.xlu0 %v1671, 64
  %v1674 = vpop.permute.xlu0 %1673
  %v1676 = vmul.f32 %v1659, %v1674
  %1678 = vrot.lane.b32.xlu0 %v1676, 32
  %v1679 = vpop.permute.xlu0 %1678
  %s1681 = scalar_lea.vmem %s64, 16
  %1682 = vst.msk [vmem:[%s1681] sm:$0xff] %vm403, %v1679
  %s1683 = scalar_lea.vmem [#allocation6], 48
  %v1684 = vld [vmem:[%s1683] sm:$0xff]
  %v1685 = vsel %vm403, %v1573, 0
  %1687 = vmatprep.subr.mxu0 0.0
  %1688 = vmatpush1.msra.mxu0 %v390
  %1689 = vmatprep.subr.mxu0 0.0
  %1690 = vmatpush1.msra.mxu0 %v391
  %1691 = vmatprep.subr.mxu0 0.0
  %1692 = vmatpush1.msra.mxu0 %v392
  %1693 = vmatprep.subr.mxu0 0.0
  %1694 = vmatpush1.msra.mxu0 %v393
  %1695 = vmatprep.subr.mxu0 0.0
  %1696 = vmatpush1.msra.mxu0 0.0
  %1697 = vmatprep.subr.mxu0 0.0
  %1698 = vmatpush1.msra.mxu0 0.0
  %1699 = vmatprep.subr.mxu0 0.0
  %1700 = vmatpush1.msra.mxu0 0.0
  %1701 = vmatprep.subr.mxu0 0.0
  %1702 = vmatpush1.msra.mxu0 0.0
  %1703 = vmatprep.subr.mxu0 0.0
  %1704 = vmatpush1.msra.mxu0 0.0
  %1705 = vmatprep.subr.mxu0 0.0
  %1706 = vmatpush1.msra.mxu0 0.0
  %1707 = vmatprep.subr.mxu0 0.0
  %1708 = vmatpush1.msra.mxu0 0.0
  %1709 = vmatprep.subr.mxu0 0.0
  %1710 = vmatpush1.msra.mxu0 0.0
  %1711 = vmatprep.subr.mxu0 0.0
  %1712 = vmatpush1.msra.mxu0 0.0
  %1713 = vmatprep.subr.mxu0 0.0
  %1714 = vmatpush1.msra.mxu0 0.0
  %1715 = vmatprep.subr.mxu0 0.0
  %1716 = vmatpush1.msra.mxu0 0.0
  %1717 = vmatprep.subr.mxu0 0.0
  %1718 = vmatpush1.msra.mxu0 0.0
  %1719 = vmatprep.subr.mxu0 0.0
  %1720 = vmatpush1.msra.mxu0 0.0
  %1721 = vmatprep.subr.mxu0 0.0
  %1722 = vmatpush1.msra.mxu0 0.0
  %1723 = vmatprep.subr.mxu0 0.0
  %1724 = vmatpush1.msra.mxu0 0.0
  %1725 = vmatprep.subr.mxu0 0.0
  %1726 = vmatpush1.msra.mxu0 0.0
  %1727 = vmatprep.subr.mxu0 0.0
  %1728 = vmatpush1.msra.mxu0 0.0
  %1729 = vmatprep.subr.mxu0 0.0
  %1730 = vmatpush1.msra.mxu0 0.0
  %1731 = vmatprep.subr.mxu0 0.0
  %1732 = vmatpush1.msra.mxu0 0.0
  %1733 = vmatprep.subr.mxu0 0.0
  %1734 = vmatpush1.msra.mxu0 0.0
  %1735 = vmatprep.subr.mxu0 0.0
  %1736 = vmatpush1.msra.mxu0 0.0
  %1737 = vmatprep.subr.mxu0 0.0
  %1738 = vmatpush1.msra.mxu0 0.0
  %1739 = vmatprep.subr.mxu0 0.0
  %1740 = vmatpush1.msra.mxu0 0.0
  %1741 = vmatprep.subr.mxu0 0.0
  %1742 = vmatpush1.msra.mxu0 0.0
  %1743 = vmatprep.subr.mxu0 0.0
  %1744 = vmatpush1.msra.mxu0 0.0
  %1745 = vmatprep.subr.mxu0 0.0
  %1746 = vmatpush1.msra.mxu0 0.0
  %1747 = vmatprep.subr.mxu0 0.0
  %1748 = vmatpush1.msra.mxu0 0.0
  %1749 = vmatprep.subr.mxu0 0.0
  %1750 = vmatpush1.msra.mxu0 0.0
  %1751 = vmatprep.mubr.f32.mxu0 0.0
  %1752 = vmatmul.mubr.f32.gmra.mrb[0].mxu0 %v1685
  %v1753 = vpop.f32.mrb[0].mxu0
  %v1754 = vadd.f32 0.0, %v1753
  %v1755 = vpop.f32.mrb[0].mxu0
  %1756 = vdwg.mxu0
  %v1757 = vadd.f32 %v1684, %v1754
  %v1758 = vtanh.pop %v1757
  %v1759 = vxor.u32 %v1757, 2147483648
  %v1760 = vmul.f32 %v1759, 1.442695
  %v1761 = vpow.pop %v1760
  %v1762 = vadd.f32 %v1761, 1.0
  %v1763 = vrcp.pop %v1762
  %v1764 = vmul.f32 1.0, %v1763
  %v1765 = vsel %vm389, %v1758, %v1764
  %v1766 = vmul.f32 %v1765, %v1564
  %1768 = vrot.lane.b32.xlu0 %v1765, 64
  %v1769 = vpop.permute.xlu0 %1768
  %v1771 = vmul.f32 %v1765, %v1769
  %1773 = vrot.lane.b32.xlu0 %v1771, 32
  %v1774 = vpop.permute.xlu0 %1773
  %v1776 = vadd.f32 %v1766, %v1774
  %v1777 = vtanh.pop %v1776
  %1779 = vrot.lane.b32.xlu0 %v1777, 64
  %v1780 = vpop.permute.xlu0 %1779
  %v1782 = vmul.f32 %v1765, %v1780
  %1784 = vrot.lane.b32.xlu0 %v1782, 32
  %v1785 = vpop.permute.xlu0 %1784
  %s1787 = scalar_lea.vmem %s8, 48
  %1788 = vst.msk [vmem:[%s1787] sm:$0xff] %vm403, %v1785
  %s1789 = scalar_lea.vmem [#allocation7], 8
  %v1790 = vld [vmem:[%s1789] sm:$0xff]
  %v1791 = vsel %vm403, %v1679, 0
  %1793 = vmatprep.subr.mxu0 0.0
  %1794 = vmatpush1.msra.mxu0 %v394
  %1795 = vmatprep.subr.mxu0 0.0
  %1796 = vmatpush1.msra.mxu0 %v395
  %1797 = vmatprep.subr.mxu0 0.0
  %1798 = vmatpush1.msra.mxu0 %v396
  %1799 = vmatprep.subr.mxu0 0.0
  %1800 = vmatpush1.msra.mxu0 %v397
  %1801 = vmatprep.subr.mxu0 0.0
  %1802 = vmatpush1.msra.mxu0 0.0
  %1803 = vmatprep.subr.mxu0 0.0
  %1804 = vmatpush1.msra.mxu0 0.0
  %1805 = vmatprep.subr.mxu0 0.0
  %1806 = vmatpush1.msra.mxu0 0.0
  %1807 = vmatprep.subr.mxu0 0.0
  %1808 = vmatpush1.msra.mxu0 0.0
  %1809 = vmatprep.subr.mxu0 0.0
  %1810 = vmatpush1.msra.mxu0 0.0
  %1811 = vmatprep.subr.mxu0 0.0
  %1812 = vmatpush1.msra.mxu0 0.0
  %1813 = vmatprep.subr.mxu0 0.0
  %1814 = vmatpush1.msra.mxu0 0.0
  %1815 = vmatprep.subr.mxu0 0.0
  %1816 = vmatpush1.msra.mxu0 0.0
  %1817 = vmatprep.subr.mxu0 0.0
  %1818 = vmatpush1.msra.mxu0 0.0
  %1819 = vmatprep.subr.mxu0 0.0
  %1820 = vmatpush1.msra.mxu0 0.0
  %1821 = vmatprep.subr.mxu0 0.0
  %1822 = vmatpush1.msra.mxu0 0.0
  %1823 = vmatprep.subr.mxu0 0.0
  %1824 = vmatpush1.msra.mxu0 0.0
  %1825 = vmatprep.subr.mxu0 0.0
  %1826 = vmatpush1.msra.mxu0 0.0
  %1827 = vmatprep.subr.mxu0 0.0
  %1828 = vmatpush1.msra.mxu0 0.0
  %1829 = vmatprep.subr.mxu0 0.0
  %1830 = vmatpush1.msra.mxu0 0.0
  %1831 = vmatprep.subr.mxu0 0.0
  %1832 = vmatpush1.msra.mxu0 0.0
  %1833 = vmatprep.subr.mxu0 0.0
  %1834 = vmatpush1.msra.mxu0 0.0
  %1835 = vmatprep.subr.mxu0 0.0
  %1836 = vmatpush1.msra.mxu0 0.0
  %1837 = vmatprep.subr.mxu0 0.0
  %1838 = vmatpush1.msra.mxu0 0.0
  %1839 = vmatprep.subr.mxu0 0.0
  %1840 = vmatpush1.msra.mxu0 0.0
  %1841 = vmatprep.subr.mxu0 0.0
  %1842 = vmatpush1.msra.mxu0 0.0
  %1843 = vmatprep.subr.mxu0 0.0
  %1844 = vmatpush1.msra.mxu0 0.0
  %1845 = vmatprep.subr.mxu0 0.0
  %1846 = vmatpush1.msra.mxu0 0.0
  %1847 = vmatprep.subr.mxu0 0.0
  %1848 = vmatpush1.msra.mxu0 0.0
  %1849 = vmatprep.subr.mxu0 0.0
  %1850 = vmatpush1.msra.mxu0 0.0
  %1851 = vmatprep.subr.mxu0 0.0
  %1852 = vmatpush1.msra.mxu0 0.0
  %1853 = vmatprep.subr.mxu0 0.0
  %1854 = vmatpush1.msra.mxu0 0.0
  %1855 = vmatprep.subr.mxu0 0.0
  %1856 = vmatpush1.msra.mxu0 0.0
  %1857 = vmatprep.mubr.f32.mxu0 0.0
  %1858 = vmatmul.mubr.f32.gmra.mrb[0].mxu0 %v1791
  %v1859 = vpop.f32.mrb[0].mxu0
  %v1860 = vadd.f32 0.0, %v1859
  %v1861 = vpop.f32.mrb[0].mxu0
  %1862 = vdwg.mxu0
  %v1863 = vadd.f32 %v1790, %v1860
  %v1864 = vtanh.pop %v1863
  %v1865 = vxor.u32 %v1863, 2147483648
  %v1866 = vmul.f32 %v1865, 1.442695
  %v1867 = vpow.pop %v1866
  %v1868 = vadd.f32 %v1867, 1.0
  %v1869 = vrcp.pop %v1868
  %v1870 = vmul.f32 1.0, %v1869
  %v1871 = vsel %vm389, %v1864, %v1870
  %v1872 = vmul.f32 %v1871, %v1670
  %1874 = vrot.lane.b32.xlu0 %v1871, 64
  %v1875 = vpop.permute.xlu0 %1874
  %v1877 = vmul.f32 %v1871, %v1875
  %1879 = vrot.lane.b32.xlu0 %v1877, 32
  %v1880 = vpop.permute.xlu0 %1879
  %v1882 = vadd.f32 %v1872, %v1880
  %v1883 = vtanh.pop %v1882
  %1885 = vrot.lane.b32.xlu0 %v1883, 64
  %v1886 = vpop.permute.xlu0 %1885
  %v1888 = vmul.f32 %v1871, %v1886
  %1890 = vrot.lane.b32.xlu0 %v1888, 32
  %v1891 = vpop.permute.xlu0 %1890
  %s1893 = scalar_lea.vmem %s64, 8
  %1894 = vst.msk [vmem:[%s1893] sm:$0xff] %vm403, %v1891
  %s1895 = scalar_lea.vmem [#allocation6], 56
  %v1896 = vld [vmem:[%s1895] sm:$0xff]
  %v1897 = vsel %vm403, %v1785, 0
  %1899 = vmatprep.subr.mxu0 0.0
  %1900 = vmatpush1.msra.mxu0 %v390
  %1901 = vmatprep.subr.mxu0 0.0
  %1902 = vmatpush1.msra.mxu0 %v391
  %1903 = vmatprep.subr.mxu0 0.0
  %1904 = vmatpush1.msra.mxu0 %v392
  %1905 = vmatprep.subr.mxu0 0.0
  %1906 = vmatpush1.msra.mxu0 %v393
  %1907 = vmatprep.subr.mxu0 0.0
  %1908 = vmatpush1.msra.mxu0 0.0
  %1909 = vmatprep.subr.mxu0 0.0
  %1910 = vmatpush1.msra.mxu0 0.0
  %1911 = vmatprep.subr.mxu0 0.0
  %1912 = vmatpush1.msra.mxu0 0.0
  %1913 = vmatprep.subr.mxu0 0.0
  %1914 = vmatpush1.msra.mxu0 0.0
  %1915 = vmatprep.subr.mxu0 0.0
  %1916 = vmatpush1.msra.mxu0 0.0
  %1917 = vmatprep.subr.mxu0 0.0
  %1918 = vmatpush1.msra.mxu0 0.0
  %1919 = vmatprep.subr.mxu0 0.0
  %1920 = vmatpush1.msra.mxu0 0.0
  %1921 = vmatprep.subr.mxu0 0.0
  %1922 = vmatpush1.msra.mxu0 0.0
  %1923 = vmatprep.subr.mxu0 0.0
  %1924 = vmatpush1.msra.mxu0 0.0
  %1925 = vmatprep.subr.mxu0 0.0
  %1926 = vmatpush1.msra.mxu0 0.0
  %1927 = vmatprep.subr.mxu0 0.0
  %1928 = vmatpush1.msra.mxu0 0.0
  %1929 = vmatprep.subr.mxu0 0.0
  %1930 = vmatpush1.msra.mxu0 0.0
  %1931 = vmatprep.subr.mxu0 0.0
  %1932 = vmatpush1.msra.mxu0 0.0
  %1933 = vmatprep.subr.mxu0 0.0
  %1934 = vmatpush1.msra.mxu0 0.0
  %1935 = vmatprep.subr.mxu0 0.0
  %1936 = vmatpush1.msra.mxu0 0.0
  %1937 = vmatprep.subr.mxu0 0.0
  %1938 = vmatpush1.msra.mxu0 0.0
  %1939 = vmatprep.subr.mxu0 0.0
  %1940 = vmatpush1.msra.mxu0 0.0
  %1941 = vmatprep.subr.mxu0 0.0
  %1942 = vmatpush1.msra.mxu0 0.0
  %1943 = vmatprep.subr.mxu0 0.0
  %1944 = vmatpush1.msra.mxu0 0.0
  %1945 = vmatprep.subr.mxu0 0.0
  %1946 = vmatpush1.msra.mxu0 0.0
  %1947 = vmatprep.subr.mxu0 0.0
  %1948 = vmatpush1.msra.mxu0 0.0
  %1949 = vmatprep.subr.mxu0 0.0
  %1950 = vmatpush1.msra.mxu0 0.0
  %1951 = vmatprep.subr.mxu0 0.0
  %1952 = vmatpush1.msra.mxu0 0.0
  %1953 = vmatprep.subr.mxu0 0.0
  %1954 = vmatpush1.msra.mxu0 0.0
  %1955 = vmatprep.subr.mxu0 0.0
  %1956 = vmatpush1.msra.mxu0 0.0
  %1957 = vmatprep.subr.mxu0 0.0
  %1958 = vmatpush1.msra.mxu0 0.0
  %1959 = vmatprep.subr.mxu0 0.0
  %1960 = vmatpush1.msra.mxu0 0.0
  %1961 = vmatprep.subr.mxu0 0.0
  %1962 = vmatpush1.msra.mxu0 0.0
  %1963 = vmatprep.mubr.f32.mxu0 0.0
  %1964 = vmatmul.mubr.f32.gmra.mrb[0].mxu0 %v1897
  %v1965 = vpop.f32.mrb[0].mxu0
  %v1966 = vadd.f32 0.0, %v1965
  %v1967 = vpop.f32.mrb[0].mxu0
  %1968 = vdwg.mxu0
  %v1969 = vadd.f32 %v1896, %v1966
  %v1970 = vtanh.pop %v1969
  %v1971 = vxor.u32 %v1969, 2147483648
  %v1972 = vmul.f32 %v1971, 1.442695
  %v1973 = vpow.pop %v1972
  %v1974 = vadd.f32 %v1973, 1.0
  %v1975 = vrcp.pop %v1974
  %v1976 = vmul.f32 1.0, %v1975
  %v1977 = vsel %vm389, %v1970, %v1976
  %v1978 = vmul.f32 %v1977, %v1776
  %1980 = vrot.lane.b32.xlu0 %v1977, 64
  %v1981 = vpop.permute.xlu0 %1980
  %v1983 = vmul.f32 %v1977, %v1981
  %1985 = vrot.lane.b32.xlu0 %v1983, 32
  %v1986 = vpop.permute.xlu0 %1985
  %v1988 = vadd.f32 %v1978, %v1986
  %v1989 = vtanh.pop %v1988
  %1991 = vrot.lane.b32.xlu0 %v1989, 64
  %v1992 = vpop.permute.xlu0 %1991
  %v1994 = vmul.f32 %v1977, %v1992
  %1996 = vrot.lane.b32.xlu0 %v1994, 32
  %v1997 = vpop.permute.xlu0 %1996
  %s1999 = scalar_lea.vmem %s8, 56
  %2000 = vst.msk [vmem:[%s1999] sm:$0xff] %vm403, %v1997
  %v2001 = vld [vmem:[#allocation7] sm:$0xff]
  %v2002 = vsel %vm403, %v1891, 0
  %2004 = vmatprep.subr.mxu0 0.0
  %2005 = vmatpush1.msra.mxu0 %v394
  %2006 = vmatprep.subr.mxu0 0.0
  %2007 = vmatpush1.msra.mxu0 %v395
  %2008 = vmatprep.subr.mxu0 0.0
  %2009 = vmatpush1.msra.mxu0 %v396
  %2010 = vmatprep.subr.mxu0 0.0
  %2011 = vmatpush1.msra.mxu0 %v397
  %2012 = vmatprep.subr.mxu0 0.0
  %2013 = vmatpush1.msra.mxu0 0.0
  %2014 = vmatprep.subr.mxu0 0.0
  %2015 = vmatpush1.msra.mxu0 0.0
  %2016 = vmatprep.subr.mxu0 0.0
  %2017 = vmatpush1.msra.mxu0 0.0
  %2018 = vmatprep.subr.mxu0 0.0
  %2019 = vmatpush1.msra.mxu0 0.0
  %2020 = vmatprep.subr.mxu0 0.0
  %2021 = vmatpush1.msra.mxu0 0.0
  %2022 = vmatprep.subr.mxu0 0.0
  %2023 = vmatpush1.msra.mxu0 0.0
  %2024 = vmatprep.subr.mxu0 0.0
  %2025 = vmatpush1.msra.mxu0 0.0
  %2026 = vmatprep.subr.mxu0 0.0
  %2027 = vmatpush1.msra.mxu0 0.0
  %2028 = vmatprep.subr.mxu0 0.0
  %2029 = vmatpush1.msra.mxu0 0.0
  %2030 = vmatprep.subr.mxu0 0.0
  %2031 = vmatpush1.msra.mxu0 0.0
  %2032 = vmatprep.subr.mxu0 0.0
  %2033 = vmatpush1.msra.mxu0 0.0
  %2034 = vmatprep.subr.mxu0 0.0
  %2035 = vmatpush1.msra.mxu0 0.0
  %2036 = vmatprep.subr.mxu0 0.0
  %2037 = vmatpush1.msra.mxu0 0.0
  %2038 = vmatprep.subr.mxu0 0.0
  %2039 = vmatpush1.msra.mxu0 0.0
  %2040 = vmatprep.subr.mxu0 0.0
  %2041 = vmatpush1.msra.mxu0 0.0
  %2042 = vmatprep.subr.mxu0 0.0
  %2043 = vmatpush1.msra.mxu0 0.0
  %2044 = vmatprep.subr.mxu0 0.0
  %2045 = vmatpush1.msra.mxu0 0.0
  %2046 = vmatprep.subr.mxu0 0.0
  %2047 = vmatpush1.msra.mxu0 0.0
  %2048 = vmatprep.subr.mxu0 0.0
  %2049 = vmatpush1.msra.mxu0 0.0
  %2050 = vmatprep.subr.mxu0 0.0
  %2051 = vmatpush1.msra.mxu0 0.0
  %2052 = vmatprep.subr.mxu0 0.0
  %2053 = vmatpush1.msra.mxu0 0.0
  %2054 = vmatprep.subr.mxu0 0.0
  %2055 = vmatpush1.msra.mxu0 0.0
  %2056 = vmatprep.subr.mxu0 0.0
  %2057 = vmatpush1.msra.mxu0 0.0
  %2058 = vmatprep.subr.mxu0 0.0
  %2059 = vmatpush1.msra.mxu0 0.0
  %2060 = vmatprep.subr.mxu0 0.0
  %2061 = vmatpush1.msra.mxu0 0.0
  %2062 = vmatprep.subr.mxu0 0.0
  %2063 = vmatpush1.msra.mxu0 0.0
  %2064 = vmatprep.subr.mxu0 0.0
  %2065 = vmatpush1.msra.mxu0 0.0
  %2066 = vmatprep.subr.mxu0 0.0
  %2067 = vmatpush1.msra.mxu0 0.0
  %2068 = vmatprep.mubr.f32.mxu0 0.0
  %2069 = vmatmul.mubr.f32.gmra.mrb[0].mxu0 %v2002
  %v2070 = vpop.f32.mrb[0].mxu0
  %v2071 = vadd.f32 0.0, %v2070
  %v2072 = vpop.f32.mrb[0].mxu0
  %2073 = vdwg.mxu0
  %v2074 = vadd.f32 %v2001, %v2071
  %v2075 = vtanh.pop %v2074
  %v2076 = vxor.u32 %v2074, 2147483648
  %v2077 = vmul.f32 %v2076, 1.442695
  %v2078 = vpow.pop %v2077
  %v2079 = vadd.f32 %v2078, 1.0
  %v2080 = vrcp.pop %v2079
  %v2081 = vmul.f32 1.0, %v2080
  %v2082 = vsel %vm389, %v2075, %v2081
  %v2083 = vmul.f32 %v2082, %v1882
  %2085 = vrot.lane.b32.xlu0 %v2082, 64
  %v2086 = vpop.permute.xlu0 %2085
  %v2088 = vmul.f32 %v2082, %v2086
  %2090 = vrot.lane.b32.xlu0 %v2088, 32
  %v2091 = vpop.permute.xlu0 %2090
  %v2093 = vadd.f32 %v2083, %v2091
  %v2094 = vtanh.pop %v2093
  %2096 = vrot.lane.b32.xlu0 %v2094, 64
  %v2097 = vpop.permute.xlu0 %2096
  %v2099 = vmul.f32 %v2082, %v2097
  %2101 = vrot.lane.b32.xlu0 %v2099, 32
  %v2102 = vpop.permute.xlu0 %2101
  %2104 = vst.msk [vmem:[%s64] sm:$0xff] %vm403, %v2102
  %2105 = vst.msk [vmem:[#allocation2] sm:$0xff] %vm403, %v1997
  %2107 = vrot.lane.b32.xlu0 %v1988, 96
  %v2108 = vpop.permute.xlu0 %2107
  %2110 = vst.msk [vmem:[#allocation3] sm:$0xff] %vm403, %v2108
  %2111 = vst.msk [vmem:[#allocation4] sm:$0xff] %vm403, %v2102
  %2113 = vrot.lane.b32.xlu0 %v2093, 96
  %v2114 = vpop.permute.xlu0 %2113
  %2116 = vst.msk [vmem:[#allocation5] sm:$0xff] %vm403, %v2114
  %s2117 = ssub.s32 0, 0
  %s2118 = smul.u32 8, %s2117
  %p2119 = scmp.lt.s32.totalorder %s2118, 7
  %s2120 = scalar_select %p2119, %s2118, 7
  %s2121 = smul.addr %s2120, 8
  %s2122 = scalar_lea.vmem %s9, %s2121
  // Predicated region
  $region38: #{lstm_forward.2} parent=0 // pred_check
    _
  $region39: #{lstm_forward.2} parent=0 // pred_check_branch
    %2124 = sbr.rel (0) target = $region41
  $region40: #{lstm_forward.2} parent=0 // pred_region
    _
  $region41: #{lstm_forward.2} parent=0 // pred_fallthru
    _
  // Predicated region
  $region42: #{lstm_forward.2} parent=0 // pred_check
    _
  $region43: #{lstm_forward.2} parent=0 // pred_check_branch
    %2126 = sbr.rel (0) target = $region45
  $region44: #{lstm_forward.2} parent=0 // pred_region
    %s2127 = ssub.s32 0, 0
    %s2128 = smul.u32 8, %s2127
  $region45: #{lstm_forward.2} parent=0 // pred_fallthru
    _
  // Predicated region
  $region46: #{lstm_forward.2} parent=0 // pred_check
    _
  $region47: #{lstm_forward.2} parent=0 // pred_check_branch
    %2130 = sbr.rel (0) target = $region49
  $region48: #{lstm_forward.2} parent=0 // pred_region
    _
  $region49: #{lstm_forward.2} parent=0 // pred_fallthru
    _
  // Predicated region
  $region50: #{lstm_forward.2} parent=0 // pred_check
    _
  $region51: #{lstm_forward.2} parent=0 // pred_check_branch
    %2132 = sbr.rel (0) target = $region53
  $region52: #{lstm_forward.2} parent=0 // pred_region
    %s2133 = ssub.s32 0, 0
    %s2134 = smul.u32 8, %s2133
    %p2135 = scmp.lt.s32.totalorder %s2134, 7
    %s2136 = scalar_select %p2135, %s2134, 7
    %s2137 = smul.addr %s2136, 8
    %s2138 = scalar_lea.vmem %s9, %s2137
  $region53: #{lstm_forward.2} parent=0 // pred_fallthru
    _

// kernel: lstm_forward.3
$region0: #{lstm_forward.3}
  #allocation0 [shape = 'u32[]', space=smem, size = 0x4, offset = 0x4, fixed_abs, tag = 'smem constant byte address 0x4 - core index']
  #allocation1 [shape = 'u32[144,128]{1,0:T(1,128)}', space=vmem, size = 0x12000, scoped, tag = 'internal scratch']
  #allocation2 [shape = 'f32[8,32]{1,0:T(8,128)}', space=vmem, size = 0x1000, scoped, tag = 'scratch operand']
  #allocation3 [shape = 'f32[8,32]{1,0:T(8,128)}', space=vmem, size = 0x1000, scoped, tag = 'scratch operand']
  #allocation4 [shape = 'f32[8,32]{1,0:T(8,128)}', space=vmem, size = 0x1000, scoped, tag = 'scratch operand']
  #allocation5 [shape = 'f32[8,32]{1,0:T(8,128)}', space=vmem, size = 0x1000, scoped, tag = 'scratch operand']
  #allocation6 [shape = 'f32[64,128]{1,0:T(8,128)}', space=vmem, size = 0x8000, scoped, tag = 'scratch operand']
  #allocation7 [shape = 'f32[64,128]{1,0:T(8,128)}', space=vmem, size = 0x8000, scoped, tag = 'scratch operand']
  %s0 = inlined_call_operand.vmem [shape: f32[64,64], index: 0, kind: input, shape index: {}, may-alias: {0,1}]
  %s1 = inlined_call_operand.vmem [shape: f32[64,64], index: 1, kind: input, shape index: {}, may-alias: {0,1}]
  %s2 = inlined_call_operand.vmem [shape: f32[64,128], index: 2, kind: input, shape index: {}]
  %s3 = inlined_call_operand.vmem [shape: f32[32,128], index: 3, kind: input, shape index: {}]
  %s4 = inlined_call_operand.vmem [shape: f32[1,128], index: 4, kind: input, shape index: {}]
  %s5 = inlined_call_operand.vmem [shape: f32[64,128], index: 5, kind: input, shape index: {}]
  %s6 = inlined_call_operand.vmem [shape: f32[32,128], index: 6, kind: input, shape index: {}]
  %s7 = inlined_call_operand.vmem [shape: f32[1,128], index: 7, kind: input, shape index: {}]
  %s8 = inlined_call_operand.vmem [shape: f32[64,32], index: 8, kind: output, shape index: {0}]
  %s9 = inlined_call_operand.vmem [shape: f32[64,32], index: 9, kind: output, shape index: {1}]
  %10 = xla_tuple %s8, %s9
  %s11 = sld [smem:[#allocation0]]
  $region54: #{lstm_forward.3} parent=0
    _
  %s13 = ssub.s32 1, %s11
  %s14 = scalar_select 0, %s13, %s11
  // Predicated region
  $region2: #{lstm_forward.3} parent=0 // pred_check
    _
  $region3: #{lstm_forward.3} parent=0 // pred_check_branch
    %16 = sbr.rel (0) target = $region5
  $region4: #{lstm_forward.3} parent=0 // pred_region
    _
  $region5: #{lstm_forward.3} parent=0 // pred_fallthru
    _
  // Predicated region
  $region6: #{lstm_forward.3} parent=0 // pred_check
    _
  $region7: #{lstm_forward.3} parent=0 // pred_check_branch
    %18 = sbr.rel (0) target = $region9
  $region8: #{lstm_forward.3} parent=0 // pred_region
    %s19 = ssub.s32 0, 0
    %s20 = smul.u32 8, %s19
    %p21 = scmp.lt.s32.totalorder %s20, 7
    %s22 = scalar_select %p21, %s20, 7
    %s23 = smul.addr %s22, 8
    %s24 = scalar_lea.vmem %s1, %s23
    %s25 = ssub.s32 0, 0
    %s26 = smul.u32 8, %s25
  $region9: #{lstm_forward.3} parent=0 // pred_fallthru
    _
  // Predicated region
  $region10: #{lstm_forward.3} parent=0 // pred_check
    _
  $region11: #{lstm_forward.3} parent=0 // pred_check_branch
    %28 = sbr.rel (0) target = $region13
  $region12: #{lstm_forward.3} parent=0 // pred_region
    _
  $region13: #{lstm_forward.3} parent=0 // pred_fallthru
    _
  // Predicated region
  $region14: #{lstm_forward.3} parent=0 // pred_check
    _
  $region15: #{lstm_forward.3} parent=0 // pred_check_branch
    %30 = sbr.rel (0) target = $region17
  $region16: #{lstm_forward.3} parent=0 // pred_region
    _
  $region17: #{lstm_forward.3} parent=0 // pred_fallthru
    _
  // Predicated region
  $region18: #{lstm_forward.3} parent=0 // pred_check
    _
  $region19: #{lstm_forward.3} parent=0 // pred_check_branch
    %32 = sbr.rel (0) target = $region21
  $region20: #{lstm_forward.3} parent=0 // pred_region
    _
  $region21: #{lstm_forward.3} parent=0 // pred_fallthru
    _
  // Predicated region
  $region22: #{lstm_forward.3} parent=0 // pred_check
    _
  $region23: #{lstm_forward.3} parent=0 // pred_check_branch
    %34 = sbr.rel (0) target = $region25
  $region24: #{lstm_forward.3} parent=0 // pred_region
    _
  $region25: #{lstm_forward.3} parent=0 // pred_fallthru
    _
  // Predicated region
  $region26: #{lstm_forward.3} parent=0 // pred_check
    _
  $region27: #{lstm_forward.3} parent=0 // pred_check_branch
    %36 = sbr.rel (0) target = $region29
  $region28: #{lstm_forward.3} parent=0 // pred_region
    _
  $region29: #{lstm_forward.3} parent=0 // pred_fallthru
    _
  // Predicated region
  $region30: #{lstm_forward.3} parent=0 // pred_check
    _
  $region31: #{lstm_forward.3} parent=0 // pred_check_branch
    %38 = sbr.rel (0) target = $region33
  $region32: #{lstm_forward.3} parent=0 // pred_region
    _
  $region33: #{lstm_forward.3} parent=0 // pred_fallthru
    _
  %s39 = ssub.s32 0, 0
  %s40 = smul.u32 8, %s39
  %p41 = scmp.lt.s32.totalorder %s40, 7
  %s42 = scalar_select %p41, %s40, 7
  %s43 = smul.addr %s42, 8
  %s44 = scalar_lea.vmem %s1, %s43
  %s45 = ssub.s32 0, 0
  %s46 = smul.u32 8, %s45
  %p47 = scmp.lt.s32.totalorder %s46, 7
  %s48 = scalar_select %p47, %s46, 7
  %s49 = smul.addr %s48, 8
  %s50 = scalar_lea.vmem %s9, %s49
  %s51 = ssub.s32 0, 0
  %s52 = smul.u32 8, %s51
  %p53 = scmp.lt.s32.totalorder %s52, 7
  %s54 = scalar_select %p53, %s52, 7
  %s55 = smul.addr %s54, 8
  %s56 = scalar_lea.vmem %s1, %s55
  %s57 = ssub.s32 0, 0
  %s58 = smul.u32 8, %s57
  %s59 = ssub.s32 0, 0
  %s60 = smul.u32 8, %s59
  %p61 = scmp.lt.s32.totalorder %s60, 7
  %s62 = scalar_select %p61, %s60, 7
  %s63 = smul.addr %s62, 8
  %s64 = scalar_lea.vmem %s9, %s63
  %s65 = ssub.s32 0, 0
  %s66 = smul.u32 8, %s65
  %p67 = scmp.eq.s32.totalorder 0, 0
  // Predicated region
  $region34: #{lstm_forward.3} parent=0 // pred_check
    %p68 = pneg %p67
  $region35: #{lstm_forward.3} parent=0 // pred_check_branch
    %70 = sbr.rel (%p68) target = $region37
  $region36: #{lstm_forward.3} parent=0 // pred_region
    %vm71 = vcmask 261120
    %72 = vst.msk [vmem:[#allocation2] sm:$0xff] %vm71, 0.0
    %73 = vst.msk [vmem:[#allocation3] sm:$0xff] %vm71, 0.0
    %74 = vst.msk [vmem:[#allocation4] sm:$0xff] %vm71, 0.0
    %75 = vst.msk [vmem:[#allocation5] sm:$0xff] %vm71, 0.0
  $region37: #{lstm_forward.3} parent=0 // pred_fallthru
    _
  %v76 = vld [vmem:[%s0] sm:$0xff]
  %v77 = vld [vmem:[%s0 + $0x8] sm:$0xff]
  %v78 = vld [vmem:[%s0 + $0x10] sm:$0xff]
  %v79 = vld [vmem:[%s0 + $0x18] sm:$0xff]
  %v80 = vld [vmem:[%s0 + $0x20] sm:$0xff]
  %v81 = vld [vmem:[%s0 + $0x28] sm:$0xff]
  %v82 = vld [vmem:[%s0 + $0x30] sm:$0xff]
  %v83 = vld [vmem:[%s0 + $0x38] sm:$0xff]
  %v84 = vld [vmem:[%s2] sm:$0xff]
  %v85 = vld [vmem:[%s2 + $0x8] sm:$0xff]
  %v86 = vld [vmem:[%s2 + $0x10] sm:$0xff]
  %v87 = vld [vmem:[%s2 + $0x18] sm:$0xff]
  %v88 = vld [vmem:[%s2 + $0x20] sm:$0xff]
  %v89 = vld [vmem:[%s2 + $0x28] sm:$0xff]
  %v90 = vld [vmem:[%s2 + $0x30] sm:$0xff]
  %v91 = vld [vmem:[%s2 + $0x38] sm:$0xff]
  %v92 = vld [vmem:[%s4] sm:$0x1]
  %v94 = vlaneseq
  %v95 = vshrl.u32 %v94, 7
  %v96 = vsub.s32 0, %v95
  %v97 = vrot.slane %v92, %v96
  %vm99 = vcmask 523264
  %v101 = vsel %vm99, %v76, 0
  %v104 = vsel %vm99, %v77, 0
  %v107 = vsel %vm99, %v78, 0
  %v110 = vsel %vm99, %v79, 0
  %v113 = vsel %vm99, %v80, 0
  %v116 = vsel %vm99, %v81, 0
  %v119 = vsel %vm99, %v82, 0
  %v122 = vsel %vm99, %v83, 0
  %124 = vmatprep.subr.mxu0 0.0
  %125 = vmatpush1.msra.mxu0 %v84
  %126 = vmatprep.subr.mxu0 0.0
  %127 = vmatpush1.msra.mxu0 %v85
  %128 = vmatprep.subr.mxu0 0.0
  %129 = vmatpush1.msra.mxu0 %v86
  %130 = vmatprep.subr.mxu0 0.0
  %131 = vmatpush1.msra.mxu0 %v87
  %132 = vmatprep.subr.mxu0 0.0
  %133 = vmatpush1.msra.mxu0 %v88
  %134 = vmatprep.subr.mxu0 0.0
  %135 = vmatpush1.msra.mxu0 %v89
  %136 = vmatprep.subr.mxu0 0.0
  %137 = vmatpush1.msra.mxu0 %v90
  %138 = vmatprep.subr.mxu0 0.0
  %139 = vmatpush1.msra.mxu0 %v91
  %140 = vmatprep.subr.mxu0 0.0
  %141 = vmatpush1.msra.mxu0 0.0
  %142 = vmatprep.subr.mxu0 0.0
  %143 = vmatpush1.msra.mxu0 0.0
  %144 = vmatprep.subr.mxu0 0.0
  %145 = vmatpush1.msra.mxu0 0.0
  %146 = vmatprep.subr.mxu0 0.0
  %147 = vmatpush1.msra.mxu0 0.0
  %148 = vmatprep.subr.mxu0 0.0
  %149 = vmatpush1.msra.mxu0 0.0
  %150 = vmatprep.subr.mxu0 0.0
  %151 = vmatpush1.msra.mxu0 0.0
  %152 = vmatprep.subr.mxu0 0.0
  %153 = vmatpush1.msra.mxu0 0.0
  %154 = vmatprep.subr.mxu0 0.0
  %155 = vmatpush1.msra.mxu0 0.0
  %156 = vmatprep.subr.mxu0 0.0
  %157 = vmatpush1.msra.mxu0 0.0
  %158 = vmatprep.subr.mxu0 0.0
  %159 = vmatpush1.msra.mxu0 0.0
  %160 = vmatprep.subr.mxu0 0.0
  %161 = vmatpush1.msra.mxu0 0.0
  %162 = vmatprep.subr.mxu0 0.0
  %163 = vmatpush1.msra.mxu0 0.0
  %164 = vmatprep.subr.mxu0 0.0
  %165 = vmatpush1.msra.mxu0 0.0
  %166 = vmatprep.subr.mxu0 0.0
  %167 = vmatpush1.msra.mxu0 0.0
  %168 = vmatprep.subr.mxu0 0.0
  %169 = vmatpush1.msra.mxu0 0.0
  %170 = vmatprep.subr.mxu0 0.0
  %171 = vmatpush1.msra.mxu0 0.0
  %172 = vmatprep.subr.mxu0 0.0
  %173 = vmatpush1.msra.mxu0 0.0
  %174 = vmatprep.subr.mxu0 0.0
  %175 = vmatpush1.msra.mxu0 0.0
  %176 = vmatprep.subr.mxu0 0.0
  %177 = vmatpush1.msra.mxu0 0.0
  %178 = vmatprep.subr.mxu0 0.0
  %179 = vmatpush1.msra.mxu0 0.0
  %180 = vmatprep.subr.mxu0 0.0
  %181 = vmatpush1.msra.mxu0 0.0
  %182 = vmatprep.subr.mxu0 0.0
  %183 = vmatpush1.msra.mxu0 0.0
  %184 = vmatprep.subr.mxu0 0.0
  %185 = vmatpush1.msra.mxu0 0.0
  %186 = vmatprep.subr.mxu0 0.0
  %187 = vmatpush1.msra.mxu0 0.0
  %188 = vmatprep.mubr.f32.mxu0 0.0
  %189 = vmatmul.mubr.f32.gmra.mrb[0].mxu0 %v101
  %v190 = vpop.f32.mrb[0].mxu0
  %v191 = vadd.f32 %v97, %v190
  %v192 = vpop.f32.mrb[0].mxu0
  %193 = vmatprep.mubr.f32.mxu0 0.0
  %194 = vmatmul.mubr.f32.gmra.mrb[0].mxu0 %v104
  %v195 = vpop.f32.mrb[0].mxu0
  %v196 = vadd.f32 %v97, %v195
  %v197 = vpop.f32.mrb[0].mxu0
  %198 = vmatprep.mubr.f32.mxu0 0.0
  %199 = vmatmul.mubr.f32.gmra.mrb[0].mxu0 %v107
  %v200 = vpop.f32.mrb[0].mxu0
  %v201 = vadd.f32 %v97, %v200
  %v202 = vpop.f32.mrb[0].mxu0
  %203 = vmatprep.mubr.f32.mxu0 0.0
  %204 = vmatmul.mubr.f32.gmra.mrb[0].mxu0 %v110
  %v205 = vpop.f32.mrb[0].mxu0
  %v206 = vadd.f32 %v97, %v205
  %v207 = vpop.f32.mrb[0].mxu0
  %208 = vmatprep.mubr.f32.mxu0 0.0
  %209 = vmatmul.mubr.f32.gmra.mrb[0].mxu0 %v113
  %v210 = vpop.f32.mrb[0].mxu0
  %v211 = vadd.f32 %v97, %v210
  %v212 = vpop.f32.mrb[0].mxu0
  %213 = vmatprep.mubr.f32.mxu0 0.0
  %214 = vmatmul.mubr.f32.gmra.mrb[0].mxu0 %v116
  %v215 = vpop.f32.mrb[0].mxu0
  %v216 = vadd.f32 %v97, %v215
  %v217 = vpop.f32.mrb[0].mxu0
  %218 = vmatprep.mubr.f32.mxu0 0.0
  %219 = vmatmul.mubr.f32.gmra.mrb[0].mxu0 %v119
  %v220 = vpop.f32.mrb[0].mxu0
  %v221 = vadd.f32 %v97, %v220
  %v222 = vpop.f32.mrb[0].mxu0
  %223 = vmatprep.mubr.f32.mxu0 0.0
  %224 = vmatmul.mubr.f32.gmra.mrb[0].mxu0 %v122
  %v225 = vpop.f32.mrb[0].mxu0
  %v226 = vadd.f32 %v97, %v225
  %v227 = vpop.f32.mrb[0].mxu0
  %228 = vdwg.mxu0
  %229 = vst [vmem:[#allocation6] sm:$0xff] %v191
  %230 = vst [vmem:[#allocation6 + $0x8] sm:$0xff] %v196
  %231 = vst [vmem:[#allocation6 + $0x10] sm:$0xff] %v201
  %232 = vst [vmem:[#allocation6 + $0x18] sm:$0xff] %v206
  %233 = vst [vmem:[#allocation6 + $0x20] sm:$0xff] %v211
  %234 = vst [vmem:[#allocation6 + $0x28] sm:$0xff] %v216
  %235 = vst [vmem:[#allocation6 + $0x30] sm:$0xff] %v221
  %236 = vst [vmem:[#allocation6 + $0x38] sm:$0xff] %v226
  %v237 = vld [vmem:[%s56] sm:$0xff]
  %v238 = vld [vmem:[%s56 + $0x8] sm:$0xff]
  %v239 = vld [vmem:[%s56 + $0x10] sm:$0xff]
  %v240 = vld [vmem:[%s56 + $0x18] sm:$0xff]
  %v241 = vld [vmem:[%s56 + $0x20] sm:$0xff]
  %v242 = vld [vmem:[%s56 + $0x28] sm:$0xff]
  %v243 = vld [vmem:[%s56 + $0x30] sm:$0xff]
  %v244 = vld [vmem:[%s56 + $0x38] sm:$0xff]
  %v245 = vld [vmem:[%s5] sm:$0xff]
  %v246 = vld [vmem:[%s5 + $0x8] sm:$0xff]
  %v247 = vld [vmem:[%s5 + $0x10] sm:$0xff]
  %v248 = vld [vmem:[%s5 + $0x18] sm:$0xff]
  %v249 = vld [vmem:[%s5 + $0x20] sm:$0xff]
  %v250 = vld [vmem:[%s5 + $0x28] sm:$0xff]
  %v251 = vld [vmem:[%s5 + $0x30] sm:$0xff]
  %v252 = vld [vmem:[%s5 + $0x38] sm:$0xff]
  %v253 = vld [vmem:[%s7] sm:$0x1]
  %v255 = vlaneseq
  %v256 = vshrl.u32 %v255, 7
  %v257 = vsub.s32 0, %v256
  %v258 = vrot.slane %v253, %v257
  %v261 = vsel %vm99, %v237, 0
  %v264 = vsel %vm99, %v238, 0
  %v267 = vsel %vm99, %v239, 0
  %v270 = vsel %vm99, %v240, 0
  %v273 = vsel %vm99, %v241, 0
  %v276 = vsel %vm99, %v242, 0
  %v279 = vsel %vm99, %v243, 0
  %v282 = vsel %vm99, %v244, 0
  %284 = vmatprep.subr.mxu0 0.0
  %285 = vmatpush1.msra.mxu0 %v245
  %286 = vmatprep.subr.mxu0 0.0
  %287 = vmatpush1.msra.mxu0 %v246
  %288 = vmatprep.subr.mxu0 0.0
  %289 = vmatpush1.msra.mxu0 %v247
  %290 = vmatprep.subr.mxu0 0.0
  %291 = vmatpush1.msra.mxu0 %v248
  %292 = vmatprep.subr.mxu0 0.0
  %293 = vmatpush1.msra.mxu0 %v249
  %294 = vmatprep.subr.mxu0 0.0
  %295 = vmatpush1.msra.mxu0 %v250
  %296 = vmatprep.subr.mxu0 0.0
  %297 = vmatpush1.msra.mxu0 %v251
  %298 = vmatprep.subr.mxu0 0.0
  %299 = vmatpush1.msra.mxu0 %v252
  %300 = vmatprep.subr.mxu0 0.0
  %301 = vmatpush1.msra.mxu0 0.0
  %302 = vmatprep.subr.mxu0 0.0
  %303 = vmatpush1.msra.mxu0 0.0
  %304 = vmatprep.subr.mxu0 0.0
  %305 = vmatpush1.msra.mxu0 0.0
  %306 = vmatprep.subr.mxu0 0.0
  %307 = vmatpush1.msra.mxu0 0.0
  %308 = vmatprep.subr.mxu0 0.0
  %309 = vmatpush1.msra.mxu0 0.0
  %310 = vmatprep.subr.mxu0 0.0
  %311 = vmatpush1.msra.mxu0 0.0
  %312 = vmatprep.subr.mxu0 0.0
  %313 = vmatpush1.msra.mxu0 0.0
  %314 = vmatprep.subr.mxu0 0.0
  %315 = vmatpush1.msra.mxu0 0.0
  %316 = vmatprep.subr.mxu0 0.0
  %317 = vmatpush1.msra.mxu0 0.0
  %318 = vmatprep.subr.mxu0 0.0
  %319 = vmatpush1.msra.mxu0 0.0
  %320 = vmatprep.subr.mxu0 0.0
  %321 = vmatpush1.msra.mxu0 0.0
  %322 = vmatprep.subr.mxu0 0.0
  %323 = vmatpush1.msra.mxu0 0.0
  %324 = vmatprep.subr.mxu0 0.0
  %325 = vmatpush1.msra.mxu0 0.0
  %326 = vmatprep.subr.mxu0 0.0
  %327 = vmatpush1.msra.mxu0 0.0
  %328 = vmatprep.subr.mxu0 0.0
  %329 = vmatpush1.msra.mxu0 0.0
  %330 = vmatprep.subr.mxu0 0.0
  %331 = vmatpush1.msra.mxu0 0.0
  %332 = vmatprep.subr.mxu0 0.0
  %333 = vmatpush1.msra.mxu0 0.0
  %334 = vmatprep.subr.mxu0 0.0
  %335 = vmatpush1.msra.mxu0 0.0
  %336 = vmatprep.subr.mxu0 0.0
  %337 = vmatpush1.msra.mxu0 0.0
  %338 = vmatprep.subr.mxu0 0.0
  %339 = vmatpush1.msra.mxu0 0.0
  %340 = vmatprep.subr.mxu0 0.0
  %341 = vmatpush1.msra.mxu0 0.0
  %342 = vmatprep.subr.mxu0 0.0
  %343 = vmatpush1.msra.mxu0 0.0
  %344 = vmatprep.subr.mxu0 0.0
  %345 = vmatpush1.msra.mxu0 0.0
  %346 = vmatprep.subr.mxu0 0.0
  %347 = vmatpush1.msra.mxu0 0.0
  %348 = vmatprep.mubr.f32.mxu0 0.0
  %349 = vmatmul.mubr.f32.gmra.mrb[0].mxu0 %v261
  %v350 = vpop.f32.mrb[0].mxu0
  %v351 = vadd.f32 %v258, %v350
  %v352 = vpop.f32.mrb[0].mxu0
  %353 = vmatprep.mubr.f32.mxu0 0.0
  %354 = vmatmul.mubr.f32.gmra.mrb[0].mxu0 %v264
  %v355 = vpop.f32.mrb[0].mxu0
  %v356 = vadd.f32 %v258, %v355
  %v357 = vpop.f32.mrb[0].mxu0
  %358 = vmatprep.mubr.f32.mxu0 0.0
  %359 = vmatmul.mubr.f32.gmra.mrb[0].mxu0 %v267
  %v360 = vpop.f32.mrb[0].mxu0
  %v361 = vadd.f32 %v258, %v360
  %v362 = vpop.f32.mrb[0].mxu0
  %363 = vmatprep.mubr.f32.mxu0 0.0
  %364 = vmatmul.mubr.f32.gmra.mrb[0].mxu0 %v270
  %v365 = vpop.f32.mrb[0].mxu0
  %v366 = vadd.f32 %v258, %v365
  %v367 = vpop.f32.mrb[0].mxu0
  %368 = vmatprep.mubr.f32.mxu0 0.0
  %369 = vmatmul.mubr.f32.gmra.mrb[0].mxu0 %v273
  %v370 = vpop.f32.mrb[0].mxu0
  %v371 = vadd.f32 %v258, %v370
  %v372 = vpop.f32.mrb[0].mxu0
  %373 = vmatprep.mubr.f32.mxu0 0.0
  %374 = vmatmul.mubr.f32.gmra.mrb[0].mxu0 %v276
  %v375 = vpop.f32.mrb[0].mxu0
  %v376 = vadd.f32 %v258, %v375
  %v377 = vpop.f32.mrb[0].mxu0
  %378 = vmatprep.mubr.f32.mxu0 0.0
  %379 = vmatmul.mubr.f32.gmra.mrb[0].mxu0 %v279
  %v380 = vpop.f32.mrb[0].mxu0
  %v381 = vadd.f32 %v258, %v380
  %v382 = vpop.f32.mrb[0].mxu0
  %383 = vmatprep.mubr.f32.mxu0 0.0
  %384 = vmatmul.mubr.f32.gmra.mrb[0].mxu0 %v282
  %v385 = vpop.f32.mrb[0].mxu0
  %v386 = vadd.f32 %v258, %v385
  %v387 = vpop.f32.mrb[0].mxu0
  %388 = vdwg.mxu0
  %389 = vst [vmem:[#allocation7] sm:$0xff] %v351
  %390 = vst [vmem:[#allocation7 + $0x8] sm:$0xff] %v356
  %391 = vst [vmem:[#allocation7 + $0x10] sm:$0xff] %v361
  %392 = vst [vmem:[#allocation7 + $0x18] sm:$0xff] %v366
  %393 = vst [vmem:[#allocation7 + $0x20] sm:$0xff] %v371
  %394 = vst [vmem:[#allocation7 + $0x28] sm:$0xff] %v376
  %395 = vst [vmem:[#allocation7 + $0x30] sm:$0xff] %v381
  %396 = vst [vmem:[#allocation7 + $0x38] sm:$0xff] %v386
  %v397 = vlaneseq
  %v398 = vand.u32 %v397, 127
  %vm399 = vcmp.ge.s32.totalorder %v398, 64
  %vm400 = vcmp.lt.s32.totalorder %v398, 96
  %vm401 = vmand %vm399, %vm400
  %v402 = vld [vmem:[%s3] sm:$0xff]
  %v403 = vld [vmem:[%s3 + $0x8] sm:$0xff]
  %v404 = vld [vmem:[%s3 + $0x10] sm:$0xff]
  %v405 = vld [vmem:[%s3 + $0x18] sm:$0xff]
  %v406 = vld [vmem:[%s6] sm:$0xff]
  %v407 = vld [vmem:[%s6 + $0x8] sm:$0xff]
  %v408 = vld [vmem:[%s6 + $0x10] sm:$0xff]
  %v409 = vld [vmem:[%s6 + $0x18] sm:$0xff]
  %v410 = vld [vmem:[#allocation2] sm:$0xff]
  %v411 = vld [vmem:[#allocation3] sm:$0xff]
  %v412 = vld [vmem:[#allocation4] sm:$0xff]
  %v413 = vld [vmem:[#allocation5] sm:$0xff]
  %v414 = vld [vmem:[#allocation6] sm:$0xff]
  %vm415 = vcmask 261120
  %v417 = vsel %vm415, %v410, 0
  %419 = vmatprep.subr.mxu0 0.0
  %420 = vmatpush1.msra.mxu0 %v402
  %421 = vmatprep.subr.mxu0 0.0
  %422 = vmatpush1.msra.mxu0 %v403
  %423 = vmatprep.subr.mxu0 0.0
  %424 = vmatpush1.msra.mxu0 %v404
  %425 = vmatprep.subr.mxu0 0.0
  %426 = vmatpush1.msra.mxu0 %v405
  %427 = vmatprep.subr.mxu0 0.0
  %428 = vmatpush1.msra.mxu0 0.0
  %429 = vmatprep.subr.mxu0 0.0
  %430 = vmatpush1.msra.mxu0 0.0
  %431 = vmatprep.subr.mxu0 0.0
  %432 = vmatpush1.msra.mxu0 0.0
  %433 = vmatprep.subr.mxu0 0.0
  %434 = vmatpush1.msra.mxu0 0.0
  %435 = vmatprep.subr.mxu0 0.0
  %436 = vmatpush1.msra.mxu0 0.0
  %437 = vmatprep.subr.mxu0 0.0
  %438 = vmatpush1.msra.mxu0 0.0
  %439 = vmatprep.subr.mxu0 0.0
  %440 = vmatpush1.msra.mxu0 0.0
  %441 = vmatprep.subr.mxu0 0.0
  %442 = vmatpush1.msra.mxu0 0.0
  %443 = vmatprep.subr.mxu0 0.0
  %444 = vmatpush1.msra.mxu0 0.0
  %445 = vmatprep.subr.mxu0 0.0
  %446 = vmatpush1.msra.mxu0 0.0
  %447 = vmatprep.subr.mxu0 0.0
  %448 = vmatpush1.msra.mxu0 0.0
  %449 = vmatprep.subr.mxu0 0.0
  %450 = vmatpush1.msra.mxu0 0.0
  %451 = vmatprep.subr.mxu0 0.0
  %452 = vmatpush1.msra.mxu0 0.0
  %453 = vmatprep.subr.mxu0 0.0
  %454 = vmatpush1.msra.mxu0 0.0
  %455 = vmatprep.subr.mxu0 0.0
  %456 = vmatpush1.msra.mxu0 0.0
  %457 = vmatprep.subr.mxu0 0.0
  %458 = vmatpush1.msra.mxu0 0.0
  %459 = vmatprep.subr.mxu0 0.0
  %460 = vmatpush1.msra.mxu0 0.0
  %461 = vmatprep.subr.mxu0 0.0
  %462 = vmatpush1.msra.mxu0 0.0
  %463 = vmatprep.subr.mxu0 0.0
  %464 = vmatpush1.msra.mxu0 0.0
  %465 = vmatprep.subr.mxu0 0.0
  %466 = vmatpush1.msra.mxu0 0.0
  %467 = vmatprep.subr.mxu0 0.0
  %468 = vmatpush1.msra.mxu0 0.0
  %469 = vmatprep.subr.mxu0 0.0
  %470 = vmatpush1.msra.mxu0 0.0
  %471 = vmatprep.subr.mxu0 0.0
  %472 = vmatpush1.msra.mxu0 0.0
  %473 = vmatprep.subr.mxu0 0.0
  %474 = vmatpush1.msra.mxu0 0.0
  %475 = vmatprep.subr.mxu0 0.0
  %476 = vmatpush1.msra.mxu0 0.0
  %477 = vmatprep.subr.mxu0 0.0
  %478 = vmatpush1.msra.mxu0 0.0
  %479 = vmatprep.subr.mxu0 0.0
  %480 = vmatpush1.msra.mxu0 0.0
  %481 = vmatprep.subr.mxu0 0.0
  %482 = vmatpush1.msra.mxu0 0.0
  %483 = vmatprep.mubr.f32.mxu0 0.0
  %484 = vmatmul.mubr.f32.gmra.mrb[0].mxu0 %v417
  %v485 = vpop.f32.mrb[0].mxu0
  %v486 = vadd.f32 0.0, %v485
  %v487 = vpop.f32.mrb[0].mxu0
  %488 = vdwg.mxu0
  %v489 = vadd.f32 %v414, %v486
  %v490 = vtanh.pop %v489
  %v491 = vxor.u32 %v489, 2147483648
  %v492 = vmul.f32 %v491, 1.442695
  %v493 = vpow.pop %v492
  %v494 = vadd.f32 %v493, 1.0
  %v495 = vrcp.pop %v494
  %v496 = vmul.f32 1.0, %v495
  %v497 = vsel %vm401, %v490, %v496
  %499 = vrot.lane.b32.xlu0 %v411, 32
  %v500 = vpop.permute.xlu0 %499
  %v502 = vmul.f32 %v497, %v500
  %504 = vrot.lane.b32.xlu0 %v497, 64
  %v505 = vpop.permute.xlu0 %504
  %v507 = vmul.f32 %v497, %v505
  %509 = vrot.lane.b32.xlu0 %v507, 32
  %v510 = vpop.permute.xlu0 %509
  %v512 = vadd.f32 %v502, %v510
  %v513 = vtanh.pop %v512
  %515 = vrot.lane.b32.xlu0 %v513, 64
  %v516 = vpop.permute.xlu0 %515
  %v518 = vmul.f32 %v497, %v516
  %520 = vrot.lane.b32.xlu0 %v518, 32
  %v521 = vpop.permute.xlu0 %520
  %523 = vst.msk [vmem:[%s8] sm:$0xff] %vm415, %v521
  %s524 = scalar_lea.vmem [#allocation7], 56
  %v525 = vld [vmem:[%s524] sm:$0xff]
  %v527 = vsel %vm415, %v412, 0
  %529 = vmatprep.subr.mxu0 0.0
  %530 = vmatpush1.msra.mxu0 %v406
  %531 = vmatprep.subr.mxu0 0.0
  %532 = vmatpush1.msra.mxu0 %v407
  %533 = vmatprep.subr.mxu0 0.0
  %534 = vmatpush1.msra.mxu0 %v408
  %535 = vmatprep.subr.mxu0 0.0
  %536 = vmatpush1.msra.mxu0 %v409
  %537 = vmatprep.subr.mxu0 0.0
  %538 = vmatpush1.msra.mxu0 0.0
  %539 = vmatprep.subr.mxu0 0.0
  %540 = vmatpush1.msra.mxu0 0.0
  %541 = vmatprep.subr.mxu0 0.0
  %542 = vmatpush1.msra.mxu0 0.0
  %543 = vmatprep.subr.mxu0 0.0
  %544 = vmatpush1.msra.mxu0 0.0
  %545 = vmatprep.subr.mxu0 0.0
  %546 = vmatpush1.msra.mxu0 0.0
  %547 = vmatprep.subr.mxu0 0.0
  %548 = vmatpush1.msra.mxu0 0.0
  %549 = vmatprep.subr.mxu0 0.0
  %550 = vmatpush1.msra.mxu0 0.0
  %551 = vmatprep.subr.mxu0 0.0
  %552 = vmatpush1.msra.mxu0 0.0
  %553 = vmatprep.subr.mxu0 0.0
  %554 = vmatpush1.msra.mxu0 0.0
  %555 = vmatprep.subr.mxu0 0.0
  %556 = vmatpush1.msra.mxu0 0.0
  %557 = vmatprep.subr.mxu0 0.0
  %558 = vmatpush1.msra.mxu0 0.0
  %559 = vmatprep.subr.mxu0 0.0
  %560 = vmatpush1.msra.mxu0 0.0
  %561 = vmatprep.subr.mxu0 0.0
  %562 = vmatpush1.msra.mxu0 0.0
  %563 = vmatprep.subr.mxu0 0.0
  %564 = vmatpush1.msra.mxu0 0.0
  %565 = vmatprep.subr.mxu0 0.0
  %566 = vmatpush1.msra.mxu0 0.0
  %567 = vmatprep.subr.mxu0 0.0
  %568 = vmatpush1.msra.mxu0 0.0
  %569 = vmatprep.subr.mxu0 0.0
  %570 = vmatpush1.msra.mxu0 0.0
  %571 = vmatprep.subr.mxu0 0.0
  %572 = vmatpush1.msra.mxu0 0.0
  %573 = vmatprep.subr.mxu0 0.0
  %574 = vmatpush1.msra.mxu0 0.0
  %575 = vmatprep.subr.mxu0 0.0
  %576 = vmatpush1.msra.mxu0 0.0
  %577 = vmatprep.subr.mxu0 0.0
  %578 = vmatpush1.msra.mxu0 0.0
  %579 = vmatprep.subr.mxu0 0.0
  %580 = vmatpush1.msra.mxu0 0.0
  %581 = vmatprep.subr.mxu0 0.0
  %582 = vmatpush1.msra.mxu0 0.0
  %583 = vmatprep.subr.mxu0 0.0
  %584 = vmatpush1.msra.mxu0 0.0
  %585 = vmatprep.subr.mxu0 0.0
  %586 = vmatpush1.msra.mxu0 0.0
  %587 = vmatprep.subr.mxu0 0.0
  %588 = vmatpush1.msra.mxu0 0.0
  %589 = vmatprep.subr.mxu0 0.0
  %590 = vmatpush1.msra.mxu0 0.0
  %591 = vmatprep.subr.mxu0 0.0
  %592 = vmatpush1.msra.mxu0 0.0
  %593 = vmatprep.mubr.f32.mxu0 0.0
  %594 = vmatmul.mubr.f32.gmra.mrb[0].mxu0 %v527
  %v595 = vpop.f32.mrb[0].mxu0
  %v596 = vadd.f32 0.0, %v595
  %v597 = vpop.f32.mrb[0].mxu0
  %598 = vdwg.mxu0
  %v599 = vadd.f32 %v525, %v596
  %v600 = vtanh.pop %v599
  %v601 = vxor.u32 %v599, 2147483648
  %v602 = vmul.f32 %v601, 1.442695
  %v603 = vpow.pop %v602
  %v604 = vadd.f32 %v603, 1.0
  %v605 = vrcp.pop %v604
  %v606 = vmul.f32 1.0, %v605
  %v607 = vsel %vm401, %v600, %v606
  %609 = vrot.lane.b32.xlu0 %v413, 32
  %v610 = vpop.permute.xlu0 %609
  %v612 = vmul.f32 %v607, %v610
  %614 = vrot.lane.b32.xlu0 %v607, 64
  %v615 = vpop.permute.xlu0 %614
  %v617 = vmul.f32 %v607, %v615
  %619 = vrot.lane.b32.xlu0 %v617, 32
  %v620 = vpop.permute.xlu0 %619
  %v622 = vadd.f32 %v612, %v620
  %v623 = vtanh.pop %v622
  %625 = vrot.lane.b32.xlu0 %v623, 64
  %v626 = vpop.permute.xlu0 %625
  %v628 = vmul.f32 %v607, %v626
  %630 = vrot.lane.b32.xlu0 %v628, 32
  %v631 = vpop.permute.xlu0 %630
  %s633 = scalar_lea.vmem %s64, 56
  %634 = vst.msk [vmem:[%s633] sm:$0xff] %vm415, %v631
  %s635 = scalar_lea.vmem [#allocation6], 8
  %v636 = vld [vmem:[%s635] sm:$0xff]
  %v637 = vsel %vm415, %v521, 0
  %639 = vmatprep.subr.mxu0 0.0
  %640 = vmatpush1.msra.mxu0 %v402
  %641 = vmatprep.subr.mxu0 0.0
  %642 = vmatpush1.msra.mxu0 %v403
  %643 = vmatprep.subr.mxu0 0.0
  %644 = vmatpush1.msra.mxu0 %v404
  %645 = vmatprep.subr.mxu0 0.0
  %646 = vmatpush1.msra.mxu0 %v405
  %647 = vmatprep.subr.mxu0 0.0
  %648 = vmatpush1.msra.mxu0 0.0
  %649 = vmatprep.subr.mxu0 0.0
  %650 = vmatpush1.msra.mxu0 0.0
  %651 = vmatprep.subr.mxu0 0.0
  %652 = vmatpush1.msra.mxu0 0.0
  %653 = vmatprep.subr.mxu0 0.0
  %654 = vmatpush1.msra.mxu0 0.0
  %655 = vmatprep.subr.mxu0 0.0
  %656 = vmatpush1.msra.mxu0 0.0
  %657 = vmatprep.subr.mxu0 0.0
  %658 = vmatpush1.msra.mxu0 0.0
  %659 = vmatprep.subr.mxu0 0.0
  %660 = vmatpush1.msra.mxu0 0.0
  %661 = vmatprep.subr.mxu0 0.0
  %662 = vmatpush1.msra.mxu0 0.0
  %663 = vmatprep.subr.mxu0 0.0
  %664 = vmatpush1.msra.mxu0 0.0
  %665 = vmatprep.subr.mxu0 0.0
  %666 = vmatpush1.msra.mxu0 0.0
  %667 = vmatprep.subr.mxu0 0.0
  %668 = vmatpush1.msra.mxu0 0.0
  %669 = vmatprep.subr.mxu0 0.0
  %670 = vmatpush1.msra.mxu0 0.0
  %671 = vmatprep.subr.mxu0 0.0
  %672 = vmatpush1.msra.mxu0 0.0
  %673 = vmatprep.subr.mxu0 0.0
  %674 = vmatpush1.msra.mxu0 0.0
  %675 = vmatprep.subr.mxu0 0.0
  %676 = vmatpush1.msra.mxu0 0.0
  %677 = vmatprep.subr.mxu0 0.0
  %678 = vmatpush1.msra.mxu0 0.0
  %679 = vmatprep.subr.mxu0 0.0
  %680 = vmatpush1.msra.mxu0 0.0
  %681 = vmatprep.subr.mxu0 0.0
  %682 = vmatpush1.msra.mxu0 0.0
  %683 = vmatprep.subr.mxu0 0.0
  %684 = vmatpush1.msra.mxu0 0.0
  %685 = vmatprep.subr.mxu0 0.0
  %686 = vmatpush1.msra.mxu0 0.0
  %687 = vmatprep.subr.mxu0 0.0
  %688 = vmatpush1.msra.mxu0 0.0
  %689 = vmatprep.subr.mxu0 0.0
  %690 = vmatpush1.msra.mxu0 0.0
  %691 = vmatprep.subr.mxu0 0.0
  %692 = vmatpush1.msra.mxu0 0.0
  %693 = vmatprep.subr.mxu0 0.0
  %694 = vmatpush1.msra.mxu0 0.0
  %695 = vmatprep.subr.mxu0 0.0
  %696 = vmatpush1.msra.mxu0 0.0
  %697 = vmatprep.subr.mxu0 0.0
  %698 = vmatpush1.msra.mxu0 0.0
  %699 = vmatprep.subr.mxu0 0.0
  %700 = vmatpush1.msra.mxu0 0.0
  %701 = vmatprep.subr.mxu0 0.0
  %702 = vmatpush1.msra.mxu0 0.0
  %703 = vmatprep.mubr.f32.mxu0 0.0
  %704 = vmatmul.mubr.f32.gmra.mrb[0].mxu0 %v637
  %v705 = vpop.f32.mrb[0].mxu0
  %v706 = vadd.f32 0.0, %v705
  %v707 = vpop.f32.mrb[0].mxu0
  %708 = vdwg.mxu0
  %v709 = vadd.f32 %v636, %v706
  %v710 = vtanh.pop %v709
  %v711 = vxor.u32 %v709, 2147483648
  %v712 = vmul.f32 %v711, 1.442695
  %v713 = vpow.pop %v712
  %v714 = vadd.f32 %v713, 1.0
  %v715 = vrcp.pop %v714
  %v716 = vmul.f32 1.0, %v715
  %v717 = vsel %vm401, %v710, %v716
  %v718 = vmul.f32 %v717, %v512
  %720 = vrot.lane.b32.xlu0 %v717, 64
  %v721 = vpop.permute.xlu0 %720
  %v723 = vmul.f32 %v717, %v721
  %725 = vrot.lane.b32.xlu0 %v723, 32
  %v726 = vpop.permute.xlu0 %725
  %v728 = vadd.f32 %v718, %v726
  %v729 = vtanh.pop %v728
  %731 = vrot.lane.b32.xlu0 %v729, 64
  %v732 = vpop.permute.xlu0 %731
  %v734 = vmul.f32 %v717, %v732
  %736 = vrot.lane.b32.xlu0 %v734, 32
  %v737 = vpop.permute.xlu0 %736
  %s739 = scalar_lea.vmem %s8, 8
  %740 = vst.msk [vmem:[%s739] sm:$0xff] %vm415, %v737
  %s741 = scalar_lea.vmem [#allocation7], 48
  %v742 = vld [vmem:[%s741] sm:$0xff]
  %v743 = vsel %vm415, %v631, 0
  %745 = vmatprep.subr.mxu0 0.0
  %746 = vmatpush1.msra.mxu0 %v406
  %747 = vmatprep.subr.mxu0 0.0
  %748 = vmatpush1.msra.mxu0 %v407
  %749 = vmatprep.subr.mxu0 0.0
  %750 = vmatpush1.msra.mxu0 %v408
  %751 = vmatprep.subr.mxu0 0.0
  %752 = vmatpush1.msra.mxu0 %v409
  %753 = vmatprep.subr.mxu0 0.0
  %754 = vmatpush1.msra.mxu0 0.0
  %755 = vmatprep.subr.mxu0 0.0
  %756 = vmatpush1.msra.mxu0 0.0
  %757 = vmatprep.subr.mxu0 0.0
  %758 = vmatpush1.msra.mxu0 0.0
  %759 = vmatprep.subr.mxu0 0.0
  %760 = vmatpush1.msra.mxu0 0.0
  %761 = vmatprep.subr.mxu0 0.0
  %762 = vmatpush1.msra.mxu0 0.0
  %763 = vmatprep.subr.mxu0 0.0
  %764 = vmatpush1.msra.mxu0 0.0
  %765 = vmatprep.subr.mxu0 0.0
  %766 = vmatpush1.msra.mxu0 0.0
  %767 = vmatprep.subr.mxu0 0.0
  %768 = vmatpush1.msra.mxu0 0.0
  %769 = vmatprep.subr.mxu0 0.0
  %770 = vmatpush1.msra.mxu0 0.0
  %771 = vmatprep.subr.mxu0 0.0
  %772 = vmatpush1.msra.mxu0 0.0
  %773 = vmatprep.subr.mxu0 0.0
  %774 = vmatpush1.msra.mxu0 0.0
  %775 = vmatprep.subr.mxu0 0.0
  %776 = vmatpush1.msra.mxu0 0.0
  %777 = vmatprep.subr.mxu0 0.0
  %778 = vmatpush1.msra.mxu0 0.0
  %779 = vmatprep.subr.mxu0 0.0
  %780 = vmatpush1.msra.mxu0 0.0
  %781 = vmatprep.subr.mxu0 0.0
  %782 = vmatpush1.msra.mxu0 0.0
  %783 = vmatprep.subr.mxu0 0.0
  %784 = vmatpush1.msra.mxu0 0.0
  %785 = vmatprep.subr.mxu0 0.0
  %786 = vmatpush1.msra.mxu0 0.0
  %787 = vmatprep.subr.mxu0 0.0
  %788 = vmatpush1.msra.mxu0 0.0
  %789 = vmatprep.subr.mxu0 0.0
  %790 = vmatpush1.msra.mxu0 0.0
  %791 = vmatprep.subr.mxu0 0.0
  %792 = vmatpush1.msra.mxu0 0.0
  %793 = vmatprep.subr.mxu0 0.0
  %794 = vmatpush1.msra.mxu0 0.0
  %795 = vmatprep.subr.mxu0 0.0
  %796 = vmatpush1.msra.mxu0 0.0
  %797 = vmatprep.subr.mxu0 0.0
  %798 = vmatpush1.msra.mxu0 0.0
  %799 = vmatprep.subr.mxu0 0.0
  %800 = vmatpush1.msra.mxu0 0.0
  %801 = vmatprep.subr.mxu0 0.0
  %802 = vmatpush1.msra.mxu0 0.0
  %803 = vmatprep.subr.mxu0 0.0
  %804 = vmatpush1.msra.mxu0 0.0
  %805 = vmatprep.subr.mxu0 0.0
  %806 = vmatpush1.msra.mxu0 0.0
  %807 = vmatprep.subr.mxu0 0.0
  %808 = vmatpush1.msra.mxu0 0.0
  %809 = vmatprep.mubr.f32.mxu0 0.0
  %810 = vmatmul.mubr.f32.gmra.mrb[0].mxu0 %v743
  %v811 = vpop.f32.mrb[0].mxu0
  %v812 = vadd.f32 0.0, %v811
  %v813 = vpop.f32.mrb[0].mxu0
  %814 = vdwg.mxu0
  %v815 = vadd.f32 %v742, %v812
  %v816 = vtanh.pop %v815
  %v817 = vxor.u32 %v815, 2147483648
  %v818 = vmul.f32 %v817, 1.442695
  %v819 = vpow.pop %v818
  %v820 = vadd.f32 %v819, 1.0
  %v821 = vrcp.pop %v820
  %v822 = vmul.f32 1.0, %v821
  %v823 = vsel %vm401, %v816, %v822
  %v824 = vmul.f32 %v823, %v622
  %826 = vrot.lane.b32.xlu0 %v823, 64
  %v827 = vpop.permute.xlu0 %826
  %v829 = vmul.f32 %v823, %v827
  %831 = vrot.lane.b32.xlu0 %v829, 32
  %v832 = vpop.permute.xlu0 %831
  %v834 = vadd.f32 %v824, %v832
  %v835 = vtanh.pop %v834
  %837 = vrot.lane.b32.xlu0 %v835, 64
  %v838 = vpop.permute.xlu0 %837
  %v840 = vmul.f32 %v823, %v838
  %842 = vrot.lane.b32.xlu0 %v840, 32
  %v843 = vpop.permute.xlu0 %842
  %s845 = scalar_lea.vmem %s64, 48
  %846 = vst.msk [vmem:[%s845] sm:$0xff] %vm415, %v843
  %s847 = scalar_lea.vmem [#allocation6], 16
  %v848 = vld [vmem:[%s847] sm:$0xff]
  %v849 = vsel %vm415, %v737, 0
  %851 = vmatprep.subr.mxu0 0.0
  %852 = vmatpush1.msra.mxu0 %v402
  %853 = vmatprep.subr.mxu0 0.0
  %854 = vmatpush1.msra.mxu0 %v403
  %855 = vmatprep.subr.mxu0 0.0
  %856 = vmatpush1.msra.mxu0 %v404
  %857 = vmatprep.subr.mxu0 0.0
  %858 = vmatpush1.msra.mxu0 %v405
  %859 = vmatprep.subr.mxu0 0.0
  %860 = vmatpush1.msra.mxu0 0.0
  %861 = vmatprep.subr.mxu0 0.0
  %862 = vmatpush1.msra.mxu0 0.0
  %863 = vmatprep.subr.mxu0 0.0
  %864 = vmatpush1.msra.mxu0 0.0
  %865 = vmatprep.subr.mxu0 0.0
  %866 = vmatpush1.msra.mxu0 0.0
  %867 = vmatprep.subr.mxu0 0.0
  %868 = vmatpush1.msra.mxu0 0.0
  %869 = vmatprep.subr.mxu0 0.0
  %870 = vmatpush1.msra.mxu0 0.0
  %871 = vmatprep.subr.mxu0 0.0
  %872 = vmatpush1.msra.mxu0 0.0
  %873 = vmatprep.subr.mxu0 0.0
  %874 = vmatpush1.msra.mxu0 0.0
  %875 = vmatprep.subr.mxu0 0.0
  %876 = vmatpush1.msra.mxu0 0.0
  %877 = vmatprep.subr.mxu0 0.0
  %878 = vmatpush1.msra.mxu0 0.0
  %879 = vmatprep.subr.mxu0 0.0
  %880 = vmatpush1.msra.mxu0 0.0
  %881 = vmatprep.subr.mxu0 0.0
  %882 = vmatpush1.msra.mxu0 0.0
  %883 = vmatprep.subr.mxu0 0.0
  %884 = vmatpush1.msra.mxu0 0.0
  %885 = vmatprep.subr.mxu0 0.0
  %886 = vmatpush1.msra.mxu0 0.0
  %887 = vmatprep.subr.mxu0 0.0
  %888 = vmatpush1.msra.mxu0 0.0
  %889 = vmatprep.subr.mxu0 0.0
  %890 = vmatpush1.msra.mxu0 0.0
  %891 = vmatprep.subr.mxu0 0.0
  %892 = vmatpush1.msra.mxu0 0.0
  %893 = vmatprep.subr.mxu0 0.0
  %894 = vmatpush1.msra.mxu0 0.0
  %895 = vmatprep.subr.mxu0 0.0
  %896 = vmatpush1.msra.mxu0 0.0
  %897 = vmatprep.subr.mxu0 0.0
  %898 = vmatpush1.msra.mxu0 0.0
  %899 = vmatprep.subr.mxu0 0.0
  %900 = vmatpush1.msra.mxu0 0.0
  %901 = vmatprep.subr.mxu0 0.0
  %902 = vmatpush1.msra.mxu0 0.0
  %903 = vmatprep.subr.mxu0 0.0
  %904 = vmatpush1.msra.mxu0 0.0
  %905 = vmatprep.subr.mxu0 0.0
  %906 = vmatpush1.msra.mxu0 0.0
  %907 = vmatprep.subr.mxu0 0.0
  %908 = vmatpush1.msra.mxu0 0.0
  %909 = vmatprep.subr.mxu0 0.0
  %910 = vmatpush1.msra.mxu0 0.0
  %911 = vmatprep.subr.mxu0 0.0
  %912 = vmatpush1.msra.mxu0 0.0
  %913 = vmatprep.subr.mxu0 0.0
  %914 = vmatpush1.msra.mxu0 0.0
  %915 = vmatprep.mubr.f32.mxu0 0.0
  %916 = vmatmul.mubr.f32.gmra.mrb[0].mxu0 %v849
  %v917 = vpop.f32.mrb[0].mxu0
  %v918 = vadd.f32 0.0, %v917
  %v919 = vpop.f32.mrb[0].mxu0
  %920 = vdwg.mxu0
  %v921 = vadd.f32 %v848, %v918
  %v922 = vtanh.pop %v921
  %v923 = vxor.u32 %v921, 2147483648
  %v924 = vmul.f32 %v923, 1.442695
  %v925 = vpow.pop %v924
  %v926 = vadd.f32 %v925, 1.0
  %v927 = vrcp.pop %v926
  %v928 = vmul.f32 1.0, %v927
  %v929 = vsel %vm401, %v922, %v928
  %v930 = vmul.f32 %v929, %v728
  %932 = vrot.lane.b32.xlu0 %v929, 64
  %v933 = vpop.permute.xlu0 %932
  %v935 = vmul.f32 %v929, %v933
  %937 = vrot.lane.b32.xlu0 %v935, 32
  %v938 = vpop.permute.xlu0 %937
  %v940 = vadd.f32 %v930, %v938
  %v941 = vtanh.pop %v940
  %943 = vrot.lane.b32.xlu0 %v941, 64
  %v944 = vpop.permute.xlu0 %943
  %v946 = vmul.f32 %v929, %v944
  %948 = vrot.lane.b32.xlu0 %v946, 32
  %v949 = vpop.permute.xlu0 %948
  %s951 = scalar_lea.vmem %s8, 16
  %952 = vst.msk [vmem:[%s951] sm:$0xff] %vm415, %v949
  %s953 = scalar_lea.vmem [#allocation7], 40
  %v954 = vld [vmem:[%s953] sm:$0xff]
  %v955 = vsel %vm415, %v843, 0
  %957 = vmatprep.subr.mxu0 0.0
  %958 = vmatpush1.msra.mxu0 %v406
  %959 = vmatprep.subr.mxu0 0.0
  %960 = vmatpush1.msra.mxu0 %v407
  %961 = vmatprep.subr.mxu0 0.0
  %962 = vmatpush1.msra.mxu0 %v408
  %963 = vmatprep.subr.mxu0 0.0
  %964 = vmatpush1.msra.mxu0 %v409
  %965 = vmatprep.subr.mxu0 0.0
  %966 = vmatpush1.msra.mxu0 0.0
  %967 = vmatprep.subr.mxu0 0.0
  %968 = vmatpush1.msra.mxu0 0.0
  %969 = vmatprep.subr.mxu0 0.0
  %970 = vmatpush1.msra.mxu0 0.0
  %971 = vmatprep.subr.mxu0 0.0
  %972 = vmatpush1.msra.mxu0 0.0
  %973 = vmatprep.subr.mxu0 0.0
  %974 = vmatpush1.msra.mxu0 0.0
  %975 = vmatprep.subr.mxu0 0.0
  %976 = vmatpush1.msra.mxu0 0.0
  %977 = vmatprep.subr.mxu0 0.0
  %978 = vmatpush1.msra.mxu0 0.0
  %979 = vmatprep.subr.mxu0 0.0
  %980 = vmatpush1.msra.mxu0 0.0
  %981 = vmatprep.subr.mxu0 0.0
  %982 = vmatpush1.msra.mxu0 0.0
  %983 = vmatprep.subr.mxu0 0.0
  %984 = vmatpush1.msra.mxu0 0.0
  %985 = vmatprep.subr.mxu0 0.0
  %986 = vmatpush1.msra.mxu0 0.0
  %987 = vmatprep.subr.mxu0 0.0
  %988 = vmatpush1.msra.mxu0 0.0
  %989 = vmatprep.subr.mxu0 0.0
  %990 = vmatpush1.msra.mxu0 0.0
  %991 = vmatprep.subr.mxu0 0.0
  %992 = vmatpush1.msra.mxu0 0.0
  %993 = vmatprep.subr.mxu0 0.0
  %994 = vmatpush1.msra.mxu0 0.0
  %995 = vmatprep.subr.mxu0 0.0
  %996 = vmatpush1.msra.mxu0 0.0
  %997 = vmatprep.subr.mxu0 0.0
  %998 = vmatpush1.msra.mxu0 0.0
  %999 = vmatprep.subr.mxu0 0.0
  %1000 = vmatpush1.msra.mxu0 0.0
  %1001 = vmatprep.subr.mxu0 0.0
  %1002 = vmatpush1.msra.mxu0 0.0
  %1003 = vmatprep.subr.mxu0 0.0
  %1004 = vmatpush1.msra.mxu0 0.0
  %1005 = vmatprep.subr.mxu0 0.0
  %1006 = vmatpush1.msra.mxu0 0.0
  %1007 = vmatprep.subr.mxu0 0.0
  %1008 = vmatpush1.msra.mxu0 0.0
  %1009 = vmatprep.subr.mxu0 0.0
  %1010 = vmatpush1.msra.mxu0 0.0
  %1011 = vmatprep.subr.mxu0 0.0
  %1012 = vmatpush1.msra.mxu0 0.0
  %1013 = vmatprep.subr.mxu0 0.0
  %1014 = vmatpush1.msra.mxu0 0.0
  %1015 = vmatprep.subr.mxu0 0.0
  %1016 = vmatpush1.msra.mxu0 0.0
  %1017 = vmatprep.subr.mxu0 0.0
  %1018 = vmatpush1.msra.mxu0 0.0
  %1019 = vmatprep.subr.mxu0 0.0
  %1020 = vmatpush1.msra.mxu0 0.0
  %1021 = vmatprep.mubr.f32.mxu0 0.0
  %1022 = vmatmul.mubr.f32.gmra.mrb[0].mxu0 %v955
  %v1023 = vpop.f32.mrb[0].mxu0
  %v1024 = vadd.f32 0.0, %v1023
  %v1025 = vpop.f32.mrb[0].mxu0
  %1026 = vdwg.mxu0
  %v1027 = vadd.f32 %v954, %v1024
  %v1028 = vtanh.pop %v1027
  %v1029 = vxor.u32 %v1027, 2147483648
  %v1030 = vmul.f32 %v1029, 1.442695
  %v1031 = vpow.pop %v1030
  %v1032 = vadd.f32 %v1031, 1.0
  %v1033 = vrcp.pop %v1032
  %v1034 = vmul.f32 1.0, %v1033
  %v1035 = vsel %vm401, %v1028, %v1034
  %v1036 = vmul.f32 %v1035, %v834
  %1038 = vrot.lane.b32.xlu0 %v1035, 64
  %v1039 = vpop.permute.xlu0 %1038
  %v1041 = vmul.f32 %v1035, %v1039
  %1043 = vrot.lane.b32.xlu0 %v1041, 32
  %v1044 = vpop.permute.xlu0 %1043
  %v1046 = vadd.f32 %v1036, %v1044
  %v1047 = vtanh.pop %v1046
  %1049 = vrot.lane.b32.xlu0 %v1047, 64
  %v1050 = vpop.permute.xlu0 %1049
  %v1052 = vmul.f32 %v1035, %v1050
  %1054 = vrot.lane.b32.xlu0 %v1052, 32
  %v1055 = vpop.permute.xlu0 %1054
  %s1057 = scalar_lea.vmem %s64, 40
  %1058 = vst.msk [vmem:[%s1057] sm:$0xff] %vm415, %v1055
  %s1059 = scalar_lea.vmem [#allocation6], 24
  %v1060 = vld [vmem:[%s1059] sm:$0xff]
  %v1061 = vsel %vm415, %v949, 0
  %1063 = vmatprep.subr.mxu0 0.0
  %1064 = vmatpush1.msra.mxu0 %v402
  %1065 = vmatprep.subr.mxu0 0.0
  %1066 = vmatpush1.msra.mxu0 %v403
  %1067 = vmatprep.subr.mxu0 0.0
  %1068 = vmatpush1.msra.mxu0 %v404
  %1069 = vmatprep.subr.mxu0 0.0
  %1070 = vmatpush1.msra.mxu0 %v405
  %1071 = vmatprep.subr.mxu0 0.0
  %1072 = vmatpush1.msra.mxu0 0.0
  %1073 = vmatprep.subr.mxu0 0.0
  %1074 = vmatpush1.msra.mxu0 0.0
  %1075 = vmatprep.subr.mxu0 0.0
  %1076 = vmatpush1.msra.mxu0 0.0
  %1077 = vmatprep.subr.mxu0 0.0
  %1078 = vmatpush1.msra.mxu0 0.0
  %1079 = vmatprep.subr.mxu0 0.0
  %1080 = vmatpush1.msra.mxu0 0.0
  %1081 = vmatprep.subr.mxu0 0.0
  %1082 = vmatpush1.msra.mxu0 0.0
  %1083 = vmatprep.subr.mxu0 0.0
  %1084 = vmatpush1.msra.mxu0 0.0
  %1085 = vmatprep.subr.mxu0 0.0
  %1086 = vmatpush1.msra.mxu0 0.0
  %1087 = vmatprep.subr.mxu0 0.0
  %1088 = vmatpush1.msra.mxu0 0.0
  %1089 = vmatprep.subr.mxu0 0.0
  %1090 = vmatpush1.msra.mxu0 0.0
  %1091 = vmatprep.subr.mxu0 0.0
  %1092 = vmatpush1.msra.mxu0 0.0
  %1093 = vmatprep.subr.mxu0 0.0
  %1094 = vmatpush1.msra.mxu0 0.0
  %1095 = vmatprep.subr.mxu0 0.0
  %1096 = vmatpush1.msra.mxu0 0.0
  %1097 = vmatprep.subr.mxu0 0.0
  %1098 = vmatpush1.msra.mxu0 0.0
  %1099 = vmatprep.subr.mxu0 0.0
  %1100 = vmatpush1.msra.mxu0 0.0
  %1101 = vmatprep.subr.mxu0 0.0
  %1102 = vmatpush1.msra.mxu0 0.0
  %1103 = vmatprep.subr.mxu0 0.0
  %1104 = vmatpush1.msra.mxu0 0.0
  %1105 = vmatprep.subr.mxu0 0.0
  %1106 = vmatpush1.msra.mxu0 0.0
  %1107 = vmatprep.subr.mxu0 0.0
  %1108 = vmatpush1.msra.mxu0 0.0
  %1109 = vmatprep.subr.mxu0 0.0
  %1110 = vmatpush1.msra.mxu0 0.0
  %1111 = vmatprep.subr.mxu0 0.0
  %1112 = vmatpush1.msra.mxu0 0.0
  %1113 = vmatprep.subr.mxu0 0.0
  %1114 = vmatpush1.msra.mxu0 0.0
  %1115 = vmatprep.subr.mxu0 0.0
  %1116 = vmatpush1.msra.mxu0 0.0
  %1117 = vmatprep.subr.mxu0 0.0
  %1118 = vmatpush1.msra.mxu0 0.0
  %1119 = vmatprep.subr.mxu0 0.0
  %1120 = vmatpush1.msra.mxu0 0.0
  %1121 = vmatprep.subr.mxu0 0.0
  %1122 = vmatpush1.msra.mxu0 0.0
  %1123 = vmatprep.subr.mxu0 0.0
  %1124 = vmatpush1.msra.mxu0 0.0
  %1125 = vmatprep.subr.mxu0 0.0
  %1126 = vmatpush1.msra.mxu0 0.0
  %1127 = vmatprep.mubr.f32.mxu0 0.0
  %1128 = vmatmul.mubr.f32.gmra.mrb[0].mxu0 %v1061
  %v1129 = vpop.f32.mrb[0].mxu0
  %v1130 = vadd.f32 0.0, %v1129
  %v1131 = vpop.f32.mrb[0].mxu0
  %1132 = vdwg.mxu0
  %v1133 = vadd.f32 %v1060, %v1130
  %v1134 = vtanh.pop %v1133
  %v1135 = vxor.u32 %v1133, 2147483648
  %v1136 = vmul.f32 %v1135, 1.442695
  %v1137 = vpow.pop %v1136
  %v1138 = vadd.f32 %v1137, 1.0
  %v1139 = vrcp.pop %v1138
  %v1140 = vmul.f32 1.0, %v1139
  %v1141 = vsel %vm401, %v1134, %v1140
  %v1142 = vmul.f32 %v1141, %v940
  %1144 = vrot.lane.b32.xlu0 %v1141, 64
  %v1145 = vpop.permute.xlu0 %1144
  %v1147 = vmul.f32 %v1141, %v1145
  %1149 = vrot.lane.b32.xlu0 %v1147, 32
  %v1150 = vpop.permute.xlu0 %1149
  %v1152 = vadd.f32 %v1142, %v1150
  %v1153 = vtanh.pop %v1152
  %1155 = vrot.lane.b32.xlu0 %v1153, 64
  %v1156 = vpop.permute.xlu0 %1155
  %v1158 = vmul.f32 %v1141, %v1156
  %1160 = vrot.lane.b32.xlu0 %v1158, 32
  %v1161 = vpop.permute.xlu0 %1160
  %s1163 = scalar_lea.vmem %s8, 24
  %1164 = vst.msk [vmem:[%s1163] sm:$0xff] %vm415, %v1161
  %s1165 = scalar_lea.vmem [#allocation7], 32
  %v1166 = vld [vmem:[%s1165] sm:$0xff]
  %v1167 = vsel %vm415, %v1055, 0
  %1169 = vmatprep.subr.mxu0 0.0
  %1170 = vmatpush1.msra.mxu0 %v406
  %1171 = vmatprep.subr.mxu0 0.0
  %1172 = vmatpush1.msra.mxu0 %v407
  %1173 = vmatprep.subr.mxu0 0.0
  %1174 = vmatpush1.msra.mxu0 %v408
  %1175 = vmatprep.subr.mxu0 0.0
  %1176 = vmatpush1.msra.mxu0 %v409
  %1177 = vmatprep.subr.mxu0 0.0
  %1178 = vmatpush1.msra.mxu0 0.0
  %1179 = vmatprep.subr.mxu0 0.0
  %1180 = vmatpush1.msra.mxu0 0.0
  %1181 = vmatprep.subr.mxu0 0.0
  %1182 = vmatpush1.msra.mxu0 0.0
  %1183 = vmatprep.subr.mxu0 0.0
  %1184 = vmatpush1.msra.mxu0 0.0
  %1185 = vmatprep.subr.mxu0 0.0
  %1186 = vmatpush1.msra.mxu0 0.0
  %1187 = vmatprep.subr.mxu0 0.0
  %1188 = vmatpush1.msra.mxu0 0.0
  %1189 = vmatprep.subr.mxu0 0.0
  %1190 = vmatpush1.msra.mxu0 0.0
  %1191 = vmatprep.subr.mxu0 0.0
  %1192 = vmatpush1.msra.mxu0 0.0
  %1193 = vmatprep.subr.mxu0 0.0
  %1194 = vmatpush1.msra.mxu0 0.0
  %1195 = vmatprep.subr.mxu0 0.0
  %1196 = vmatpush1.msra.mxu0 0.0
  %1197 = vmatprep.subr.mxu0 0.0
  %1198 = vmatpush1.msra.mxu0 0.0
  %1199 = vmatprep.subr.mxu0 0.0
  %1200 = vmatpush1.msra.mxu0 0.0
  %1201 = vmatprep.subr.mxu0 0.0
  %1202 = vmatpush1.msra.mxu0 0.0
  %1203 = vmatprep.subr.mxu0 0.0
  %1204 = vmatpush1.msra.mxu0 0.0
  %1205 = vmatprep.subr.mxu0 0.0
  %1206 = vmatpush1.msra.mxu0 0.0
  %1207 = vmatprep.subr.mxu0 0.0
  %1208 = vmatpush1.msra.mxu0 0.0
  %1209 = vmatprep.subr.mxu0 0.0
  %1210 = vmatpush1.msra.mxu0 0.0
  %1211 = vmatprep.subr.mxu0 0.0
  %1212 = vmatpush1.msra.mxu0 0.0
  %1213 = vmatprep.subr.mxu0 0.0
  %1214 = vmatpush1.msra.mxu0 0.0
  %1215 = vmatprep.subr.mxu0 0.0
  %1216 = vmatpush1.msra.mxu0 0.0
  %1217 = vmatprep.subr.mxu0 0.0
  %1218 = vmatpush1.msra.mxu0 0.0
  %1219 = vmatprep.subr.mxu0 0.0
  %1220 = vmatpush1.msra.mxu0 0.0
  %1221 = vmatprep.subr.mxu0 0.0
  %1222 = vmatpush1.msra.mxu0 0.0
  %1223 = vmatprep.subr.mxu0 0.0
  %1224 = vmatpush1.msra.mxu0 0.0
  %1225 = vmatprep.subr.mxu0 0.0
  %1226 = vmatpush1.msra.mxu0 0.0
  %1227 = vmatprep.subr.mxu0 0.0
  %1228 = vmatpush1.msra.mxu0 0.0
  %1229 = vmatprep.subr.mxu0 0.0
  %1230 = vmatpush1.msra.mxu0 0.0
  %1231 = vmatprep.subr.mxu0 0.0
  %1232 = vmatpush1.msra.mxu0 0.0
  %1233 = vmatprep.mubr.f32.mxu0 0.0
  %1234 = vmatmul.mubr.f32.gmra.mrb[0].mxu0 %v1167
  %v1235 = vpop.f32.mrb[0].mxu0
  %v1236 = vadd.f32 0.0, %v1235
  %v1237 = vpop.f32.mrb[0].mxu0
  %1238 = vdwg.mxu0
  %v1239 = vadd.f32 %v1166, %v1236
  %v1240 = vtanh.pop %v1239
  %v1241 = vxor.u32 %v1239, 2147483648
  %v1242 = vmul.f32 %v1241, 1.442695
  %v1243 = vpow.pop %v1242
  %v1244 = vadd.f32 %v1243, 1.0
  %v1245 = vrcp.pop %v1244
  %v1246 = vmul.f32 1.0, %v1245
  %v1247 = vsel %vm401, %v1240, %v1246
  %v1248 = vmul.f32 %v1247, %v1046
  %1250 = vrot.lane.b32.xlu0 %v1247, 64
  %v1251 = vpop.permute.xlu0 %1250
  %v1253 = vmul.f32 %v1247, %v1251
  %1255 = vrot.lane.b32.xlu0 %v1253, 32
  %v1256 = vpop.permute.xlu0 %1255
  %v1258 = vadd.f32 %v1248, %v1256
  %v1259 = vtanh.pop %v1258
  %1261 = vrot.lane.b32.xlu0 %v1259, 64
  %v1262 = vpop.permute.xlu0 %1261
  %v1264 = vmul.f32 %v1247, %v1262
  %1266 = vrot.lane.b32.xlu0 %v1264, 32
  %v1267 = vpop.permute.xlu0 %1266
  %s1269 = scalar_lea.vmem %s64, 32
  %1270 = vst.msk [vmem:[%s1269] sm:$0xff] %vm415, %v1267
  %s1271 = scalar_lea.vmem [#allocation6], 32
  %v1272 = vld [vmem:[%s1271] sm:$0xff]
  %v1273 = vsel %vm415, %v1161, 0
  %1275 = vmatprep.subr.mxu0 0.0
  %1276 = vmatpush1.msra.mxu0 %v402
  %1277 = vmatprep.subr.mxu0 0.0
  %1278 = vmatpush1.msra.mxu0 %v403
  %1279 = vmatprep.subr.mxu0 0.0
  %1280 = vmatpush1.msra.mxu0 %v404
  %1281 = vmatprep.subr.mxu0 0.0
  %1282 = vmatpush1.msra.mxu0 %v405
  %1283 = vmatprep.subr.mxu0 0.0
  %1284 = vmatpush1.msra.mxu0 0.0
  %1285 = vmatprep.subr.mxu0 0.0
  %1286 = vmatpush1.msra.mxu0 0.0
  %1287 = vmatprep.subr.mxu0 0.0
  %1288 = vmatpush1.msra.mxu0 0.0
  %1289 = vmatprep.subr.mxu0 0.0
  %1290 = vmatpush1.msra.mxu0 0.0
  %1291 = vmatprep.subr.mxu0 0.0
  %1292 = vmatpush1.msra.mxu0 0.0
  %1293 = vmatprep.subr.mxu0 0.0
  %1294 = vmatpush1.msra.mxu0 0.0
  %1295 = vmatprep.subr.mxu0 0.0
  %1296 = vmatpush1.msra.mxu0 0.0
  %1297 = vmatprep.subr.mxu0 0.0
  %1298 = vmatpush1.msra.mxu0 0.0
  %1299 = vmatprep.subr.mxu0 0.0
  %1300 = vmatpush1.msra.mxu0 0.0
  %1301 = vmatprep.subr.mxu0 0.0
  %1302 = vmatpush1.msra.mxu0 0.0
  %1303 = vmatprep.subr.mxu0 0.0
  %1304 = vmatpush1.msra.mxu0 0.0
  %1305 = vmatprep.subr.mxu0 0.0
  %1306 = vmatpush1.msra.mxu0 0.0
  %1307 = vmatprep.subr.mxu0 0.0
  %1308 = vmatpush1.msra.mxu0 0.0
  %1309 = vmatprep.subr.mxu0 0.0
  %1310 = vmatpush1.msra.mxu0 0.0
  %1311 = vmatprep.subr.mxu0 0.0
  %1312 = vmatpush1.msra.mxu0 0.0
  %1313 = vmatprep.subr.mxu0 0.0
  %1314 = vmatpush1.msra.mxu0 0.0
  %1315 = vmatprep.subr.mxu0 0.0
  %1316 = vmatpush1.msra.mxu0 0.0
  %1317 = vmatprep.subr.mxu0 0.0
  %1318 = vmatpush1.msra.mxu0 0.0
  %1319 = vmatprep.subr.mxu0 0.0
  %1320 = vmatpush1.msra.mxu0 0.0
  %1321 = vmatprep.subr.mxu0 0.0
  %1322 = vmatpush1.msra.mxu0 0.0
  %1323 = vmatprep.subr.mxu0 0.0
  %1324 = vmatpush1.msra.mxu0 0.0
  %1325 = vmatprep.subr.mxu0 0.0
  %1326 = vmatpush1.msra.mxu0 0.0
  %1327 = vmatprep.subr.mxu0 0.0
  %1328 = vmatpush1.msra.mxu0 0.0
  %1329 = vmatprep.subr.mxu0 0.0
  %1330 = vmatpush1.msra.mxu0 0.0
  %1331 = vmatprep.subr.mxu0 0.0
  %1332 = vmatpush1.msra.mxu0 0.0
  %1333 = vmatprep.subr.mxu0 0.0
  %1334 = vmatpush1.msra.mxu0 0.0
  %1335 = vmatprep.subr.mxu0 0.0
  %1336 = vmatpush1.msra.mxu0 0.0
  %1337 = vmatprep.subr.mxu0 0.0
  %1338 = vmatpush1.msra.mxu0 0.0
  %1339 = vmatprep.mubr.f32.mxu0 0.0
  %1340 = vmatmul.mubr.f32.gmra.mrb[0].mxu0 %v1273
  %v1341 = vpop.f32.mrb[0].mxu0
  %v1342 = vadd.f32 0.0, %v1341
  %v1343 = vpop.f32.mrb[0].mxu0
  %1344 = vdwg.mxu0
  %v1345 = vadd.f32 %v1272, %v1342
  %v1346 = vtanh.pop %v1345
  %v1347 = vxor.u32 %v1345, 2147483648
  %v1348 = vmul.f32 %v1347, 1.442695
  %v1349 = vpow.pop %v1348
  %v1350 = vadd.f32 %v1349, 1.0
  %v1351 = vrcp.pop %v1350
  %v1352 = vmul.f32 1.0, %v1351
  %v1353 = vsel %vm401, %v1346, %v1352
  %v1354 = vmul.f32 %v1353, %v1152
  %1356 = vrot.lane.b32.xlu0 %v1353, 64
  %v1357 = vpop.permute.xlu0 %1356
  %v1359 = vmul.f32 %v1353, %v1357
  %1361 = vrot.lane.b32.xlu0 %v1359, 32
  %v1362 = vpop.permute.xlu0 %1361
  %v1364 = vadd.f32 %v1354, %v1362
  %v1365 = vtanh.pop %v1364
  %1367 = vrot.lane.b32.xlu0 %v1365, 64
  %v1368 = vpop.permute.xlu0 %1367
  %v1370 = vmul.f32 %v1353, %v1368
  %1372 = vrot.lane.b32.xlu0 %v1370, 32
  %v1373 = vpop.permute.xlu0 %1372
  %s1375 = scalar_lea.vmem %s8, 32
  %1376 = vst.msk [vmem:[%s1375] sm:$0xff] %vm415, %v1373
  %s1377 = scalar_lea.vmem [#allocation7], 24
  %v1378 = vld [vmem:[%s1377] sm:$0xff]
  %v1379 = vsel %vm415, %v1267, 0
  %1381 = vmatprep.subr.mxu0 0.0
  %1382 = vmatpush1.msra.mxu0 %v406
  %1383 = vmatprep.subr.mxu0 0.0
  %1384 = vmatpush1.msra.mxu0 %v407
  %1385 = vmatprep.subr.mxu0 0.0
  %1386 = vmatpush1.msra.mxu0 %v408
  %1387 = vmatprep.subr.mxu0 0.0
  %1388 = vmatpush1.msra.mxu0 %v409
  %1389 = vmatprep.subr.mxu0 0.0
  %1390 = vmatpush1.msra.mxu0 0.0
  %1391 = vmatprep.subr.mxu0 0.0
  %1392 = vmatpush1.msra.mxu0 0.0
  %1393 = vmatprep.subr.mxu0 0.0
  %1394 = vmatpush1.msra.mxu0 0.0
  %1395 = vmatprep.subr.mxu0 0.0
  %1396 = vmatpush1.msra.mxu0 0.0
  %1397 = vmatprep.subr.mxu0 0.0
  %1398 = vmatpush1.msra.mxu0 0.0
  %1399 = vmatprep.subr.mxu0 0.0
  %1400 = vmatpush1.msra.mxu0 0.0
  %1401 = vmatprep.subr.mxu0 0.0
  %1402 = vmatpush1.msra.mxu0 0.0
  %1403 = vmatprep.subr.mxu0 0.0
  %1404 = vmatpush1.msra.mxu0 0.0
  %1405 = vmatprep.subr.mxu0 0.0
  %1406 = vmatpush1.msra.mxu0 0.0
  %1407 = vmatprep.subr.mxu0 0.0
  %1408 = vmatpush1.msra.mxu0 0.0
  %1409 = vmatprep.subr.mxu0 0.0
  %1410 = vmatpush1.msra.mxu0 0.0
  %1411 = vmatprep.subr.mxu0 0.0
  %1412 = vmatpush1.msra.mxu0 0.0
  %1413 = vmatprep.subr.mxu0 0.0
  %1414 = vmatpush1.msra.mxu0 0.0
  %1415 = vmatprep.subr.mxu0 0.0
  %1416 = vmatpush1.msra.mxu0 0.0
  %1417 = vmatprep.subr.mxu0 0.0
  %1418 = vmatpush1.msra.mxu0 0.0
  %1419 = vmatprep.subr.mxu0 0.0
  %1420 = vmatpush1.msra.mxu0 0.0
  %1421 = vmatprep.subr.mxu0 0.0
  %1422 = vmatpush1.msra.mxu0 0.0
  %1423 = vmatprep.subr.mxu0 0.0
  %1424 = vmatpush1.msra.mxu0 0.0
  %1425 = vmatprep.subr.mxu0 0.0
  %1426 = vmatpush1.msra.mxu0 0.0
  %1427 = vmatprep.subr.mxu0 0.0
  %1428 = vmatpush1.msra.mxu0 0.0
  %1429 = vmatprep.subr.mxu0 0.0
  %1430 = vmatpush1.msra.mxu0 0.0
  %1431 = vmatprep.subr.mxu0 0.0
  %1432 = vmatpush1.msra.mxu0 0.0
  %1433 = vmatprep.subr.mxu0 0.0
  %1434 = vmatpush1.msra.mxu0 0.0
  %1435 = vmatprep.subr.mxu0 0.0
  %1436 = vmatpush1.msra.mxu0 0.0
  %1437 = vmatprep.subr.mxu0 0.0
  %1438 = vmatpush1.msra.mxu0 0.0
  %1439 = vmatprep.subr.mxu0 0.0
  %1440 = vmatpush1.msra.mxu0 0.0
  %1441 = vmatprep.subr.mxu0 0.0
  %1442 = vmatpush1.msra.mxu0 0.0
  %1443 = vmatprep.subr.mxu0 0.0
  %1444 = vmatpush1.msra.mxu0 0.0
  %1445 = vmatprep.mubr.f32.mxu0 0.0
  %1446 = vmatmul.mubr.f32.gmra.mrb[0].mxu0 %v1379
  %v1447 = vpop.f32.mrb[0].mxu0
  %v1448 = vadd.f32 0.0, %v1447
  %v1449 = vpop.f32.mrb[0].mxu0
  %1450 = vdwg.mxu0
  %v1451 = vadd.f32 %v1378, %v1448
  %v1452 = vtanh.pop %v1451
  %v1453 = vxor.u32 %v1451, 2147483648
  %v1454 = vmul.f32 %v1453, 1.442695
  %v1455 = vpow.pop %v1454
  %v1456 = vadd.f32 %v1455, 1.0
  %v1457 = vrcp.pop %v1456
  %v1458 = vmul.f32 1.0, %v1457
  %v1459 = vsel %vm401, %v1452, %v1458
  %v1460 = vmul.f32 %v1459, %v1258
  %1462 = vrot.lane.b32.xlu0 %v1459, 64
  %v1463 = vpop.permute.xlu0 %1462
  %v1465 = vmul.f32 %v1459, %v1463
  %1467 = vrot.lane.b32.xlu0 %v1465, 32
  %v1468 = vpop.permute.xlu0 %1467
  %v1470 = vadd.f32 %v1460, %v1468
  %v1471 = vtanh.pop %v1470
  %1473 = vrot.lane.b32.xlu0 %v1471, 64
  %v1474 = vpop.permute.xlu0 %1473
  %v1476 = vmul.f32 %v1459, %v1474
  %1478 = vrot.lane.b32.xlu0 %v1476, 32
  %v1479 = vpop.permute.xlu0 %1478
  %s1481 = scalar_lea.vmem %s64, 24
  %1482 = vst.msk [vmem:[%s1481] sm:$0xff] %vm415, %v1479
  %s1483 = scalar_lea.vmem [#allocation6], 40
  %v1484 = vld [vmem:[%s1483] sm:$0xff]
  %v1485 = vsel %vm415, %v1373, 0
  %1487 = vmatprep.subr.mxu0 0.0
  %1488 = vmatpush1.msra.mxu0 %v402
  %1489 = vmatprep.subr.mxu0 0.0
  %1490 = vmatpush1.msra.mxu0 %v403
  %1491 = vmatprep.subr.mxu0 0.0
  %1492 = vmatpush1.msra.mxu0 %v404
  %1493 = vmatprep.subr.mxu0 0.0
  %1494 = vmatpush1.msra.mxu0 %v405
  %1495 = vmatprep.subr.mxu0 0.0
  %1496 = vmatpush1.msra.mxu0 0.0
  %1497 = vmatprep.subr.mxu0 0.0
  %1498 = vmatpush1.msra.mxu0 0.0
  %1499 = vmatprep.subr.mxu0 0.0
  %1500 = vmatpush1.msra.mxu0 0.0
  %1501 = vmatprep.subr.mxu0 0.0
  %1502 = vmatpush1.msra.mxu0 0.0
  %1503 = vmatprep.subr.mxu0 0.0
  %1504 = vmatpush1.msra.mxu0 0.0
  %1505 = vmatprep.subr.mxu0 0.0
  %1506 = vmatpush1.msra.mxu0 0.0
  %1507 = vmatprep.subr.mxu0 0.0
  %1508 = vmatpush1.msra.mxu0 0.0
  %1509 = vmatprep.subr.mxu0 0.0
  %1510 = vmatpush1.msra.mxu0 0.0
  %1511 = vmatprep.subr.mxu0 0.0
  %1512 = vmatpush1.msra.mxu0 0.0
  %1513 = vmatprep.subr.mxu0 0.0
  %1514 = vmatpush1.msra.mxu0 0.0
  %1515 = vmatprep.subr.mxu0 0.0
  %1516 = vmatpush1.msra.mxu0 0.0
  %1517 = vmatprep.subr.mxu0 0.0
  %1518 = vmatpush1.msra.mxu0 0.0
  %1519 = vmatprep.subr.mxu0 0.0
  %1520 = vmatpush1.msra.mxu0 0.0
  %1521 = vmatprep.subr.mxu0 0.0
  %1522 = vmatpush1.msra.mxu0 0.0
  %1523 = vmatprep.subr.mxu0 0.0
  %1524 = vmatpush1.msra.mxu0 0.0
  %1525 = vmatprep.subr.mxu0 0.0
  %1526 = vmatpush1.msra.mxu0 0.0
  %1527 = vmatprep.subr.mxu0 0.0
  %1528 = vmatpush1.msra.mxu0 0.0
  %1529 = vmatprep.subr.mxu0 0.0
  %1530 = vmatpush1.msra.mxu0 0.0
  %1531 = vmatprep.subr.mxu0 0.0
  %1532 = vmatpush1.msra.mxu0 0.0
  %1533 = vmatprep.subr.mxu0 0.0
  %1534 = vmatpush1.msra.mxu0 0.0
  %1535 = vmatprep.subr.mxu0 0.0
  %1536 = vmatpush1.msra.mxu0 0.0
  %1537 = vmatprep.subr.mxu0 0.0
  %1538 = vmatpush1.msra.mxu0 0.0
  %1539 = vmatprep.subr.mxu0 0.0
  %1540 = vmatpush1.msra.mxu0 0.0
  %1541 = vmatprep.subr.mxu0 0.0
  %1542 = vmatpush1.msra.mxu0 0.0
  %1543 = vmatprep.subr.mxu0 0.0
  %1544 = vmatpush1.msra.mxu0 0.0
  %1545 = vmatprep.subr.mxu0 0.0
  %1546 = vmatpush1.msra.mxu0 0.0
  %1547 = vmatprep.subr.mxu0 0.0
  %1548 = vmatpush1.msra.mxu0 0.0
  %1549 = vmatprep.subr.mxu0 0.0
  %1550 = vmatpush1.msra.mxu0 0.0
  %1551 = vmatprep.mubr.f32.mxu0 0.0
  %1552 = vmatmul.mubr.f32.gmra.mrb[0].mxu0 %v1485
  %v1553 = vpop.f32.mrb[0].mxu0
  %v1554 = vadd.f32 0.0, %v1553
  %v1555 = vpop.f32.mrb[0].mxu0
  %1556 = vdwg.mxu0
  %v1557 = vadd.f32 %v1484, %v1554
  %v1558 = vtanh.pop %v1557
  %v1559 = vxor.u32 %v1557, 2147483648
  %v1560 = vmul.f32 %v1559, 1.442695
  %v1561 = vpow.pop %v1560
  %v1562 = vadd.f32 %v1561, 1.0
  %v1563 = vrcp.pop %v1562
  %v1564 = vmul.f32 1.0, %v1563
  %v1565 = vsel %vm401, %v1558, %v1564
  %v1566 = vmul.f32 %v1565, %v1364
  %1568 = vrot.lane.b32.xlu0 %v1565, 64
  %v1569 = vpop.permute.xlu0 %1568
  %v1571 = vmul.f32 %v1565, %v1569
  %1573 = vrot.lane.b32.xlu0 %v1571, 32
  %v1574 = vpop.permute.xlu0 %1573
  %v1576 = vadd.f32 %v1566, %v1574
  %v1577 = vtanh.pop %v1576
  %1579 = vrot.lane.b32.xlu0 %v1577, 64
  %v1580 = vpop.permute.xlu0 %1579
  %v1582 = vmul.f32 %v1565, %v1580
  %1584 = vrot.lane.b32.xlu0 %v1582, 32
  %v1585 = vpop.permute.xlu0 %1584
  %s1587 = scalar_lea.vmem %s8, 40
  %1588 = vst.msk [vmem:[%s1587] sm:$0xff] %vm415, %v1585
  %s1589 = scalar_lea.vmem [#allocation7], 16
  %v1590 = vld [vmem:[%s1589] sm:$0xff]
  %v1591 = vsel %vm415, %v1479, 0
  %1593 = vmatprep.subr.mxu0 0.0
  %1594 = vmatpush1.msra.mxu0 %v406
  %1595 = vmatprep.subr.mxu0 0.0
  %1596 = vmatpush1.msra.mxu0 %v407
  %1597 = vmatprep.subr.mxu0 0.0
  %1598 = vmatpush1.msra.mxu0 %v408
  %1599 = vmatprep.subr.mxu0 0.0
  %1600 = vmatpush1.msra.mxu0 %v409
  %1601 = vmatprep.subr.mxu0 0.0
  %1602 = vmatpush1.msra.mxu0 0.0
  %1603 = vmatprep.subr.mxu0 0.0
  %1604 = vmatpush1.msra.mxu0 0.0
  %1605 = vmatprep.subr.mxu0 0.0
  %1606 = vmatpush1.msra.mxu0 0.0
  %1607 = vmatprep.subr.mxu0 0.0
  %1608 = vmatpush1.msra.mxu0 0.0
  %1609 = vmatprep.subr.mxu0 0.0
  %1610 = vmatpush1.msra.mxu0 0.0
  %1611 = vmatprep.subr.mxu0 0.0
  %1612 = vmatpush1.msra.mxu0 0.0
  %1613 = vmatprep.subr.mxu0 0.0
  %1614 = vmatpush1.msra.mxu0 0.0
  %1615 = vmatprep.subr.mxu0 0.0
  %1616 = vmatpush1.msra.mxu0 0.0
  %1617 = vmatprep.subr.mxu0 0.0
  %1618 = vmatpush1.msra.mxu0 0.0
  %1619 = vmatprep.subr.mxu0 0.0
  %1620 = vmatpush1.msra.mxu0 0.0
  %1621 = vmatprep.subr.mxu0 0.0
  %1622 = vmatpush1.msra.mxu0 0.0
  %1623 = vmatprep.subr.mxu0 0.0
  %1624 = vmatpush1.msra.mxu0 0.0
  %1625 = vmatprep.subr.mxu0 0.0
  %1626 = vmatpush1.msra.mxu0 0.0
  %1627 = vmatprep.subr.mxu0 0.0
  %1628 = vmatpush1.msra.mxu0 0.0
  %1629 = vmatprep.subr.mxu0 0.0
  %1630 = vmatpush1.msra.mxu0 0.0
  %1631 = vmatprep.subr.mxu0 0.0
  %1632 = vmatpush1.msra.mxu0 0.0
  %1633 = vmatprep.subr.mxu0 0.0
  %1634 = vmatpush1.msra.mxu0 0.0
  %1635 = vmatprep.subr.mxu0 0.0
  %1636 = vmatpush1.msra.mxu0 0.0
  %1637 = vmatprep.subr.mxu0 0.0
  %1638 = vmatpush1.msra.mxu0 0.0
  %1639 = vmatprep.subr.mxu0 0.0
  %1640 = vmatpush1.msra.mxu0 0.0
  %1641 = vmatprep.subr.mxu0 0.0
  %1642 = vmatpush1.msra.mxu0 0.0
  %1643 = vmatprep.subr.mxu0 0.0
  %1644 = vmatpush1.msra.mxu0 0.0
  %1645 = vmatprep.subr.mxu0 0.0
  %1646 = vmatpush1.msra.mxu0 0.0
  %1647 = vmatprep.subr.mxu0 0.0
  %1648 = vmatpush1.msra.mxu0 0.0
  %1649 = vmatprep.subr.mxu0 0.0
  %1650 = vmatpush1.msra.mxu0 0.0
  %1651 = vmatprep.subr.mxu0 0.0
  %1652 = vmatpush1.msra.mxu0 0.0
  %1653 = vmatprep.subr.mxu0 0.0
  %1654 = vmatpush1.msra.mxu0 0.0
  %1655 = vmatprep.subr.mxu0 0.0
  %1656 = vmatpush1.msra.mxu0 0.0
  %1657 = vmatprep.mubr.f32.mxu0 0.0
  %1658 = vmatmul.mubr.f32.gmra.mrb[0].mxu0 %v1591
  %v1659 = vpop.f32.mrb[0].mxu0
  %v1660 = vadd.f32 0.0, %v1659
  %v1661 = vpop.f32.mrb[0].mxu0
  %1662 = vdwg.mxu0
  %v1663 = vadd.f32 %v1590, %v1660
  %v1664 = vtanh.pop %v1663
  %v1665 = vxor.u32 %v1663, 2147483648
  %v1666 = vmul.f32 %v1665, 1.442695
  %v1667 = vpow.pop %v1666
  %v1668 = vadd.f32 %v1667, 1.0
  %v1669 = vrcp.pop %v1668
  %v1670 = vmul.f32 1.0, %v1669
  %v1671 = vsel %vm401, %v1664, %v1670
  %v1672 = vmul.f32 %v1671, %v1470
  %1674 = vrot.lane.b32.xlu0 %v1671, 64
  %v1675 = vpop.permute.xlu0 %1674
  %v1677 = vmul.f32 %v1671, %v1675
  %1679 = vrot.lane.b32.xlu0 %v1677, 32
  %v1680 = vpop.permute.xlu0 %1679
  %v1682 = vadd.f32 %v1672, %v1680
  %v1683 = vtanh.pop %v1682
  %1685 = vrot.lane.b32.xlu0 %v1683, 64
  %v1686 = vpop.permute.xlu0 %1685
  %v1688 = vmul.f32 %v1671, %v1686
  %1690 = vrot.lane.b32.xlu0 %v1688, 32
  %v1691 = vpop.permute.xlu0 %1690
  %s1693 = scalar_lea.vmem %s64, 16
  %1694 = vst.msk [vmem:[%s1693] sm:$0xff] %vm415, %v1691
  %s1695 = scalar_lea.vmem [#allocation6], 48
  %v1696 = vld [vmem:[%s1695] sm:$0xff]
  %v1697 = vsel %vm415, %v1585, 0
  %1699 = vmatprep.subr.mxu0 0.0
  %1700 = vmatpush1.msra.mxu0 %v402
  %1701 = vmatprep.subr.mxu0 0.0
  %1702 = vmatpush1.msra.mxu0 %v403
  %1703 = vmatprep.subr.mxu0 0.0
  %1704 = vmatpush1.msra.mxu0 %v404
  %1705 = vmatprep.subr.mxu0 0.0
  %1706 = vmatpush1.msra.mxu0 %v405
  %1707 = vmatprep.subr.mxu0 0.0
  %1708 = vmatpush1.msra.mxu0 0.0
  %1709 = vmatprep.subr.mxu0 0.0
  %1710 = vmatpush1.msra.mxu0 0.0
  %1711 = vmatprep.subr.mxu0 0.0
  %1712 = vmatpush1.msra.mxu0 0.0
  %1713 = vmatprep.subr.mxu0 0.0
  %1714 = vmatpush1.msra.mxu0 0.0
  %1715 = vmatprep.subr.mxu0 0.0
  %1716 = vmatpush1.msra.mxu0 0.0
  %1717 = vmatprep.subr.mxu0 0.0
  %1718 = vmatpush1.msra.mxu0 0.0
  %1719 = vmatprep.subr.mxu0 0.0
  %1720 = vmatpush1.msra.mxu0 0.0
  %1721 = vmatprep.subr.mxu0 0.0
  %1722 = vmatpush1.msra.mxu0 0.0
  %1723 = vmatprep.subr.mxu0 0.0
  %1724 = vmatpush1.msra.mxu0 0.0
  %1725 = vmatprep.subr.mxu0 0.0
  %1726 = vmatpush1.msra.mxu0 0.0
  %1727 = vmatprep.subr.mxu0 0.0
  %1728 = vmatpush1.msra.mxu0 0.0
  %1729 = vmatprep.subr.mxu0 0.0
  %1730 = vmatpush1.msra.mxu0 0.0
  %1731 = vmatprep.subr.mxu0 0.0
  %1732 = vmatpush1.msra.mxu0 0.0
  %1733 = vmatprep.subr.mxu0 0.0
  %1734 = vmatpush1.msra.mxu0 0.0
  %1735 = vmatprep.subr.mxu0 0.0
  %1736 = vmatpush1.msra.mxu0 0.0
  %1737 = vmatprep.subr.mxu0 0.0
  %1738 = vmatpush1.msra.mxu0 0.0
  %1739 = vmatprep.subr.mxu0 0.0
  %1740 = vmatpush1.msra.mxu0 0.0
  %1741 = vmatprep.subr.mxu0 0.0
  %1742 = vmatpush1.msra.mxu0 0.0
  %1743 = vmatprep.subr.mxu0 0.0
  %1744 = vmatpush1.msra.mxu0 0.0
  %1745 = vmatprep.subr.mxu0 0.0
  %1746 = vmatpush1.msra.mxu0 0.0
  %1747 = vmatprep.subr.mxu0 0.0
  %1748 = vmatpush1.msra.mxu0 0.0
  %1749 = vmatprep.subr.mxu0 0.0
  %1750 = vmatpush1.msra.mxu0 0.0
  %1751 = vmatprep.subr.mxu0 0.0
  %1752 = vmatpush1.msra.mxu0 0.0
  %1753 = vmatprep.subr.mxu0 0.0
  %1754 = vmatpush1.msra.mxu0 0.0
  %1755 = vmatprep.subr.mxu0 0.0
  %1756 = vmatpush1.msra.mxu0 0.0
  %1757 = vmatprep.subr.mxu0 0.0
  %1758 = vmatpush1.msra.mxu0 0.0
  %1759 = vmatprep.subr.mxu0 0.0
  %1760 = vmatpush1.msra.mxu0 0.0
  %1761 = vmatprep.subr.mxu0 0.0
  %1762 = vmatpush1.msra.mxu0 0.0
  %1763 = vmatprep.mubr.f32.mxu0 0.0
  %1764 = vmatmul.mubr.f32.gmra.mrb[0].mxu0 %v1697
  %v1765 = vpop.f32.mrb[0].mxu0
  %v1766 = vadd.f32 0.0, %v1765
  %v1767 = vpop.f32.mrb[0].mxu0
  %1768 = vdwg.mxu0
  %v1769 = vadd.f32 %v1696, %v1766
  %v1770 = vtanh.pop %v1769
  %v1771 = vxor.u32 %v1769, 2147483648
  %v1772 = vmul.f32 %v1771, 1.442695
  %v1773 = vpow.pop %v1772
  %v1774 = vadd.f32 %v1773, 1.0
  %v1775 = vrcp.pop %v1774
  %v1776 = vmul.f32 1.0, %v1775
  %v1777 = vsel %vm401, %v1770, %v1776
  %v1778 = vmul.f32 %v1777, %v1576
  %1780 = vrot.lane.b32.xlu0 %v1777, 64
  %v1781 = vpop.permute.xlu0 %1780
  %v1783 = vmul.f32 %v1777, %v1781
  %1785 = vrot.lane.b32.xlu0 %v1783, 32
  %v1786 = vpop.permute.xlu0 %1785
  %v1788 = vadd.f32 %v1778, %v1786
  %v1789 = vtanh.pop %v1788
  %1791 = vrot.lane.b32.xlu0 %v1789, 64
  %v1792 = vpop.permute.xlu0 %1791
  %v1794 = vmul.f32 %v1777, %v1792
  %1796 = vrot.lane.b32.xlu0 %v1794, 32
  %v1797 = vpop.permute.xlu0 %1796
  %s1799 = scalar_lea.vmem %s8, 48
  %1800 = vst.msk [vmem:[%s1799] sm:$0xff] %vm415, %v1797
  %s1801 = scalar_lea.vmem [#allocation7], 8
  %v1802 = vld [vmem:[%s1801] sm:$0xff]
  %v1803 = vsel %vm415, %v1691, 0
  %1805 = vmatprep.subr.mxu0 0.0
  %1806 = vmatpush1.msra.mxu0 %v406
  %1807 = vmatprep.subr.mxu0 0.0
  %1808 = vmatpush1.msra.mxu0 %v407
  %1809 = vmatprep.subr.mxu0 0.0
  %1810 = vmatpush1.msra.mxu0 %v408
  %1811 = vmatprep.subr.mxu0 0.0
  %1812 = vmatpush1.msra.mxu0 %v409
  %1813 = vmatprep.subr.mxu0 0.0
  %1814 = vmatpush1.msra.mxu0 0.0
  %1815 = vmatprep.subr.mxu0 0.0
  %1816 = vmatpush1.msra.mxu0 0.0
  %1817 = vmatprep.subr.mxu0 0.0
  %1818 = vmatpush1.msra.mxu0 0.0
  %1819 = vmatprep.subr.mxu0 0.0
  %1820 = vmatpush1.msra.mxu0 0.0
  %1821 = vmatprep.subr.mxu0 0.0
  %1822 = vmatpush1.msra.mxu0 0.0
  %1823 = vmatprep.subr.mxu0 0.0
  %1824 = vmatpush1.msra.mxu0 0.0
  %1825 = vmatprep.subr.mxu0 0.0
  %1826 = vmatpush1.msra.mxu0 0.0
  %1827 = vmatprep.subr.mxu0 0.0
  %1828 = vmatpush1.msra.mxu0 0.0
  %1829 = vmatprep.subr.mxu0 0.0
  %1830 = vmatpush1.msra.mxu0 0.0
  %1831 = vmatprep.subr.mxu0 0.0
  %1832 = vmatpush1.msra.mxu0 0.0
  %1833 = vmatprep.subr.mxu0 0.0
  %1834 = vmatpush1.msra.mxu0 0.0
  %1835 = vmatprep.subr.mxu0 0.0
  %1836 = vmatpush1.msra.mxu0 0.0
  %1837 = vmatprep.subr.mxu0 0.0
  %1838 = vmatpush1.msra.mxu0 0.0
  %1839 = vmatprep.subr.mxu0 0.0
  %1840 = vmatpush1.msra.mxu0 0.0
  %1841 = vmatprep.subr.mxu0 0.0
  %1842 = vmatpush1.msra.mxu0 0.0
  %1843 = vmatprep.subr.mxu0 0.0
  %1844 = vmatpush1.msra.mxu0 0.0
  %1845 = vmatprep.subr.mxu0 0.0
  %1846 = vmatpush1.msra.mxu0 0.0
  %1847 = vmatprep.subr.mxu0 0.0
  %1848 = vmatpush1.msra.mxu0 0.0
  %1849 = vmatprep.subr.mxu0 0.0
  %1850 = vmatpush1.msra.mxu0 0.0
  %1851 = vmatprep.subr.mxu0 0.0
  %1852 = vmatpush1.msra.mxu0 0.0
  %1853 = vmatprep.subr.mxu0 0.0
  %1854 = vmatpush1.msra.mxu0 0.0
  %1855 = vmatprep.subr.mxu0 0.0
  %1856 = vmatpush1.msra.mxu0 0.0
  %1857 = vmatprep.subr.mxu0 0.0
  %1858 = vmatpush1.msra.mxu0 0.0
  %1859 = vmatprep.subr.mxu0 0.0
  %1860 = vmatpush1.msra.mxu0 0.0
  %1861 = vmatprep.subr.mxu0 0.0
  %1862 = vmatpush1.msra.mxu0 0.0
  %1863 = vmatprep.subr.mxu0 0.0
  %1864 = vmatpush1.msra.mxu0 0.0
  %1865 = vmatprep.subr.mxu0 0.0
  %1866 = vmatpush1.msra.mxu0 0.0
  %1867 = vmatprep.subr.mxu0 0.0
  %1868 = vmatpush1.msra.mxu0 0.0
  %1869 = vmatprep.mubr.f32.mxu0 0.0
  %1870 = vmatmul.mubr.f32.gmra.mrb[0].mxu0 %v1803
  %v1871 = vpop.f32.mrb[0].mxu0
  %v1872 = vadd.f32 0.0, %v1871
  %v1873 = vpop.f32.mrb[0].mxu0
  %1874 = vdwg.mxu0
  %v1875 = vadd.f32 %v1802, %v1872
  %v1876 = vtanh.pop %v1875
  %v1877 = vxor.u32 %v1875, 2147483648
  %v1878 = vmul.f32 %v1877, 1.442695
  %v1879 = vpow.pop %v1878
  %v1880 = vadd.f32 %v1879, 1.0
  %v1881 = vrcp.pop %v1880
  %v1882 = vmul.f32 1.0, %v1881
  %v1883 = vsel %vm401, %v1876, %v1882
  %v1884 = vmul.f32 %v1883, %v1682
  %1886 = vrot.lane.b32.xlu0 %v1883, 64
  %v1887 = vpop.permute.xlu0 %1886
  %v1889 = vmul.f32 %v1883, %v1887
  %1891 = vrot.lane.b32.xlu0 %v1889, 32
  %v1892 = vpop.permute.xlu0 %1891
  %v1894 = vadd.f32 %v1884, %v1892
  %v1895 = vtanh.pop %v1894
  %1897 = vrot.lane.b32.xlu0 %v1895, 64
  %v1898 = vpop.permute.xlu0 %1897
  %v1900 = vmul.f32 %v1883, %v1898
  %1902 = vrot.lane.b32.xlu0 %v1900, 32
  %v1903 = vpop.permute.xlu0 %1902
  %s1905 = scalar_lea.vmem %s64, 8
  %1906 = vst.msk [vmem:[%s1905] sm:$0xff] %vm415, %v1903
  %s1907 = scalar_lea.vmem [#allocation6], 56
  %v1908 = vld [vmem:[%s1907] sm:$0xff]
  %v1909 = vsel %vm415, %v1797, 0
  %1911 = vmatprep.subr.mxu0 0.0
  %1912 = vmatpush1.msra.mxu0 %v402
  %1913 = vmatprep.subr.mxu0 0.0
  %1914 = vmatpush1.msra.mxu0 %v403
  %1915 = vmatprep.subr.mxu0 0.0
  %1916 = vmatpush1.msra.mxu0 %v404
  %1917 = vmatprep.subr.mxu0 0.0
  %1918 = vmatpush1.msra.mxu0 %v405
  %1919 = vmatprep.subr.mxu0 0.0
  %1920 = vmatpush1.msra.mxu0 0.0
  %1921 = vmatprep.subr.mxu0 0.0
  %1922 = vmatpush1.msra.mxu0 0.0
  %1923 = vmatprep.subr.mxu0 0.0
  %1924 = vmatpush1.msra.mxu0 0.0
  %1925 = vmatprep.subr.mxu0 0.0
  %1926 = vmatpush1.msra.mxu0 0.0
  %1927 = vmatprep.subr.mxu0 0.0
  %1928 = vmatpush1.msra.mxu0 0.0
  %1929 = vmatprep.subr.mxu0 0.0
  %1930 = vmatpush1.msra.mxu0 0.0
  %1931 = vmatprep.subr.mxu0 0.0
  %1932 = vmatpush1.msra.mxu0 0.0
  %1933 = vmatprep.subr.mxu0 0.0
  %1934 = vmatpush1.msra.mxu0 0.0
  %1935 = vmatprep.subr.mxu0 0.0
  %1936 = vmatpush1.msra.mxu0 0.0
  %1937 = vmatprep.subr.mxu0 0.0
  %1938 = vmatpush1.msra.mxu0 0.0
  %1939 = vmatprep.subr.mxu0 0.0
  %1940 = vmatpush1.msra.mxu0 0.0
  %1941 = vmatprep.subr.mxu0 0.0
  %1942 = vmatpush1.msra.mxu0 0.0
  %1943 = vmatprep.subr.mxu0 0.0
  %1944 = vmatpush1.msra.mxu0 0.0
  %1945 = vmatprep.subr.mxu0 0.0
  %1946 = vmatpush1.msra.mxu0 0.0
  %1947 = vmatprep.subr.mxu0 0.0
  %1948 = vmatpush1.msra.mxu0 0.0
  %1949 = vmatprep.subr.mxu0 0.0
  %1950 = vmatpush1.msra.mxu0 0.0
  %1951 = vmatprep.subr.mxu0 0.0
  %1952 = vmatpush1.msra.mxu0 0.0
  %1953 = vmatprep.subr.mxu0 0.0
  %1954 = vmatpush1.msra.mxu0 0.0
  %1955 = vmatprep.subr.mxu0 0.0
  %1956 = vmatpush1.msra.mxu0 0.0
  %1957 = vmatprep.subr.mxu0 0.0
  %1958 = vmatpush1.msra.mxu0 0.0
  %1959 = vmatprep.subr.mxu0 0.0
  %1960 = vmatpush1.msra.mxu0 0.0
  %1961 = vmatprep.subr.mxu0 0.0
  %1962 = vmatpush1.msra.mxu0 0.0
  %1963 = vmatprep.subr.mxu0 0.0
  %1964 = vmatpush1.msra.mxu0 0.0
  %1965 = vmatprep.subr.mxu0 0.0
  %1966 = vmatpush1.msra.mxu0 0.0
  %1967 = vmatprep.subr.mxu0 0.0
  %1968 = vmatpush1.msra.mxu0 0.0
  %1969 = vmatprep.subr.mxu0 0.0
  %1970 = vmatpush1.msra.mxu0 0.0
  %1971 = vmatprep.subr.mxu0 0.0
  %1972 = vmatpush1.msra.mxu0 0.0
  %1973 = vmatprep.subr.mxu0 0.0
  %1974 = vmatpush1.msra.mxu0 0.0
  %1975 = vmatprep.mubr.f32.mxu0 0.0
  %1976 = vmatmul.mubr.f32.gmra.mrb[0].mxu0 %v1909
  %v1977 = vpop.f32.mrb[0].mxu0
  %v1978 = vadd.f32 0.0, %v1977
  %v1979 = vpop.f32.mrb[0].mxu0
  %1980 = vdwg.mxu0
  %v1981 = vadd.f32 %v1908, %v1978
  %v1982 = vtanh.pop %v1981
  %v1983 = vxor.u32 %v1981, 2147483648
  %v1984 = vmul.f32 %v1983, 1.442695
  %v1985 = vpow.pop %v1984
  %v1986 = vadd.f32 %v1985, 1.0
  %v1987 = vrcp.pop %v1986
  %v1988 = vmul.f32 1.0, %v1987
  %v1989 = vsel %vm401, %v1982, %v1988
  %v1990 = vmul.f32 %v1989, %v1788
  %1992 = vrot.lane.b32.xlu0 %v1989, 64
  %v1993 = vpop.permute.xlu0 %1992
  %v1995 = vmul.f32 %v1989, %v1993
  %1997 = vrot.lane.b32.xlu0 %v1995, 32
  %v1998 = vpop.permute.xlu0 %1997
  %v2000 = vadd.f32 %v1990, %v1998
  %v2001 = vtanh.pop %v2000
  %2003 = vrot.lane.b32.xlu0 %v2001, 64
  %v2004 = vpop.permute.xlu0 %2003
  %v2006 = vmul.f32 %v1989, %v2004
  %2008 = vrot.lane.b32.xlu0 %v2006, 32
  %v2009 = vpop.permute.xlu0 %2008
  %s2011 = scalar_lea.vmem %s8, 56
  %2012 = vst.msk [vmem:[%s2011] sm:$0xff] %vm415, %v2009
  %v2013 = vld [vmem:[#allocation7] sm:$0xff]
  %v2014 = vsel %vm415, %v1903, 0
  %2016 = vmatprep.subr.mxu0 0.0
  %2017 = vmatpush1.msra.mxu0 %v406
  %2018 = vmatprep.subr.mxu0 0.0
  %2019 = vmatpush1.msra.mxu0 %v407
  %2020 = vmatprep.subr.mxu0 0.0
  %2021 = vmatpush1.msra.mxu0 %v408
  %2022 = vmatprep.subr.mxu0 0.0
  %2023 = vmatpush1.msra.mxu0 %v409
  %2024 = vmatprep.subr.mxu0 0.0
  %2025 = vmatpush1.msra.mxu0 0.0
  %2026 = vmatprep.subr.mxu0 0.0
  %2027 = vmatpush1.msra.mxu0 0.0
  %2028 = vmatprep.subr.mxu0 0.0
  %2029 = vmatpush1.msra.mxu0 0.0
  %2030 = vmatprep.subr.mxu0 0.0
  %2031 = vmatpush1.msra.mxu0 0.0
  %2032 = vmatprep.subr.mxu0 0.0
  %2033 = vmatpush1.msra.mxu0 0.0
  %2034 = vmatprep.subr.mxu0 0.0
  %2035 = vmatpush1.msra.mxu0 0.0
  %2036 = vmatprep.subr.mxu0 0.0
  %2037 = vmatpush1.msra.mxu0 0.0
  %2038 = vmatprep.subr.mxu0 0.0
  %2039 = vmatpush1.msra.mxu0 0.0
  %2040 = vmatprep.subr.mxu0 0.0
  %2041 = vmatpush1.msra.mxu0 0.0
  %2042 = vmatprep.subr.mxu0 0.0
  %2043 = vmatpush1.msra.mxu0 0.0
  %2044 = vmatprep.subr.mxu0 0.0
  %2045 = vmatpush1.msra.mxu0 0.0
  %2046 = vmatprep.subr.mxu0 0.0
  %2047 = vmatpush1.msra.mxu0 0.0
  %2048 = vmatprep.subr.mxu0 0.0
  %2049 = vmatpush1.msra.mxu0 0.0
  %2050 = vmatprep.subr.mxu0 0.0
  %2051 = vmatpush1.msra.mxu0 0.0
  %2052 = vmatprep.subr.mxu0 0.0
  %2053 = vmatpush1.msra.mxu0 0.0
  %2054 = vmatprep.subr.mxu0 0.0
  %2055 = vmatpush1.msra.mxu0 0.0
  %2056 = vmatprep.subr.mxu0 0.0
  %2057 = vmatpush1.msra.mxu0 0.0
  %2058 = vmatprep.subr.mxu0 0.0
  %2059 = vmatpush1.msra.mxu0 0.0
  %2060 = vmatprep.subr.mxu0 0.0
  %2061 = vmatpush1.msra.mxu0 0.0
  %2062 = vmatprep.subr.mxu0 0.0
  %2063 = vmatpush1.msra.mxu0 0.0
  %2064 = vmatprep.subr.mxu0 0.0
  %2065 = vmatpush1.msra.mxu0 0.0
  %2066 = vmatprep.subr.mxu0 0.0
  %2067 = vmatpush1.msra.mxu0 0.0
  %2068 = vmatprep.subr.mxu0 0.0
  %2069 = vmatpush1.msra.mxu0 0.0
  %2070 = vmatprep.subr.mxu0 0.0
  %2071 = vmatpush1.msra.mxu0 0.0
  %2072 = vmatprep.subr.mxu0 0.0
  %2073 = vmatpush1.msra.mxu0 0.0
  %2074 = vmatprep.subr.mxu0 0.0
  %2075 = vmatpush1.msra.mxu0 0.0
  %2076 = vmatprep.subr.mxu0 0.0
  %2077 = vmatpush1.msra.mxu0 0.0
  %2078 = vmatprep.subr.mxu0 0.0
  %2079 = vmatpush1.msra.mxu0 0.0
  %2080 = vmatprep.mubr.f32.mxu0 0.0
  %2081 = vmatmul.mubr.f32.gmra.mrb[0].mxu0 %v2014
  %v2082 = vpop.f32.mrb[0].mxu0
  %v2083 = vadd.f32 0.0, %v2082
  %v2084 = vpop.f32.mrb[0].mxu0
  %2085 = vdwg.mxu0
  %v2086 = vadd.f32 %v2013, %v2083
  %v2087 = vtanh.pop %v2086
  %v2088 = vxor.u32 %v2086, 2147483648
  %v2089 = vmul.f32 %v2088, 1.442695
  %v2090 = vpow.pop %v2089
  %v2091 = vadd.f32 %v2090, 1.0
  %v2092 = vrcp.pop %v2091
  %v2093 = vmul.f32 1.0, %v2092
  %v2094 = vsel %vm401, %v2087, %v2093
  %v2095 = vmul.f32 %v2094, %v1894
  %2097 = vrot.lane.b32.xlu0 %v2094, 64
  %v2098 = vpop.permute.xlu0 %2097
  %v2100 = vmul.f32 %v2094, %v2098
  %2102 = vrot.lane.b32.xlu0 %v2100, 32
  %v2103 = vpop.permute.xlu0 %2102
  %v2105 = vadd.f32 %v2095, %v2103
  %v2106 = vtanh.pop %v2105
  %2108 = vrot.lane.b32.xlu0 %v2106, 64
  %v2109 = vpop.permute.xlu0 %2108
  %v2111 = vmul.f32 %v2094, %v2109
  %2113 = vrot.lane.b32.xlu0 %v2111, 32
  %v2114 = vpop.permute.xlu0 %2113
  %2116 = vst.msk [vmem:[%s64] sm:$0xff] %vm415, %v2114
  %2117 = vst.msk [vmem:[#allocation2] sm:$0xff] %vm415, %v2009
  %2119 = vrot.lane.b32.xlu0 %v2000, 96
  %v2120 = vpop.permute.xlu0 %2119
  %2122 = vst.msk [vmem:[#allocation3] sm:$0xff] %vm415, %v2120
  %2123 = vst.msk [vmem:[#allocation4] sm:$0xff] %vm415, %v2114
  %2125 = vrot.lane.b32.xlu0 %v2105, 96
  %v2126 = vpop.permute.xlu0 %2125
  %2128 = vst.msk [vmem:[#allocation5] sm:$0xff] %vm415, %v2126
  %s2129 = ssub.s32 0, 0
  %s2130 = smul.u32 8, %s2129
  %p2131 = scmp.lt.s32.totalorder %s2130, 7
  %s2132 = scalar_select %p2131, %s2130, 7
  %s2133 = smul.addr %s2132, 8
  %s2134 = scalar_lea.vmem %s9, %s2133
  // Predicated region
  $region38: #{lstm_forward.3} parent=0 // pred_check
    _
  $region39: #{lstm_forward.3} parent=0 // pred_check_branch
    %2136 = sbr.rel (0) target = $region41
  $region40: #{lstm_forward.3} parent=0 // pred_region
    _
  $region41: #{lstm_forward.3} parent=0 // pred_fallthru
    _
  // Predicated region
  $region42: #{lstm_forward.3} parent=0 // pred_check
    _
  $region43: #{lstm_forward.3} parent=0 // pred_check_branch
    %2138 = sbr.rel (0) target = $region45
  $region44: #{lstm_forward.3} parent=0 // pred_region
    %s2139 = ssub.s32 0, 0
    %s2140 = smul.u32 8, %s2139
  $region45: #{lstm_forward.3} parent=0 // pred_fallthru
    _
  // Predicated region
  $region46: #{lstm_forward.3} parent=0 // pred_check
    _
  $region47: #{lstm_forward.3} parent=0 // pred_check_branch
    %2142 = sbr.rel (0) target = $region49
  $region48: #{lstm_forward.3} parent=0 // pred_region
    _
  $region49: #{lstm_forward.3} parent=0 // pred_fallthru
    _
  // Predicated region
  $region50: #{lstm_forward.3} parent=0 // pred_check
    _
  $region51: #{lstm_forward.3} parent=0 // pred_check_branch
    %2144 = sbr.rel (0) target = $region53
  $region52: #{lstm_forward.3} parent=0 // pred_region
    %s2145 = ssub.s32 0, 0
    %s2146 = smul.u32 8, %s2145
    %p2147 = scmp.lt.s32.totalorder %s2146, 7
    %s2148 = scalar_select %p2147, %s2146, 7
    %s2149 = smul.addr %s2148, 8
    %s2150 = scalar_lea.vmem %s9, %s2149
  $region53: #{lstm_forward.3} parent=0 // pred_fallthru
    _

</llo_original>
